<compile_context>
chip_gen: v7x
topology: tpu7x:2x2x1
jax: 0.10.0
libtpu: 0.0.40
codegen_flags: <defaults>
</compile_context>

<pallas_src>
import functools

import jax
import jax.numpy as jnp
from jax import lax
from jax.experimental import pallas as pl
from jax.experimental.pallas import tpu as pltpu

LANES = 128


def _extractor_lstm_kernel(x_ref, wih_ref, whh_ref, b_ref, wl_ref, bl_ref,
                           out_ref, xg_sc, hs_sc, *, hidden_size, seq_len,
                           batch_size):
    """Single invocation: whole batch recurrence + batched head."""
    H, S, B = hidden_size, seq_len, batch_size

    # Hoisted input projection for the whole batch: ONE (B*S, D)@(D, 4H)
    # MXU matmul with the (b_ih + b_hh) bias folded in.
    xg_sc[...] = (
        jnp.dot(x_ref[...].astype(jnp.bfloat16), wih_ref[...],
                preferred_element_type=jnp.float32)
        + b_ref[...])                                            # (B*S, 4H)

    def make_step(base):
        def step(t, carry):
            h, c = carry                                         # (1, H) f32
            gates = (jnp.dot(h.astype(jnp.bfloat16), whh_ref[...],
                             preferred_element_type=jnp.float32)
                     + xg_sc[pl.ds(base + t, 1), :])             # (1, 4H)
            # PyTorch gate order: i, f, g, o.  One EUP push for i|f together.
            if_g = jax.nn.sigmoid(gates[:, 0:2 * H])
            i_g = if_g[:, 0:H]
            f_g = if_g[:, H:2 * H]
            g_g = jnp.tanh(gates[:, 2 * H:3 * H])
            o_g = jax.nn.sigmoid(gates[:, 3 * H:4 * H])
            c_new = f_g * c + i_g * g_g
            h_new = o_g * jnp.tanh(c_new)
            return h_new, c_new
        return step

    # Hidden/cell start at zero ONCE and carry across batch elements, exactly
    # mirroring the PyTorch python loop re-feeding (hidden, cell).
    h = jnp.zeros((1, H), jnp.float32)
    c = jnp.zeros((1, H), jnp.float32)
    for b in range(B):                               # B is small & static
        h, c = lax.fori_loop(0, S, make_step(b * S), (h, c), unroll=True)
        hs_sc[pl.ds(b, 1), :] = h                    # stash last hidden state

    # Batched head: Mish -> Linear (W padded to 128 lanes) -> LogSoftmax over
    # the first 2 lanes.  Lanes 2..127 are garbage and sliced off in wrapper.
    h_last = hs_sc[...]                                          # (B, H)
    mish = h_last * jnp.tanh(jax.nn.softplus(h_last))
    logits = (jnp.dot(mish, wl_ref[...],
                      preferred_element_type=jnp.float32)
              + bl_ref[...])                                     # (B, 128)
    lane = lax.broadcasted_iota(jnp.int32, logits.shape, 1)
    masked = jnp.where(lane < 2, logits, -jnp.inf)
    m = jnp.max(masked, axis=-1, keepdims=True)
    lse = m + jnp.log(jnp.sum(jnp.exp(masked - m), axis=-1, keepdims=True))
    out_ref[...] = logits - lse


def extractor_lstm_forward(x, params):
    """x: (B, S, D) float32.  Returns (B, 2) log-probs."""
    wih_t, whh_t, b_gates, wl_t, bl = params
    B, S, D = x.shape
    H = whh_t.shape[0]

    # Wrapper-side layout plumbing (cheap, outside the kernel):
    x2d = x.reshape(B * S, D)
    wl_pad = jnp.zeros((H, LANES), jnp.float32).at[:, :2].set(wl_t)
    bl_pad = jnp.zeros((1, LANES), jnp.float32).at[:, :2].set(bl)

    kernel = functools.partial(_extractor_lstm_kernel, hidden_size=H,
                               seq_len=S, batch_size=B)
    out = pl.pallas_call(
        kernel,
        out_shape=jax.ShapeDtypeStruct((B, LANES), jnp.float32),
        in_specs=[pl.BlockSpec(memory_space=pltpu.MemorySpace.VMEM)] * 6,
        out_specs=pl.BlockSpec(memory_space=pltpu.MemorySpace.VMEM),
        scratch_shapes=[
            pltpu.VMEM((B * S, 4 * H), jnp.float32),   # hoisted x @ W_ih + b
            pltpu.VMEM((B, H), jnp.float32),           # last hidden per batch
        ],
    )(x2d, wih_t, whh_t, b_gates, wl_pad, bl_pad)
    return out[:, :2]


def make_params(key, input_size, hidden_size):
    """Deterministic synthetic parameters (PyTorch-style uniform init)."""
    k = 1.0 / jnp.sqrt(jnp.float32(hidden_size))
    ks = jax.random.split(key, 6)
    u = lambda kk, shape: jax.random.uniform(kk, shape, jnp.float32, -k, k)
    wih_t = u(ks[0], (input_size, 4 * hidden_size)).astype(jnp.bfloat16)
    whh_t = u(ks[1], (hidden_size, 4 * hidden_size)).astype(jnp.bfloat16)
    b_gates = (u(ks[2], (1, 4 * hidden_size))
               + u(ks[3], (1, 4 * hidden_size)))      # b_ih + b_hh (f32)
    wl_t = u(ks[4], (hidden_size, 2))                 # = linear.weight.T (f32)
    bl = u(ks[5], (1, 2))
    return wih_t, whh_t, b_gates, wl_t, bl


def reference_forward(x, params):
    """Pure-JAX reference mirroring the PyTorch forward (same precision)."""
    wih_t, whh_t, b_gates, wl_t, bl = params
    B, S, D = x.shape
    H = whh_t.shape[0]
    h = jnp.zeros((1, H), jnp.float32)
    c = jnp.zeros((1, H), jnp.float32)
    outs = []
    for i in range(B):
        xg = (jnp.dot(x[i].astype(jnp.bfloat16), wih_t,
                      preferred_element_type=jnp.float32) + b_gates)
        for t in range(S):
            gates = (jnp.dot(h.astype(jnp.bfloat16), whh_t,
                             preferred_element_type=jnp.float32)
                     + xg[t][None, :])
            i_g = jax.nn.sigmoid(gates[:, :H])
            f_g = jax.nn.sigmoid(gates[:, H:2 * H])
            g_g = jnp.tanh(gates[:, 2 * H:3 * H])
            o_g = jax.nn.sigmoid(gates[:, 3 * H:])
            c = f_g * c + i_g * g_g
            h = o_g * jnp.tanh(c)
        mish = h * jnp.tanh(jax.nn.softplus(h))
        logits = mish @ wl_t + bl
        logp = logits - jax.scipy.special.logsumexp(logits, axis=-1,
                                                    keepdims=True)
        outs.append(logp[0])
    return jnp.stack(outs)


if __name__ == "__main__":
    # Small shapes consistent with the module (hidden = 2x input).
    B, S, D, H = 2, 8, 64, 128

    key = jax.random.PRNGKey(0)
    kx, kp = jax.random.split(key)
    x = jax.random.normal(kx, (B, S, D), jnp.float32)
    params = make_params(kp, D, H)

    out = extractor_lstm_forward(x, params)
    out = jax.block_until_ready(out)

    ref = reference_forward(x, params)
    if not bool(jnp.allclose(out, ref, atol=2e-3, rtol=2e-3)):
        raise AssertionError(f"mismatch: kernel={out}, ref={ref}")

    print("KERNEL_OK")
</pallas_src>

<mosaic_0001>
module attributes {stable_mosaic.version = 11 : i64} {
  func.func @_extractor_lstm_kernel(%arg0: memref<16x64xf32, #tpu.memory_space<vmem>>, %arg1: memref<64x512xbf16, #tpu.memory_space<vmem>>, %arg2: memref<128x512xbf16, #tpu.memory_space<vmem>>, %arg3: memref<1x512xf32, #tpu.memory_space<vmem>>, %arg4: memref<128x128xf32, #tpu.memory_space<vmem>>, %arg5: memref<1x128xf32, #tpu.memory_space<vmem>>, %arg6: memref<2x128xf32, #tpu.memory_space<vmem>>, %arg7: memref<16x512xf32, #tpu.memory_space<vmem>>, %arg8: memref<2x128xf32, #tpu.memory_space<vmem>>) attributes {dimension_semantics = [], scalar_prefetch = 0 : i64, scratch_operands = 2 : i64, tpu.core_type = #tpu.core_type<tc>} {
    %c0 = arith.constant 0 : index
    %c0_0 = arith.constant 0 : index
    %0 = vector.load %arg0[%c0, %c0_0] : memref<16x64xf32, #tpu.memory_space<vmem>>, vector<16x64xf32>
    %1 = arith.truncf %0 : vector<16x64xf32> to vector<16x64xbf16>
    %c0_1 = arith.constant 0 : index
    %c0_2 = arith.constant 0 : index
    %2 = vector.load %arg1[%c0_1, %c0_2] : memref<64x512xbf16, #tpu.memory_space<vmem>>, vector<64x512xbf16>
    %cst = arith.constant dense<0.000000e+00> : vector<16x512xf32>
    %3 = tpu.matmul %1, %2, %cst {dimension_numbers = #tpu.dot_dimension_numbers<[1], [0], [0], [1], [0, 0, 1, 1], [], []>} : vector<16x64xbf16>, vector<64x512xbf16>, vector<16x512xf32> -> vector<16x512xf32>
    %c0_3 = arith.constant 0 : index
    %c0_4 = arith.constant 0 : index
    %4 = vector.load %arg3[%c0_3, %c0_4] : memref<1x512xf32, #tpu.memory_space<vmem>>, vector<1x512xf32>
    %5 = vector.broadcast %4 : vector<1x512xf32> to vector<16x512xf32>
    %6 = arith.addf %3, %5 : vector<16x512xf32>
    %c0_5 = arith.constant 0 : index
    %c0_6 = arith.constant 0 : index
    %7 = vector.load %arg7[%c0_5, %c0_6] : memref<16x512xf32, #tpu.memory_space<vmem>>, vector<16x512xf32>
    tpu.vector_store %arg7[%c0_5, %c0_6], %6 {strides = array<i32>} : memref<16x512xf32, #tpu.memory_space<vmem>>, vector<16x512xf32>,
    %cst_7 = arith.constant 0.000000e+00 : f32
    %8 = vector.broadcast %cst_7 : f32 to vector<1x128xf32>
    %cst_8 = arith.constant 0.000000e+00 : f32
    %9 = vector.broadcast %cst_8 : f32 to vector<1x128xf32>
    %c0_i32 = arith.constant 0 : i32
    %10 = arith.truncf %8 : vector<1x128xf32> to vector<1x128xbf16>
    %c0_9 = arith.constant 0 : index
    %c0_10 = arith.constant 0 : index
    %11 = vector.load %arg2[%c0_9, %c0_10] : memref<128x512xbf16, #tpu.memory_space<vmem>>, vector<128x512xbf16>
    %cst_11 = arith.constant dense<0.000000e+00> : vector<1x512xf32>
    %12 = tpu.matmul %10, %11, %cst_11 {dimension_numbers = #tpu.dot_dimension_numbers<[1], [0], [0], [1], [0, 0, 1, 1], [], []>} : vector<1x128xbf16>, vector<128x512xbf16>, vector<1x512xf32> -> vector<1x512xf32>
    %c0_i32_12 = arith.constant 0 : i32
    %13 = arith.addi %c0_i32_12, %c0_i32 : i32
    %14 = arith.index_cast %13 : i32 to index
    %c0_13 = arith.constant 0 : index
    %15 = vector.load %arg7[%14, %c0_13] : memref<16x512xf32, #tpu.memory_space<vmem>>, vector<1x512xf32>
    %16 = arith.addf %12, %15 : vector<1x512xf32>
    %17 = vector.extract_strided_slice %16 {offsets = [0, 0], sizes = [1, 256], strides = [1, 1]} : vector<1x512xf32> to vector<1x256xf32>
    %18 = arith.negf %17 : vector<1x256xf32>
    %19 = math.exp %18 : vector<1x256xf32>
    %cst_14 = arith.constant 1.000000e+00 : f32
    %20 = vector.broadcast %cst_14 : f32 to vector<1x256xf32>
    %21 = arith.addf %20, %19 : vector<1x256xf32>
    %22 = arith.divf %20, %21 : vector<1x256xf32>
    %23 = vector.extract_strided_slice %22 {offsets = [0, 0], sizes = [1, 128], strides = [1, 1]} : vector<1x256xf32> to vector<1x128xf32>
    %24 = vector.extract_strided_slice %22 {offsets = [0, 128], sizes = [1, 128], strides = [1, 1]} : vector<1x256xf32> to vector<1x128xf32>
    %25 = vector.extract_strided_slice %16 {offsets = [0, 256], sizes = [1, 128], strides = [1, 1]} : vector<1x512xf32> to vector<1x128xf32>
    %26 = math.tanh %25 : vector<1x128xf32>
    %27 = vector.extract_strided_slice %16 {offsets = [0, 384], sizes = [1, 128], strides = [1, 1]} : vector<1x512xf32> to vector<1x128xf32>
    %28 = arith.negf %27 : vector<1x128xf32>
    %29 = math.exp %28 : vector<1x128xf32>
    %cst_15 = arith.constant 1.000000e+00 : f32
    %30 = vector.broadcast %cst_15 : f32 to vector<1x128xf32>
    %31 = arith.addf %30, %29 : vector<1x128xf32>
    %32 = arith.divf %30, %31 : vector<1x128xf32>
    %33 = arith.mulf %24, %9 : vector<1x128xf32>
    %34 = arith.mulf %23, %26 : vector<1x128xf32>
    %35 = arith.addf %33, %34 : vector<1x128xf32>
    %36 = math.tanh %35 : vector<1x128xf32>
    %37 = arith.mulf %32, %36 : vector<1x128xf32>
    %c1_i32 = arith.constant 1 : i32
    %38 = arith.truncf %37 : vector<1x128xf32> to vector<1x128xbf16>
    %c0_16 = arith.constant 0 : index
    %c0_17 = arith.constant 0 : index
    %39 = vector.load %arg2[%c0_16, %c0_17] : memref<128x512xbf16, #tpu.memory_space<vmem>>, vector<128x512xbf16>
    %cst_18 = arith.constant dense<0.000000e+00> : vector<1x512xf32>
    %40 = tpu.matmul %38, %39, %cst_18 {dimension_numbers = #tpu.dot_dimension_numbers<[1], [0], [0], [1], [0, 0, 1, 1], [], []>} : vector<1x128xbf16>, vector<128x512xbf16>, vector<1x512xf32> -> vector<1x512xf32>
    %c0_i32_19 = arith.constant 0 : i32
    %41 = arith.addi %c0_i32_19, %c1_i32 : i32
    %42 = arith.index_cast %41 : i32 to index
    %c0_20 = arith.constant 0 : index
    %43 = vector.load %arg7[%42, %c0_20] : memref<16x512xf32, #tpu.memory_space<vmem>>, vector<1x512xf32>
    %44 = arith.addf %40, %43 : vector<1x512xf32>
    %45 = vector.extract_strided_slice %44 {offsets = [0, 0], sizes = [1, 256], strides = [1, 1]} : vector<1x512xf32> to vector<1x256xf32>
    %46 = arith.negf %45 : vector<1x256xf32>
    %47 = math.exp %46 : vector<1x256xf32>
    %cst_21 = arith.constant 1.000000e+00 : f32
    %48 = vector.broadcast %cst_21 : f32 to vector<1x256xf32>
    %49 = arith.addf %48, %47 : vector<1x256xf32>
    %50 = arith.divf %48, %49 : vector<1x256xf32>
    %51 = vector.extract_strided_slice %50 {offsets = [0, 0], sizes = [1, 128], strides = [1, 1]} : vector<1x256xf32> to vector<1x128xf32>
    %52 = vector.extract_strided_slice %50 {offsets = [0, 128], sizes = [1, 128], strides = [1, 1]} : vector<1x256xf32> to vector<1x128xf32>
    %53 = vector.extract_strided_slice %44 {offsets = [0, 256], sizes = [1, 128], strides = [1, 1]} : vector<1x512xf32> to vector<1x128xf32>
    %54 = math.tanh %53 : vector<1x128xf32>
    %55 = vector.extract_strided_slice %44 {offsets = [0, 384], sizes = [1, 128], strides = [1, 1]} : vector<1x512xf32> to vector<1x128xf32>
    %56 = arith.negf %55 : vector<1x128xf32>
    %57 = math.exp %56 : vector<1x128xf32>
    %cst_22 = arith.constant 1.000000e+00 : f32
    %58 = vector.broadcast %cst_22 : f32 to vector<1x128xf32>
    %59 = arith.addf %58, %57 : vector<1x128xf32>
    %60 = arith.divf %58, %59 : vector<1x128xf32>
    %61 = arith.mulf %52, %35 : vector<1x128xf32>
    %62 = arith.mulf %51, %54 : vector<1x128xf32>
    %63 = arith.addf %61, %62 : vector<1x128xf32>
    %64 = math.tanh %63 : vector<1x128xf32>
    %65 = arith.mulf %60, %64 : vector<1x128xf32>
    %c2_i32 = arith.constant 2 : i32
    %66 = arith.truncf %65 : vector<1x128xf32> to vector<1x128xbf16>
    %c0_23 = arith.constant 0 : index
    %c0_24 = arith.constant 0 : index
    %67 = vector.load %arg2[%c0_23, %c0_24] : memref<128x512xbf16, #tpu.memory_space<vmem>>, vector<128x512xbf16>
    %cst_25 = arith.constant dense<0.000000e+00> : vector<1x512xf32>
    %68 = tpu.matmul %66, %67, %cst_25 {dimension_numbers = #tpu.dot_dimension_numbers<[1], [0], [0], [1], [0, 0, 1, 1], [], []>} : vector<1x128xbf16>, vector<128x512xbf16>, vector<1x512xf32> -> vector<1x512xf32>
    %c0_i32_26 = arith.constant 0 : i32
    %69 = arith.addi %c0_i32_26, %c2_i32 : i32
    %70 = arith.index_cast %69 : i32 to index
    %c0_27 = arith.constant 0 : index
    %71 = vector.load %arg7[%70, %c0_27] : memref<16x512xf32, #tpu.memory_space<vmem>>, vector<1x512xf32>
    %72 = arith.addf %68, %71 : vector<1x512xf32>
    %73 = vector.extract_strided_slice %72 {offsets = [0, 0], sizes = [1, 256], strides = [1, 1]} : vector<1x512xf32> to vector<1x256xf32>
    %74 = arith.negf %73 : vector<1x256xf32>
    %75 = math.exp %74 : vector<1x256xf32>
    %cst_28 = arith.constant 1.000000e+00 : f32
    %76 = vector.broadcast %cst_28 : f32 to vector<1x256xf32>
    %77 = arith.addf %76, %75 : vector<1x256xf32>
    %78 = arith.divf %76, %77 : vector<1x256xf32>
    %79 = vector.extract_strided_slice %78 {offsets = [0, 0], sizes = [1, 128], strides = [1, 1]} : vector<1x256xf32> to vector<1x128xf32>
    %80 = vector.extract_strided_slice %78 {offsets = [0, 128], sizes = [1, 128], strides = [1, 1]} : vector<1x256xf32> to vector<1x128xf32>
    %81 = vector.extract_strided_slice %72 {offsets = [0, 256], sizes = [1, 128], strides = [1, 1]} : vector<1x512xf32> to vector<1x128xf32>
    %82 = math.tanh %81 : vector<1x128xf32>
    %83 = vector.extract_strided_slice %72 {offsets = [0, 384], sizes = [1, 128], strides = [1, 1]} : vector<1x512xf32> to vector<1x128xf32>
    %84 = arith.negf %83 : vector<1x128xf32>
    %85 = math.exp %84 : vector<1x128xf32>
    %cst_29 = arith.constant 1.000000e+00 : f32
    %86 = vector.broadcast %cst_29 : f32 to vector<1x128xf32>
    %87 = arith.addf %86, %85 : vector<1x128xf32>
    %88 = arith.divf %86, %87 : vector<1x128xf32>
    %89 = arith.mulf %80, %63 : vector<1x128xf32>
    %90 = arith.mulf %79, %82 : vector<1x128xf32>
    %91 = arith.addf %89, %90 : vector<1x128xf32>
    %92 = math.tanh %91 : vector<1x128xf32>
    %93 = arith.mulf %88, %92 : vector<1x128xf32>
    %c3_i32 = arith.constant 3 : i32
    %94 = arith.truncf %93 : vector<1x128xf32> to vector<1x128xbf16>
    %c0_30 = arith.constant 0 : index
    %c0_31 = arith.constant 0 : index
    %95 = vector.load %arg2[%c0_30, %c0_31] : memref<128x512xbf16, #tpu.memory_space<vmem>>, vector<128x512xbf16>
    %cst_32 = arith.constant dense<0.000000e+00> : vector<1x512xf32>
    %96 = tpu.matmul %94, %95, %cst_32 {dimension_numbers = #tpu.dot_dimension_numbers<[1], [0], [0], [1], [0, 0, 1, 1], [], []>} : vector<1x128xbf16>, vector<128x512xbf16>, vector<1x512xf32> -> vector<1x512xf32>
    %c0_i32_33 = arith.constant 0 : i32
    %97 = arith.addi %c0_i32_33, %c3_i32 : i32
    %98 = arith.index_cast %97 : i32 to index
    %c0_34 = arith.constant 0 : index
    %99 = vector.load %arg7[%98, %c0_34] : memref<16x512xf32, #tpu.memory_space<vmem>>, vector<1x512xf32>
    %100 = arith.addf %96, %99 : vector<1x512xf32>
    %101 = vector.extract_strided_slice %100 {offsets = [0, 0], sizes = [1, 256], strides = [1, 1]} : vector<1x512xf32> to vector<1x256xf32>
    %102 = arith.negf %101 : vector<1x256xf32>
    %103 = math.exp %102 : vector<1x256xf32>
    %cst_35 = arith.constant 1.000000e+00 : f32
    %104 = vector.broadcast %cst_35 : f32 to vector<1x256xf32>
    %105 = arith.addf %104, %103 : vector<1x256xf32>
    %106 = arith.divf %104, %105 : vector<1x256xf32>
    %107 = vector.extract_strided_slice %106 {offsets = [0, 0], sizes = [1, 128], strides = [1, 1]} : vector<1x256xf32> to vector<1x128xf32>
    %108 = vector.extract_strided_slice %106 {offsets = [0, 128], sizes = [1, 128], strides = [1, 1]} : vector<1x256xf32> to vector<1x128xf32>
    %109 = vector.extract_strided_slice %100 {offsets = [0, 256], sizes = [1, 128], strides = [1, 1]} : vector<1x512xf32> to vector<1x128xf32>
    %110 = math.tanh %109 : vector<1x128xf32>
    %111 = vector.extract_strided_slice %100 {offsets = [0, 384], sizes = [1, 128], strides = [1, 1]} : vector<1x512xf32> to vector<1x128xf32>
    %112 = arith.negf %111 : vector<1x128xf32>
    %113 = math.exp %112 : vector<1x128xf32>
    %cst_36 = arith.constant 1.000000e+00 : f32
    %114 = vector.broadcast %cst_36 : f32 to vector<1x128xf32>
    %115 = arith.addf %114, %113 : vector<1x128xf32>
    %116 = arith.divf %114, %115 : vector<1x128xf32>
    %117 = arith.mulf %108, %91 : vector<1x128xf32>
    %118 = arith.mulf %107, %110 : vector<1x128xf32>
    %119 = arith.addf %117, %118 : vector<1x128xf32>
    %120 = math.tanh %119 : vector<1x128xf32>
    %121 = arith.mulf %116, %120 : vector<1x128xf32>
    %c4_i32 = arith.constant 4 : i32
    %122 = arith.truncf %121 : vector<1x128xf32> to vector<1x128xbf16>
    %c0_37 = arith.constant 0 : index
    %c0_38 = arith.constant 0 : index
    %123 = vector.load %arg2[%c0_37, %c0_38] : memref<128x512xbf16, #tpu.memory_space<vmem>>, vector<128x512xbf16>
    %cst_39 = arith.constant dense<0.000000e+00> : vector<1x512xf32>
    %124 = tpu.matmul %122, %123, %cst_39 {dimension_numbers = #tpu.dot_dimension_numbers<[1], [0], [0], [1], [0, 0, 1, 1], [], []>} : vector<1x128xbf16>, vector<128x512xbf16>, vector<1x512xf32> -> vector<1x512xf32>
    %c0_i32_40 = arith.constant 0 : i32
    %125 = arith.addi %c0_i32_40, %c4_i32 : i32
    %126 = arith.index_cast %125 : i32 to index
    %c0_41 = arith.constant 0 : index
    %127 = vector.load %arg7[%126, %c0_41] : memref<16x512xf32, #tpu.memory_space<vmem>>, vector<1x512xf32>
    %128 = arith.addf %124, %127 : vector<1x512xf32>
    %129 = vector.extract_strided_slice %128 {offsets = [0, 0], sizes = [1, 256], strides = [1, 1]} : vector<1x512xf32> to vector<1x256xf32>
    %130 = arith.negf %129 : vector<1x256xf32>
    %131 = math.exp %130 : vector<1x256xf32>
    %cst_42 = arith.constant 1.000000e+00 : f32
    %132 = vector.broadcast %cst_42 : f32 to vector<1x256xf32>
    %133 = arith.addf %132, %131 : vector<1x256xf32>
    %134 = arith.divf %132, %133 : vector<1x256xf32>
    %135 = vector.extract_strided_slice %134 {offsets = [0, 0], sizes = [1, 128], strides = [1, 1]} : vector<1x256xf32> to vector<1x128xf32>
    %136 = vector.extract_strided_slice %134 {offsets = [0, 128], sizes = [1, 128], strides = [1, 1]} : vector<1x256xf32> to vector<1x128xf32>
    %137 = vector.extract_strided_slice %128 {offsets = [0, 256], sizes = [1, 128], strides = [1, 1]} : vector<1x512xf32> to vector<1x128xf32>
    %138 = math.tanh %137 : vector<1x128xf32>
    %139 = vector.extract_strided_slice %128 {offsets = [0, 384], sizes = [1, 128], strides = [1, 1]} : vector<1x512xf32> to vector<1x128xf32>
    %140 = arith.negf %139 : vector<1x128xf32>
    %141 = math.exp %140 : vector<1x128xf32>
    %cst_43 = arith.constant 1.000000e+00 : f32
    %142 = vector.broadcast %cst_43 : f32 to vector<1x128xf32>
    %143 = arith.addf %142, %141 : vector<1x128xf32>
    %144 = arith.divf %142, %143 : vector<1x128xf32>
    %145 = arith.mulf %136, %119 : vector<1x128xf32>
    %146 = arith.mulf %135, %138 : vector<1x128xf32>
    %147 = arith.addf %145, %146 : vector<1x128xf32>
    %148 = math.tanh %147 : vector<1x128xf32>
    %149 = arith.mulf %144, %148 : vector<1x128xf32>
    %c5_i32 = arith.constant 5 : i32
    %150 = arith.truncf %149 : vector<1x128xf32> to vector<1x128xbf16>
    %c0_44 = arith.constant 0 : index
    %c0_45 = arith.constant 0 : index
    %151 = vector.load %arg2[%c0_44, %c0_45] : memref<128x512xbf16, #tpu.memory_space<vmem>>, vector<128x512xbf16>
    %cst_46 = arith.constant dense<0.000000e+00> : vector<1x512xf32>
    %152 = tpu.matmul %150, %151, %cst_46 {dimension_numbers = #tpu.dot_dimension_numbers<[1], [0], [0], [1], [0, 0, 1, 1], [], []>} : vector<1x128xbf16>, vector<128x512xbf16>, vector<1x512xf32> -> vector<1x512xf32>
    %c0_i32_47 = arith.constant 0 : i32
    %153 = arith.addi %c0_i32_47, %c5_i32 : i32
    %154 = arith.index_cast %153 : i32 to index
    %c0_48 = arith.constant 0 : index
    %155 = vector.load %arg7[%154, %c0_48] : memref<16x512xf32, #tpu.memory_space<vmem>>, vector<1x512xf32>
    %156 = arith.addf %152, %155 : vector<1x512xf32>
    %157 = vector.extract_strided_slice %156 {offsets = [0, 0], sizes = [1, 256], strides = [1, 1]} : vector<1x512xf32> to vector<1x256xf32>
    %158 = arith.negf %157 : vector<1x256xf32>
    %159 = math.exp %158 : vector<1x256xf32>
    %cst_49 = arith.constant 1.000000e+00 : f32
    %160 = vector.broadcast %cst_49 : f32 to vector<1x256xf32>
    %161 = arith.addf %160, %159 : vector<1x256xf32>
    %162 = arith.divf %160, %161 : vector<1x256xf32>
    %163 = vector.extract_strided_slice %162 {offsets = [0, 0], sizes = [1, 128], strides = [1, 1]} : vector<1x256xf32> to vector<1x128xf32>
    %164 = vector.extract_strided_slice %162 {offsets = [0, 128], sizes = [1, 128], strides = [1, 1]} : vector<1x256xf32> to vector<1x128xf32>
    %165 = vector.extract_strided_slice %156 {offsets = [0, 256], sizes = [1, 128], strides = [1, 1]} : vector<1x512xf32> to vector<1x128xf32>
    %166 = math.tanh %165 : vector<1x128xf32>
    %167 = vector.extract_strided_slice %156 {offsets = [0, 384], sizes = [1, 128], strides = [1, 1]} : vector<1x512xf32> to vector<1x128xf32>
    %168 = arith.negf %167 : vector<1x128xf32>
    %169 = math.exp %168 : vector<1x128xf32>
    %cst_50 = arith.constant 1.000000e+00 : f32
    %170 = vector.broadcast %cst_50 : f32 to vector<1x128xf32>
    %171 = arith.addf %170, %169 : vector<1x128xf32>
    %172 = arith.divf %170, %171 : vector<1x128xf32>
    %173 = arith.mulf %164, %147 : vector<1x128xf32>
    %174 = arith.mulf %163, %166 : vector<1x128xf32>
    %175 = arith.addf %173, %174 : vector<1x128xf32>
    %176 = math.tanh %175 : vector<1x128xf32>
    %177 = arith.mulf %172, %176 : vector<1x128xf32>
    %c6_i32 = arith.constant 6 : i32
    %178 = arith.truncf %177 : vector<1x128xf32> to vector<1x128xbf16>
    %c0_51 = arith.constant 0 : index
    %c0_52 = arith.constant 0 : index
    %179 = vector.load %arg2[%c0_51, %c0_52] : memref<128x512xbf16, #tpu.memory_space<vmem>>, vector<128x512xbf16>
    %cst_53 = arith.constant dense<0.000000e+00> : vector<1x512xf32>
    %180 = tpu.matmul %178, %179, %cst_53 {dimension_numbers = #tpu.dot_dimension_numbers<[1], [0], [0], [1], [0, 0, 1, 1], [], []>} : vector<1x128xbf16>, vector<128x512xbf16>, vector<1x512xf32> -> vector<1x512xf32>
    %c0_i32_54 = arith.constant 0 : i32
    %181 = arith.addi %c0_i32_54, %c6_i32 : i32
    %182 = arith.index_cast %181 : i32 to index
    %c0_55 = arith.constant 0 : index
    %183 = vector.load %arg7[%182, %c0_55] : memref<16x512xf32, #tpu.memory_space<vmem>>, vector<1x512xf32>
    %184 = arith.addf %180, %183 : vector<1x512xf32>
    %185 = vector.extract_strided_slice %184 {offsets = [0, 0], sizes = [1, 256], strides = [1, 1]} : vector<1x512xf32> to vector<1x256xf32>
    %186 = arith.negf %185 : vector<1x256xf32>
    %187 = math.exp %186 : vector<1x256xf32>
    %cst_56 = arith.constant 1.000000e+00 : f32
    %188 = vector.broadcast %cst_56 : f32 to vector<1x256xf32>
    %189 = arith.addf %188, %187 : vector<1x256xf32>
    %190 = arith.divf %188, %189 : vector<1x256xf32>
    %191 = vector.extract_strided_slice %190 {offsets = [0, 0], sizes = [1, 128], strides = [1, 1]} : vector<1x256xf32> to vector<1x128xf32>
    %192 = vector.extract_strided_slice %190 {offsets = [0, 128], sizes = [1, 128], strides = [1, 1]} : vector<1x256xf32> to vector<1x128xf32>
    %193 = vector.extract_strided_slice %184 {offsets = [0, 256], sizes = [1, 128], strides = [1, 1]} : vector<1x512xf32> to vector<1x128xf32>
    %194 = math.tanh %193 : vector<1x128xf32>
    %195 = vector.extract_strided_slice %184 {offsets = [0, 384], sizes = [1, 128], strides = [1, 1]} : vector<1x512xf32> to vector<1x128xf32>
    %196 = arith.negf %195 : vector<1x128xf32>
    %197 = math.exp %196 : vector<1x128xf32>
    %cst_57 = arith.constant 1.000000e+00 : f32
    %198 = vector.broadcast %cst_57 : f32 to vector<1x128xf32>
    %199 = arith.addf %198, %197 : vector<1x128xf32>
    %200 = arith.divf %198, %199 : vector<1x128xf32>
    %201 = arith.mulf %192, %175 : vector<1x128xf32>
    %202 = arith.mulf %191, %194 : vector<1x128xf32>
    %203 = arith.addf %201, %202 : vector<1x128xf32>
    %204 = math.tanh %203 : vector<1x128xf32>
    %205 = arith.mulf %200, %204 : vector<1x128xf32>
    %c7_i32 = arith.constant 7 : i32
    %206 = arith.truncf %205 : vector<1x128xf32> to vector<1x128xbf16>
    %c0_58 = arith.constant 0 : index
    %c0_59 = arith.constant 0 : index
    %207 = vector.load %arg2[%c0_58, %c0_59] : memref<128x512xbf16, #tpu.memory_space<vmem>>, vector<128x512xbf16>
    %cst_60 = arith.constant dense<0.000000e+00> : vector<1x512xf32>
    %208 = tpu.matmul %206, %207, %cst_60 {dimension_numbers = #tpu.dot_dimension_numbers<[1], [0], [0], [1], [0, 0, 1, 1], [], []>} : vector<1x128xbf16>, vector<128x512xbf16>, vector<1x512xf32> -> vector<1x512xf32>
    %c0_i32_61 = arith.constant 0 : i32
    %209 = arith.addi %c0_i32_61, %c7_i32 : i32
    %210 = arith.index_cast %209 : i32 to index
    %c0_62 = arith.constant 0 : index
    %211 = vector.load %arg7[%210, %c0_62] : memref<16x512xf32, #tpu.memory_space<vmem>>, vector<1x512xf32>
    %212 = arith.addf %208, %211 : vector<1x512xf32>
    %213 = vector.extract_strided_slice %212 {offsets = [0, 0], sizes = [1, 256], strides = [1, 1]} : vector<1x512xf32> to vector<1x256xf32>
    %214 = arith.negf %213 : vector<1x256xf32>
    %215 = math.exp %214 : vector<1x256xf32>
    %cst_63 = arith.constant 1.000000e+00 : f32
    %216 = vector.broadcast %cst_63 : f32 to vector<1x256xf32>
    %217 = arith.addf %216, %215 : vector<1x256xf32>
    %218 = arith.divf %216, %217 : vector<1x256xf32>
    %219 = vector.extract_strided_slice %218 {offsets = [0, 0], sizes = [1, 128], strides = [1, 1]} : vector<1x256xf32> to vector<1x128xf32>
    %220 = vector.extract_strided_slice %218 {offsets = [0, 128], sizes = [1, 128], strides = [1, 1]} : vector<1x256xf32> to vector<1x128xf32>
    %221 = vector.extract_strided_slice %212 {offsets = [0, 256], sizes = [1, 128], strides = [1, 1]} : vector<1x512xf32> to vector<1x128xf32>
    %222 = math.tanh %221 : vector<1x128xf32>
    %223 = vector.extract_strided_slice %212 {offsets = [0, 384], sizes = [1, 128], strides = [1, 1]} : vector<1x512xf32> to vector<1x128xf32>
    %224 = arith.negf %223 : vector<1x128xf32>
    %225 = math.exp %224 : vector<1x128xf32>
    %cst_64 = arith.constant 1.000000e+00 : f32
    %226 = vector.broadcast %cst_64 : f32 to vector<1x128xf32>
    %227 = arith.addf %226, %225 : vector<1x128xf32>
    %228 = arith.divf %226, %227 : vector<1x128xf32>
    %229 = arith.mulf %220, %203 : vector<1x128xf32>
    %230 = arith.mulf %219, %222 : vector<1x128xf32>
    %231 = arith.addf %229, %230 : vector<1x128xf32>
    %232 = math.tanh %231 : vector<1x128xf32>
    %233 = arith.mulf %228, %232 : vector<1x128xf32>
    %c8_i32 = arith.constant 8 : i32
    %c0_65 = arith.constant 0 : index
    %c0_66 = arith.constant 0 : index
    %234 = vector.load %arg8[%c0_65, %c0_66] : memref<2x128xf32, #tpu.memory_space<vmem>>, vector<1x128xf32>
    tpu.vector_store %arg8[%c0_65, %c0_66], %233 {strides = array<i32>} : memref<2x128xf32, #tpu.memory_space<vmem>>, vector<1x128xf32>,
    %c0_i32_67 = arith.constant 0 : i32
    %235 = arith.truncf %233 : vector<1x128xf32> to vector<1x128xbf16>
    %c0_68 = arith.constant 0 : index
    %c0_69 = arith.constant 0 : index
    %236 = vector.load %arg2[%c0_68, %c0_69] : memref<128x512xbf16, #tpu.memory_space<vmem>>, vector<128x512xbf16>
    %cst_70 = arith.constant dense<0.000000e+00> : vector<1x512xf32>
    %237 = tpu.matmul %235, %236, %cst_70 {dimension_numbers = #tpu.dot_dimension_numbers<[1], [0], [0], [1], [0, 0, 1, 1], [], []>} : vector<1x128xbf16>, vector<128x512xbf16>, vector<1x512xf32> -> vector<1x512xf32>
    %c8_i32_71 = arith.constant 8 : i32
    %238 = arith.addi %c8_i32_71, %c0_i32_67 : i32
    %239 = arith.index_cast %238 : i32 to index
    %c0_72 = arith.constant 0 : index
    %240 = vector.load %arg7[%239, %c0_72] : memref<16x512xf32, #tpu.memory_space<vmem>>, vector<1x512xf32>
    %241 = arith.addf %237, %240 : vector<1x512xf32>
    %242 = vector.extract_strided_slice %241 {offsets = [0, 0], sizes = [1, 256], strides = [1, 1]} : vector<1x512xf32> to vector<1x256xf32>
    %243 = arith.negf %242 : vector<1x256xf32>
    %244 = math.exp %243 : vector<1x256xf32>
    %cst_73 = arith.constant 1.000000e+00 : f32
    %245 = vector.broadcast %cst_73 : f32 to vector<1x256xf32>
    %246 = arith.addf %245, %244 : vector<1x256xf32>
    %247 = arith.divf %245, %246 : vector<1x256xf32>
    %248 = vector.extract_strided_slice %247 {offsets = [0, 0], sizes = [1, 128], strides = [1, 1]} : vector<1x256xf32> to vector<1x128xf32>
    %249 = vector.extract_strided_slice %247 {offsets = [0, 128], sizes = [1, 128], strides = [1, 1]} : vector<1x256xf32> to vector<1x128xf32>
    %250 = vector.extract_strided_slice %241 {offsets = [0, 256], sizes = [1, 128], strides = [1, 1]} : vector<1x512xf32> to vector<1x128xf32>
    %251 = math.tanh %250 : vector<1x128xf32>
    %252 = vector.extract_strided_slice %241 {offsets = [0, 384], sizes = [1, 128], strides = [1, 1]} : vector<1x512xf32> to vector<1x128xf32>
    %253 = arith.negf %252 : vector<1x128xf32>
    %254 = math.exp %253 : vector<1x128xf32>
    %cst_74 = arith.constant 1.000000e+00 : f32
    %255 = vector.broadcast %cst_74 : f32 to vector<1x128xf32>
    %256 = arith.addf %255, %254 : vector<1x128xf32>
    %257 = arith.divf %255, %256 : vector<1x128xf32>
    %258 = arith.mulf %249, %231 : vector<1x128xf32>
    %259 = arith.mulf %248, %251 : vector<1x128xf32>
    %260 = arith.addf %258, %259 : vector<1x128xf32>
    %261 = math.tanh %260 : vector<1x128xf32>
    %262 = arith.mulf %257, %261 : vector<1x128xf32>
    %c1_i32_75 = arith.constant 1 : i32
    %263 = arith.truncf %262 : vector<1x128xf32> to vector<1x128xbf16>
    %c0_76 = arith.constant 0 : index
    %c0_77 = arith.constant 0 : index
    %264 = vector.load %arg2[%c0_76, %c0_77] : memref<128x512xbf16, #tpu.memory_space<vmem>>, vector<128x512xbf16>
    %cst_78 = arith.constant dense<0.000000e+00> : vector<1x512xf32>
    %265 = tpu.matmul %263, %264, %cst_78 {dimension_numbers = #tpu.dot_dimension_numbers<[1], [0], [0], [1], [0, 0, 1, 1], [], []>} : vector<1x128xbf16>, vector<128x512xbf16>, vector<1x512xf32> -> vector<1x512xf32>
    %c8_i32_79 = arith.constant 8 : i32
    %266 = arith.addi %c8_i32_79, %c1_i32_75 : i32
    %267 = arith.index_cast %266 : i32 to index
    %c0_80 = arith.constant 0 : index
    %268 = vector.load %arg7[%267, %c0_80] : memref<16x512xf32, #tpu.memory_space<vmem>>, vector<1x512xf32>
    %269 = arith.addf %265, %268 : vector<1x512xf32>
    %270 = vector.extract_strided_slice %269 {offsets = [0, 0], sizes = [1, 256], strides = [1, 1]} : vector<1x512xf32> to vector<1x256xf32>
    %271 = arith.negf %270 : vector<1x256xf32>
    %272 = math.exp %271 : vector<1x256xf32>
    %cst_81 = arith.constant 1.000000e+00 : f32
    %273 = vector.broadcast %cst_81 : f32 to vector<1x256xf32>
    %274 = arith.addf %273, %272 : vector<1x256xf32>
    %275 = arith.divf %273, %274 : vector<1x256xf32>
    %276 = vector.extract_strided_slice %275 {offsets = [0, 0], sizes = [1, 128], strides = [1, 1]} : vector<1x256xf32> to vector<1x128xf32>
    %277 = vector.extract_strided_slice %275 {offsets = [0, 128], sizes = [1, 128], strides = [1, 1]} : vector<1x256xf32> to vector<1x128xf32>
    %278 = vector.extract_strided_slice %269 {offsets = [0, 256], sizes = [1, 128], strides = [1, 1]} : vector<1x512xf32> to vector<1x128xf32>
    %279 = math.tanh %278 : vector<1x128xf32>
    %280 = vector.extract_strided_slice %269 {offsets = [0, 384], sizes = [1, 128], strides = [1, 1]} : vector<1x512xf32> to vector<1x128xf32>
    %281 = arith.negf %280 : vector<1x128xf32>
    %282 = math.exp %281 : vector<1x128xf32>
    %cst_82 = arith.constant 1.000000e+00 : f32
    %283 = vector.broadcast %cst_82 : f32 to vector<1x128xf32>
    %284 = arith.addf %283, %282 : vector<1x128xf32>
    %285 = arith.divf %283, %284 : vector<1x128xf32>
    %286 = arith.mulf %277, %260 : vector<1x128xf32>
    %287 = arith.mulf %276, %279 : vector<1x128xf32>
    %288 = arith.addf %286, %287 : vector<1x128xf32>
    %289 = math.tanh %288 : vector<1x128xf32>
    %290 = arith.mulf %285, %289 : vector<1x128xf32>
    %c2_i32_83 = arith.constant 2 : i32
    %291 = arith.truncf %290 : vector<1x128xf32> to vector<1x128xbf16>
    %c0_84 = arith.constant 0 : index
    %c0_85 = arith.constant 0 : index
    %292 = vector.load %arg2[%c0_84, %c0_85] : memref<128x512xbf16, #tpu.memory_space<vmem>>, vector<128x512xbf16>
    %cst_86 = arith.constant dense<0.000000e+00> : vector<1x512xf32>
    %293 = tpu.matmul %291, %292, %cst_86 {dimension_numbers = #tpu.dot_dimension_numbers<[1], [0], [0], [1], [0, 0, 1, 1], [], []>} : vector<1x128xbf16>, vector<128x512xbf16>, vector<1x512xf32> -> vector<1x512xf32>
    %c8_i32_87 = arith.constant 8 : i32
    %294 = arith.addi %c8_i32_87, %c2_i32_83 : i32
    %295 = arith.index_cast %294 : i32 to index
    %c0_88 = arith.constant 0 : index
    %296 = vector.load %arg7[%295, %c0_88] : memref<16x512xf32, #tpu.memory_space<vmem>>, vector<1x512xf32>
    %297 = arith.addf %293, %296 : vector<1x512xf32>
    %298 = vector.extract_strided_slice %297 {offsets = [0, 0], sizes = [1, 256], strides = [1, 1]} : vector<1x512xf32> to vector<1x256xf32>
    %299 = arith.negf %298 : vector<1x256xf32>
    %300 = math.exp %299 : vector<1x256xf32>
    %cst_89 = arith.constant 1.000000e+00 : f32
    %301 = vector.broadcast %cst_89 : f32 to vector<1x256xf32>
    %302 = arith.addf %301, %300 : vector<1x256xf32>
    %303 = arith.divf %301, %302 : vector<1x256xf32>
    %304 = vector.extract_strided_slice %303 {offsets = [0, 0], sizes = [1, 128], strides = [1, 1]} : vector<1x256xf32> to vector<1x128xf32>
    %305 = vector.extract_strided_slice %303 {offsets = [0, 128], sizes = [1, 128], strides = [1, 1]} : vector<1x256xf32> to vector<1x128xf32>
    %306 = vector.extract_strided_slice %297 {offsets = [0, 256], sizes = [1, 128], strides = [1, 1]} : vector<1x512xf32> to vector<1x128xf32>
    %307 = math.tanh %306 : vector<1x128xf32>
    %308 = vector.extract_strided_slice %297 {offsets = [0, 384], sizes = [1, 128], strides = [1, 1]} : vector<1x512xf32> to vector<1x128xf32>
    %309 = arith.negf %308 : vector<1x128xf32>
    %310 = math.exp %309 : vector<1x128xf32>
    %cst_90 = arith.constant 1.000000e+00 : f32
    %311 = vector.broadcast %cst_90 : f32 to vector<1x128xf32>
    %312 = arith.addf %311, %310 : vector<1x128xf32>
    %313 = arith.divf %311, %312 : vector<1x128xf32>
    %314 = arith.mulf %305, %288 : vector<1x128xf32>
    %315 = arith.mulf %304, %307 : vector<1x128xf32>
    %316 = arith.addf %314, %315 : vector<1x128xf32>
    %317 = math.tanh %316 : vector<1x128xf32>
    %318 = arith.mulf %313, %317 : vector<1x128xf32>
    %c3_i32_91 = arith.constant 3 : i32
    %319 = arith.truncf %318 : vector<1x128xf32> to vector<1x128xbf16>
    %c0_92 = arith.constant 0 : index
    %c0_93 = arith.constant 0 : index
    %320 = vector.load %arg2[%c0_92, %c0_93] : memref<128x512xbf16, #tpu.memory_space<vmem>>, vector<128x512xbf16>
    %cst_94 = arith.constant dense<0.000000e+00> : vector<1x512xf32>
    %321 = tpu.matmul %319, %320, %cst_94 {dimension_numbers = #tpu.dot_dimension_numbers<[1], [0], [0], [1], [0, 0, 1, 1], [], []>} : vector<1x128xbf16>, vector<128x512xbf16>, vector<1x512xf32> -> vector<1x512xf32>
    %c8_i32_95 = arith.constant 8 : i32
    %322 = arith.addi %c8_i32_95, %c3_i32_91 : i32
    %323 = arith.index_cast %322 : i32 to index
    %c0_96 = arith.constant 0 : index
    %324 = vector.load %arg7[%323, %c0_96] : memref<16x512xf32, #tpu.memory_space<vmem>>, vector<1x512xf32>
    %325 = arith.addf %321, %324 : vector<1x512xf32>
    %326 = vector.extract_strided_slice %325 {offsets = [0, 0], sizes = [1, 256], strides = [1, 1]} : vector<1x512xf32> to vector<1x256xf32>
    %327 = arith.negf %326 : vector<1x256xf32>
    %328 = math.exp %327 : vector<1x256xf32>
    %cst_97 = arith.constant 1.000000e+00 : f32
    %329 = vector.broadcast %cst_97 : f32 to vector<1x256xf32>
    %330 = arith.addf %329, %328 : vector<1x256xf32>
    %331 = arith.divf %329, %330 : vector<1x256xf32>
    %332 = vector.extract_strided_slice %331 {offsets = [0, 0], sizes = [1, 128], strides = [1, 1]} : vector<1x256xf32> to vector<1x128xf32>
    %333 = vector.extract_strided_slice %331 {offsets = [0, 128], sizes = [1, 128], strides = [1, 1]} : vector<1x256xf32> to vector<1x128xf32>
    %334 = vector.extract_strided_slice %325 {offsets = [0, 256], sizes = [1, 128], strides = [1, 1]} : vector<1x512xf32> to vector<1x128xf32>
    %335 = math.tanh %334 : vector<1x128xf32>
    %336 = vector.extract_strided_slice %325 {offsets = [0, 384], sizes = [1, 128], strides = [1, 1]} : vector<1x512xf32> to vector<1x128xf32>
    %337 = arith.negf %336 : vector<1x128xf32>
    %338 = math.exp %337 : vector<1x128xf32>
    %cst_98 = arith.constant 1.000000e+00 : f32
    %339 = vector.broadcast %cst_98 : f32 to vector<1x128xf32>
    %340 = arith.addf %339, %338 : vector<1x128xf32>
    %341 = arith.divf %339, %340 : vector<1x128xf32>
    %342 = arith.mulf %333, %316 : vector<1x128xf32>
    %343 = arith.mulf %332, %335 : vector<1x128xf32>
    %344 = arith.addf %342, %343 : vector<1x128xf32>
    %345 = math.tanh %344 : vector<1x128xf32>
    %346 = arith.mulf %341, %345 : vector<1x128xf32>
    %c4_i32_99 = arith.constant 4 : i32
    %347 = arith.truncf %346 : vector<1x128xf32> to vector<1x128xbf16>
    %c0_100 = arith.constant 0 : index
    %c0_101 = arith.constant 0 : index
    %348 = vector.load %arg2[%c0_100, %c0_101] : memref<128x512xbf16, #tpu.memory_space<vmem>>, vector<128x512xbf16>
    %cst_102 = arith.constant dense<0.000000e+00> : vector<1x512xf32>
    %349 = tpu.matmul %347, %348, %cst_102 {dimension_numbers = #tpu.dot_dimension_numbers<[1], [0], [0], [1], [0, 0, 1, 1], [], []>} : vector<1x128xbf16>, vector<128x512xbf16>, vector<1x512xf32> -> vector<1x512xf32>
    %c8_i32_103 = arith.constant 8 : i32
    %350 = arith.addi %c8_i32_103, %c4_i32_99 : i32
    %351 = arith.index_cast %350 : i32 to index
    %c0_104 = arith.constant 0 : index
    %352 = vector.load %arg7[%351, %c0_104] : memref<16x512xf32, #tpu.memory_space<vmem>>, vector<1x512xf32>
    %353 = arith.addf %349, %352 : vector<1x512xf32>
    %354 = vector.extract_strided_slice %353 {offsets = [0, 0], sizes = [1, 256], strides = [1, 1]} : vector<1x512xf32> to vector<1x256xf32>
    %355 = arith.negf %354 : vector<1x256xf32>
    %356 = math.exp %355 : vector<1x256xf32>
    %cst_105 = arith.constant 1.000000e+00 : f32
    %357 = vector.broadcast %cst_105 : f32 to vector<1x256xf32>
    %358 = arith.addf %357, %356 : vector<1x256xf32>
    %359 = arith.divf %357, %358 : vector<1x256xf32>
    %360 = vector.extract_strided_slice %359 {offsets = [0, 0], sizes = [1, 128], strides = [1, 1]} : vector<1x256xf32> to vector<1x128xf32>
    %361 = vector.extract_strided_slice %359 {offsets = [0, 128], sizes = [1, 128], strides = [1, 1]} : vector<1x256xf32> to vector<1x128xf32>
    %362 = vector.extract_strided_slice %353 {offsets = [0, 256], sizes = [1, 128], strides = [1, 1]} : vector<1x512xf32> to vector<1x128xf32>
    %363 = math.tanh %362 : vector<1x128xf32>
    %364 = vector.extract_strided_slice %353 {offsets = [0, 384], sizes = [1, 128], strides = [1, 1]} : vector<1x512xf32> to vector<1x128xf32>
    %365 = arith.negf %364 : vector<1x128xf32>
    %366 = math.exp %365 : vector<1x128xf32>
    %cst_106 = arith.constant 1.000000e+00 : f32
    %367 = vector.broadcast %cst_106 : f32 to vector<1x128xf32>
    %368 = arith.addf %367, %366 : vector<1x128xf32>
    %369 = arith.divf %367, %368 : vector<1x128xf32>
    %370 = arith.mulf %361, %344 : vector<1x128xf32>
    %371 = arith.mulf %360, %363 : vector<1x128xf32>
    %372 = arith.addf %370, %371 : vector<1x128xf32>
    %373 = math.tanh %372 : vector<1x128xf32>
    %374 = arith.mulf %369, %373 : vector<1x128xf32>
    %c5_i32_107 = arith.constant 5 : i32
    %375 = arith.truncf %374 : vector<1x128xf32> to vector<1x128xbf16>
    %c0_108 = arith.constant 0 : index
    %c0_109 = arith.constant 0 : index
    %376 = vector.load %arg2[%c0_108, %c0_109] : memref<128x512xbf16, #tpu.memory_space<vmem>>, vector<128x512xbf16>
    %cst_110 = arith.constant dense<0.000000e+00> : vector<1x512xf32>
    %377 = tpu.matmul %375, %376, %cst_110 {dimension_numbers = #tpu.dot_dimension_numbers<[1], [0], [0], [1], [0, 0, 1, 1], [], []>} : vector<1x128xbf16>, vector<128x512xbf16>, vector<1x512xf32> -> vector<1x512xf32>
    %c8_i32_111 = arith.constant 8 : i32
    %378 = arith.addi %c8_i32_111, %c5_i32_107 : i32
    %379 = arith.index_cast %378 : i32 to index
    %c0_112 = arith.constant 0 : index
    %380 = vector.load %arg7[%379, %c0_112] : memref<16x512xf32, #tpu.memory_space<vmem>>, vector<1x512xf32>
    %381 = arith.addf %377, %380 : vector<1x512xf32>
    %382 = vector.extract_strided_slice %381 {offsets = [0, 0], sizes = [1, 256], strides = [1, 1]} : vector<1x512xf32> to vector<1x256xf32>
    %383 = arith.negf %382 : vector<1x256xf32>
    %384 = math.exp %383 : vector<1x256xf32>
    %cst_113 = arith.constant 1.000000e+00 : f32
    %385 = vector.broadcast %cst_113 : f32 to vector<1x256xf32>
    %386 = arith.addf %385, %384 : vector<1x256xf32>
    %387 = arith.divf %385, %386 : vector<1x256xf32>
    %388 = vector.extract_strided_slice %387 {offsets = [0, 0], sizes = [1, 128], strides = [1, 1]} : vector<1x256xf32> to vector<1x128xf32>
    %389 = vector.extract_strided_slice %387 {offsets = [0, 128], sizes = [1, 128], strides = [1, 1]} : vector<1x256xf32> to vector<1x128xf32>
    %390 = vector.extract_strided_slice %381 {offsets = [0, 256], sizes = [1, 128], strides = [1, 1]} : vector<1x512xf32> to vector<1x128xf32>
    %391 = math.tanh %390 : vector<1x128xf32>
    %392 = vector.extract_strided_slice %381 {offsets = [0, 384], sizes = [1, 128], strides = [1, 1]} : vector<1x512xf32> to vector<1x128xf32>
    %393 = arith.negf %392 : vector<1x128xf32>
    %394 = math.exp %393 : vector<1x128xf32>
    %cst_114 = arith.constant 1.000000e+00 : f32
    %395 = vector.broadcast %cst_114 : f32 to vector<1x128xf32>
    %396 = arith.addf %395, %394 : vector<1x128xf32>
    %397 = arith.divf %395, %396 : vector<1x128xf32>
    %398 = arith.mulf %389, %372 : vector<1x128xf32>
    %399 = arith.mulf %388, %391 : vector<1x128xf32>
    %400 = arith.addf %398, %399 : vector<1x128xf32>
    %401 = math.tanh %400 : vector<1x128xf32>
    %402 = arith.mulf %397, %401 : vector<1x128xf32>
    %c6_i32_115 = arith.constant 6 : i32
    %403 = arith.truncf %402 : vector<1x128xf32> to vector<1x128xbf16>
    %c0_116 = arith.constant 0 : index
    %c0_117 = arith.constant 0 : index
    %404 = vector.load %arg2[%c0_116, %c0_117] : memref<128x512xbf16, #tpu.memory_space<vmem>>, vector<128x512xbf16>
    %cst_118 = arith.constant dense<0.000000e+00> : vector<1x512xf32>
    %405 = tpu.matmul %403, %404, %cst_118 {dimension_numbers = #tpu.dot_dimension_numbers<[1], [0], [0], [1], [0, 0, 1, 1], [], []>} : vector<1x128xbf16>, vector<128x512xbf16>, vector<1x512xf32> -> vector<1x512xf32>
    %c8_i32_119 = arith.constant 8 : i32
    %406 = arith.addi %c8_i32_119, %c6_i32_115 : i32
    %407 = arith.index_cast %406 : i32 to index
    %c0_120 = arith.constant 0 : index
    %408 = vector.load %arg7[%407, %c0_120] : memref<16x512xf32, #tpu.memory_space<vmem>>, vector<1x512xf32>
    %409 = arith.addf %405, %408 : vector<1x512xf32>
    %410 = vector.extract_strided_slice %409 {offsets = [0, 0], sizes = [1, 256], strides = [1, 1]} : vector<1x512xf32> to vector<1x256xf32>
    %411 = arith.negf %410 : vector<1x256xf32>
    %412 = math.exp %411 : vector<1x256xf32>
    %cst_121 = arith.constant 1.000000e+00 : f32
    %413 = vector.broadcast %cst_121 : f32 to vector<1x256xf32>
    %414 = arith.addf %413, %412 : vector<1x256xf32>
    %415 = arith.divf %413, %414 : vector<1x256xf32>
    %416 = vector.extract_strided_slice %415 {offsets = [0, 0], sizes = [1, 128], strides = [1, 1]} : vector<1x256xf32> to vector<1x128xf32>
    %417 = vector.extract_strided_slice %415 {offsets = [0, 128], sizes = [1, 128], strides = [1, 1]} : vector<1x256xf32> to vector<1x128xf32>
    %418 = vector.extract_strided_slice %409 {offsets = [0, 256], sizes = [1, 128], strides = [1, 1]} : vector<1x512xf32> to vector<1x128xf32>
    %419 = math.tanh %418 : vector<1x128xf32>
    %420 = vector.extract_strided_slice %409 {offsets = [0, 384], sizes = [1, 128], strides = [1, 1]} : vector<1x512xf32> to vector<1x128xf32>
    %421 = arith.negf %420 : vector<1x128xf32>
    %422 = math.exp %421 : vector<1x128xf32>
    %cst_122 = arith.constant 1.000000e+00 : f32
    %423 = vector.broadcast %cst_122 : f32 to vector<1x128xf32>
    %424 = arith.addf %423, %422 : vector<1x128xf32>
    %425 = arith.divf %423, %424 : vector<1x128xf32>
    %426 = arith.mulf %417, %400 : vector<1x128xf32>
    %427 = arith.mulf %416, %419 : vector<1x128xf32>
    %428 = arith.addf %426, %427 : vector<1x128xf32>
    %429 = math.tanh %428 : vector<1x128xf32>
    %430 = arith.mulf %425, %429 : vector<1x128xf32>
    %c7_i32_123 = arith.constant 7 : i32
    %431 = arith.truncf %430 : vector<1x128xf32> to vector<1x128xbf16>
    %c0_124 = arith.constant 0 : index
    %c0_125 = arith.constant 0 : index
    %432 = vector.load %arg2[%c0_124, %c0_125] : memref<128x512xbf16, #tpu.memory_space<vmem>>, vector<128x512xbf16>
    %cst_126 = arith.constant dense<0.000000e+00> : vector<1x512xf32>
    %433 = tpu.matmul %431, %432, %cst_126 {dimension_numbers = #tpu.dot_dimension_numbers<[1], [0], [0], [1], [0, 0, 1, 1], [], []>} : vector<1x128xbf16>, vector<128x512xbf16>, vector<1x512xf32> -> vector<1x512xf32>
    %c8_i32_127 = arith.constant 8 : i32
    %434 = arith.addi %c8_i32_127, %c7_i32_123 : i32
    %435 = arith.index_cast %434 : i32 to index
    %c0_128 = arith.constant 0 : index
    %436 = vector.load %arg7[%435, %c0_128] : memref<16x512xf32, #tpu.memory_space<vmem>>, vector<1x512xf32>
    %437 = arith.addf %433, %436 : vector<1x512xf32>
    %438 = vector.extract_strided_slice %437 {offsets = [0, 0], sizes = [1, 256], strides = [1, 1]} : vector<1x512xf32> to vector<1x256xf32>
    %439 = arith.negf %438 : vector<1x256xf32>
    %440 = math.exp %439 : vector<1x256xf32>
    %cst_129 = arith.constant 1.000000e+00 : f32
    %441 = vector.broadcast %cst_129 : f32 to vector<1x256xf32>
    %442 = arith.addf %441, %440 : vector<1x256xf32>
    %443 = arith.divf %441, %442 : vector<1x256xf32>
    %444 = vector.extract_strided_slice %443 {offsets = [0, 0], sizes = [1, 128], strides = [1, 1]} : vector<1x256xf32> to vector<1x128xf32>
    %445 = vector.extract_strided_slice %443 {offsets = [0, 128], sizes = [1, 128], strides = [1, 1]} : vector<1x256xf32> to vector<1x128xf32>
    %446 = vector.extract_strided_slice %437 {offsets = [0, 256], sizes = [1, 128], strides = [1, 1]} : vector<1x512xf32> to vector<1x128xf32>
    %447 = math.tanh %446 : vector<1x128xf32>
    %448 = vector.extract_strided_slice %437 {offsets = [0, 384], sizes = [1, 128], strides = [1, 1]} : vector<1x512xf32> to vector<1x128xf32>
    %449 = arith.negf %448 : vector<1x128xf32>
    %450 = math.exp %449 : vector<1x128xf32>
    %cst_130 = arith.constant 1.000000e+00 : f32
    %451 = vector.broadcast %cst_130 : f32 to vector<1x128xf32>
    %452 = arith.addf %451, %450 : vector<1x128xf32>
    %453 = arith.divf %451, %452 : vector<1x128xf32>
    %454 = arith.mulf %445, %428 : vector<1x128xf32>
    %455 = arith.mulf %444, %447 : vector<1x128xf32>
    %456 = arith.addf %454, %455 : vector<1x128xf32>
    %457 = math.tanh %456 : vector<1x128xf32>
    %458 = arith.mulf %453, %457 : vector<1x128xf32>
    %c8_i32_131 = arith.constant 8 : i32
    %c1 = arith.constant 1 : index
    %c0_132 = arith.constant 0 : index
    %459 = vector.load %arg8[%c1, %c0_132] : memref<2x128xf32, #tpu.memory_space<vmem>>, vector<1x128xf32>
    tpu.vector_store %arg8[%c1, %c0_132], %458 {strides = array<i32>} : memref<2x128xf32, #tpu.memory_space<vmem>>, vector<1x128xf32>,
    %c0_133 = arith.constant 0 : index
    %c0_134 = arith.constant 0 : index
    %460 = vector.load %arg8[%c0_133, %c0_134] : memref<2x128xf32, #tpu.memory_space<vmem>>, vector<2x128xf32>
    %cst_135 = arith.constant 0.000000e+00 : f32
    %461 = vector.broadcast %cst_135 : f32 to vector<2x128xf32>
    %462 = arith.maximumf %460, %461 : vector<2x128xf32>
    %463 = vector.broadcast %cst_135 : f32 to vector<2x128xf32>
    %464 = arith.subf %460, %463 : vector<2x128xf32>
    %465 = arith.cmpf one, %464, %464 : vector<2x128xf32>
    %466 = vector.broadcast %cst_135 : f32 to vector<2x128xf32>
    %467 = arith.addf %460, %466 : vector<2x128xf32>
    %468 = math.absf %464 : vector<2x128xf32>
    %cst_136 = arith.constant 0.000000e+00 : f32
    %469 = vector.broadcast %cst_136 : f32 to vector<2x128xf32>
    %470 = arith.subf %469, %468 : vector<2x128xf32>
    %471 = math.exp %470 : vector<2x128xf32>
    %472 = math.log1p %471 : vector<2x128xf32>
    %473 = arith.addf %462, %472 : vector<2x128xf32>
    %474 = arith.select %465, %467, %473 : vector<2x128xi1>, vector<2x128xf32>
    %475 = math.tanh %474 : vector<2x128xf32>
    %476 = arith.mulf %460, %475 : vector<2x128xf32>
    %c0_137 = arith.constant 0 : index
    %c0_138 = arith.constant 0 : index
    %477 = vector.load %arg4[%c0_137, %c0_138] : memref<128x128xf32, #tpu.memory_space<vmem>>, vector<128x128xf32>
    %cst_139 = arith.constant dense<0.000000e+00> : vector<2x128xf32>
    %478 = tpu.matmul %476, %477, %cst_139 {dimension_numbers = #tpu.dot_dimension_numbers<[1], [0], [0], [1], [0, 0, 1, 1], [], []>} : vector<2x128xf32>, vector<128x128xf32>, vector<2x128xf32> -> vector<2x128xf32>
    %c0_140 = arith.constant 0 : index
    %c0_141 = arith.constant 0 : index
    %479 = vector.load %arg5[%c0_140, %c0_141] : memref<1x128xf32, #tpu.memory_space<vmem>>, vector<1x128xf32>
    %480 = vector.broadcast %479 : vector<1x128xf32> to vector<2x128xf32>
    %481 = arith.addf %478, %480 : vector<2x128xf32>
    %482 = tpu.iota {dimensions = array<i32: 1>} : vector<2x128xi32>
    %c2_i32_142 = arith.constant 2 : i32
    %483 = vector.broadcast %c2_i32_142 : i32 to vector<2x128xi32>
    %484 = arith.cmpi slt, %482, %483 : vector<2x128xi32>
    %cst_143 = arith.constant 0xFF800000 : f32
    %485 = vector.broadcast %cst_143 : f32 to vector<2x128xf32>
    %486 = arith.select %484, %481, %485 : vector<2x128xi1>, vector<2x128xf32>
    %cst_144 = arith.constant dense<0xFF800000> : vector<2xf32>
    %487 = vector.multi_reduction <maximumf>, %486, %cst_144 [1] : vector<2x128xf32> to vector<2xf32>
    %488 = vector.shape_cast %487 : vector<2xf32> to vector<2x1xf32>
    %489 = vector.broadcast %488 : vector<2x1xf32> to vector<2x128xf32>
    %490 = arith.subf %486, %489 : vector<2x128xf32>
    %491 = math.exp %490 : vector<2x128xf32>
    %cst_145 = arith.constant dense<0.000000e+00> : vector<2xf32>
    %492 = vector.multi_reduction <add>, %491, %cst_145 [1] : vector<2x128xf32> to vector<2xf32>
    %493 = vector.shape_cast %492 : vector<2xf32> to vector<2x1xf32>
    %494 = math.log %493 : vector<2x1xf32>
    %495 = arith.addf %488, %494 : vector<2x1xf32>
    %496 = vector.broadcast %495 : vector<2x1xf32> to vector<2x128xf32>
    %497 = arith.subf %481, %496 : vector<2x128xf32>
    %c0_146 = arith.constant 0 : index
    %c0_147 = arith.constant 0 : index
    %498 = vector.load %arg6[%c0_146, %c0_147] : memref<2x128xf32, #tpu.memory_space<vmem>>, vector<2x128xf32>
    tpu.vector_store %arg6[%c0_146, %c0_147], %497 {strides = array<i32>} : memref<2x128xf32, #tpu.memory_space<vmem>>, vector<2x128xf32>,
    return
  }
}

</mosaic_0001>

<llo_original>
// kernel: tpu_custom_call.1
$region0: #{tpu_custom_call.1}
  #allocation0 [shape = 'u32[]', space=smem, size = 0x4, offset = 0x4, fixed_abs, tag = 'smem constant byte address 0x4 - core index']
  #allocation1 [shape = 'u32[144,128]{1,0:T(1,128)}', space=vmem, size = 0x12000, scoped, tag = 'internal scratch']
  #allocation2 [shape = 'f32[16,512]{1,0:T(8,128)}', space=vmem, size = 0x8000, scoped, tag = 'scratch operand']
  #allocation3 [shape = 'f32[2,128]{1,0:T(2,128)}', space=vmem, size = 0x400, scoped, tag = 'scratch operand']
  %s0 = inlined_call_operand.hbm [shape: f32[16,64], index: 0, kind: input, shape index: {}]
  %s1 = inlined_call_operand.hbm [shape: bf16[64,512], index: 1, kind: input, shape index: {}]
  %s2 = inlined_call_operand.hbm [shape: bf16[128,512], index: 2, kind: input, shape index: {}]
  %s3 = inlined_call_operand.vmem [shape: f32[1,512], index: 3, kind: input, shape index: {}]
  %s4 = inlined_call_operand.hbm [shape: f32[128,128], index: 4, kind: input, shape index: {}]
  %s5 = inlined_call_operand.vmem [shape: f32[1,128], index: 5, kind: input, shape index: {}]
  %s6 = inlined_call_operand.hbm [shape: f32[2,128], index: 6, kind: output, shape index: {}]
  %s7 = sld [smem:[#allocation0]]
  $region50: #{tpu_custom_call.1} parent=0
    _
  %s9 = ssub.s32 1, %s7
  %s10 = scalar_select 0, %s9, %s7
  $region1: #{tpu_custom_call.1} parent=0
    #allocation4 [shape = 'u8[8192]{0}', space=vmem, size = 0x2000, scoped, tag = 'input window, operand 0, single buffered']
    #allocation5 [shape = 's32[1]{0}', space=sflag, size = 0x4, scoped, tag = 'scoped memory for tpu_custom_call.1']
    #allocation6 [shape = 's32[1]{0}', space=sflag, size = 0x4, scoped, tag = 'scoped memory for tpu_custom_call.1']
    #allocation7 [shape = 'u8[65536]{0}', space=vmem, size = 0x10000, scoped, tag = 'input window, operand 1, single buffered']
    #allocation8 [shape = 's32[1]{0}', space=sflag, size = 0x4, scoped, tag = 'scoped memory for tpu_custom_call.1']
    #allocation9 [shape = 'u8[131072]{0}', space=vmem, size = 0x20000, scoped, tag = 'input window, operand 2, single buffered']
    #allocation10 [shape = 'u8[65536]{0}', space=vmem, size = 0x10000, scoped, tag = 'input window, operand 4, single buffered']
    #allocation11 [shape = 's32[1]{0}', space=sflag, size = 0x4, scoped, tag = 'scoped memory for tpu_custom_call.1']
    #allocation12 [shape = 'u8[1024]{0}', space=vmem, size = 0x400, scoped, tag = 'output window, operand 0, single buffered']
    %11 = vsyncpa [#allocation5], 0
    %12 = vsyncpa [#allocation8], 0
    %13 = vsyncpa [#allocation11], 0
    %14 = vsyncpa [#allocation6], 0
    // Predicated region
    $region2: #{tpu_custom_call.1} parent=1 // pred_check
      _
    $region3: #{tpu_custom_call.1} parent=1 // pred_check_branch
      %16 = sbr.rel (0) target = $region5
    $region4: #{tpu_custom_call.1} parent=1 // pred_region
      %s18 = ssub.s32 256, 256
      %19 = vsyncadd [#allocation5], %s18
      %s20 = sshll.u32 [#allocation4], 4
      %s21 = int_to_ptr.vmem [resolvable:$true] %s20
      %26 = dma.hbm_to_vmem [thread:$0]  %s0, 256, %s21, [#allocation5], 128, 128, 8
    $region5: #{tpu_custom_call.1} parent=1 // pred_fallthru
      _
    // Predicated region
    $region6: #{tpu_custom_call.1} parent=1 // pred_check
      _
    $region7: #{tpu_custom_call.1} parent=1 // pred_check_branch
      %28 = sbr.rel (0) target = $region9
    $region8: #{tpu_custom_call.1} parent=1 // pred_region
      %s30 = ssub.s32 2048, 2048
      %31 = vsyncadd [#allocation8], %s30
      %s32 = sshll.u32 [#allocation7], 4
      %s33 = int_to_ptr.vmem [resolvable:$true] %s32
      %38 = dma.hbm_to_vmem [thread:$0]  %s1, 2048, %s33, [#allocation8], 256, 256, 16
    $region9: #{tpu_custom_call.1} parent=1 // pred_fallthru
      _
    // Predicated region
    $region10: #{tpu_custom_call.1} parent=1 // pred_check
      _
    $region11: #{tpu_custom_call.1} parent=1 // pred_check_branch
      %40 = sbr.rel (0) target = $region13
    $region12: #{tpu_custom_call.1} parent=1 // pred_region
      %s42 = ssub.s32 4096, 4096
      %43 = vsyncadd [#allocation8], %s42
      %s44 = sshll.u32 [#allocation9], 4
      %s45 = int_to_ptr.vmem [resolvable:$true] %s44
      %50 = dma.hbm_to_vmem [thread:$0]  %s2, 4096, %s45, [#allocation8], 256, 256, 16
    $region13: #{tpu_custom_call.1} parent=1 // pred_fallthru
      _
    // Predicated region
    $region14: #{tpu_custom_call.1} parent=1 // pred_check
      _
    $region15: #{tpu_custom_call.1} parent=1 // pred_check_branch
      %52 = sbr.rel (0) target = $region17
    $region16: #{tpu_custom_call.1} parent=1 // pred_region
      _
    $region17: #{tpu_custom_call.1} parent=1 // pred_fallthru
      _
    // Predicated region
    $region18: #{tpu_custom_call.1} parent=1 // pred_check
      _
    $region19: #{tpu_custom_call.1} parent=1 // pred_check_branch
      %54 = sbr.rel (0) target = $region21
    $region20: #{tpu_custom_call.1} parent=1 // pred_region
      %s56 = ssub.s32 2048, 2048
      %57 = vsyncadd [#allocation11], %s56
      %s58 = sshll.u32 [#allocation10], 4
      %s59 = int_to_ptr.vmem [resolvable:$true] %s58
      %64 = dma.hbm_to_vmem [thread:$0]  %s4, 2048, %s59, [#allocation11], 128, 128, 8
    $region21: #{tpu_custom_call.1} parent=1 // pred_fallthru
      _
    // Predicated region
    $region22: #{tpu_custom_call.1} parent=1 // pred_check
      _
    $region23: #{tpu_custom_call.1} parent=1 // pred_check_branch
      %66 = sbr.rel (0) target = $region25
    $region24: #{tpu_custom_call.1} parent=1 // pred_region
      _
    $region25: #{tpu_custom_call.1} parent=1 // pred_fallthru
      _
    // Predicated region
    $region26: #{tpu_custom_call.1} parent=1 // pred_check
      _
    $region27: #{tpu_custom_call.1} parent=1 // pred_check_branch
      %68 = sbr.rel (0) target = $region29
    $region28: #{tpu_custom_call.1} parent=1 // pred_region
      %69 = dma.done [#allocation5], 256
    $region29: #{tpu_custom_call.1} parent=1 // pred_fallthru
      _
    // Predicated region
    $region30: #{tpu_custom_call.1} parent=1 // pred_check
      _
    $region31: #{tpu_custom_call.1} parent=1 // pred_check_branch
      %71 = sbr.rel (0) target = $region33
    $region32: #{tpu_custom_call.1} parent=1 // pred_region
      %72 = dma.done [#allocation8], 2048
    $region33: #{tpu_custom_call.1} parent=1 // pred_fallthru
      _
    // Predicated region
    $region34: #{tpu_custom_call.1} parent=1 // pred_check
      _
    $region35: #{tpu_custom_call.1} parent=1 // pred_check_branch
      %74 = sbr.rel (0) target = $region37
    $region36: #{tpu_custom_call.1} parent=1 // pred_region
      %75 = dma.done [#allocation8], 4096
    $region37: #{tpu_custom_call.1} parent=1 // pred_fallthru
      _
    // Predicated region
    $region38: #{tpu_custom_call.1} parent=1 // pred_check
      _
    $region39: #{tpu_custom_call.1} parent=1 // pred_check_branch
      %77 = sbr.rel (0) target = $region41
    $region40: #{tpu_custom_call.1} parent=1 // pred_region
      %78 = dma.done [#allocation11], 2048
    $region41: #{tpu_custom_call.1} parent=1 // pred_fallthru
      _
    %v80 = vld [vmem:[#allocation4] sm:$0xff]
    %v81 = vld [vmem:[#allocation4 + $0x8] sm:$0xff]
    %v82 = vpack.c.bf16 %v81, %v80
    %v83 = vld [vmem:[#allocation7] sm:$0xff]
    %v84 = vld [vmem:[#allocation7 + $0x8] sm:$0xff]
    %v85 = vld [vmem:[#allocation7 + $0x10] sm:$0xff]
    %v86 = vld [vmem:[#allocation7 + $0x18] sm:$0xff]
    %v87 = vld [vmem:[#allocation7 + $0x20] sm:$0xff]
    %v88 = vld [vmem:[#allocation7 + $0x28] sm:$0xff]
    %v89 = vld [vmem:[#allocation7 + $0x30] sm:$0xff]
    %v90 = vld [vmem:[#allocation7 + $0x38] sm:$0xff]
    %v91 = vld [vmem:[#allocation7 + $0x40] sm:$0xff]
    %v92 = vld [vmem:[#allocation7 + $0x48] sm:$0xff]
    %v93 = vld [vmem:[#allocation7 + $0x50] sm:$0xff]
    %v94 = vld [vmem:[#allocation7 + $0x58] sm:$0xff]
    %v95 = vld [vmem:[#allocation7 + $0x60] sm:$0xff]
    %v96 = vld [vmem:[#allocation7 + $0x68] sm:$0xff]
    %v97 = vld [vmem:[#allocation7 + $0x70] sm:$0xff]
    %v98 = vld [vmem:[#allocation7 + $0x78] sm:$0xff]
    %v99 = vld [vmem:[%s3] sm:$0xf]
    %v101 = vlaneseq
    %v102 = vshrl.u32 %v101, 7
    %v103 = vsub.s32 0, %v102
    %v104 = vrot.slane %v99, %v103
    %v105 = vlaneseq
    %v106 = vshrl.u32 %v105, 7
    %v107 = vsub.s32 1, %v106
    %v108 = vrot.slane %v99, %v107
    %v109 = vlaneseq
    %v110 = vshrl.u32 %v109, 7
    %v111 = vsub.s32 2, %v110
    %v112 = vrot.slane %v99, %v111
    %v113 = vlaneseq
    %v114 = vshrl.u32 %v113, 7
    %v115 = vsub.s32 3, %v114
    %v116 = vrot.slane %v99, %v115
    %v137 = vunpack.c.l.b16 %v83
    %v138 = vunpack.c.h.b16 %v83
    %v139 = vunpack.c.l.b16 %v84
    %v140 = vunpack.c.h.b16 %v84
    %v141 = vunpack.c.l.b16 %v85
    %v142 = vunpack.c.h.b16 %v85
    %v143 = vunpack.c.l.b16 %v86
    %v144 = vunpack.c.h.b16 %v86
    %v145 = vunpack.c.l.b16 %v87
    %v146 = vunpack.c.h.b16 %v87
    %v147 = vunpack.c.l.b16 %v88
    %v148 = vunpack.c.h.b16 %v88
    %v149 = vunpack.c.l.b16 %v89
    %v150 = vunpack.c.h.b16 %v89
    %v151 = vunpack.c.l.b16 %v90
    %v152 = vunpack.c.h.b16 %v90
    %v153 = vunpack.c.l.b16 %v91
    %v154 = vunpack.c.h.b16 %v91
    %v155 = vunpack.c.l.b16 %v92
    %v156 = vunpack.c.h.b16 %v92
    %v157 = vunpack.c.l.b16 %v93
    %v158 = vunpack.c.h.b16 %v93
    %v159 = vunpack.c.l.b16 %v94
    %v160 = vunpack.c.h.b16 %v94
    %v161 = vunpack.c.l.b16 %v95
    %v162 = vunpack.c.h.b16 %v95
    %v163 = vunpack.c.l.b16 %v96
    %v164 = vunpack.c.h.b16 %v96
    %v165 = vunpack.c.l.b16 %v97
    %v166 = vunpack.c.h.b16 %v97
    %v167 = vunpack.c.l.b16 %v98
    %v168 = vunpack.c.h.b16 %v98
    %v169 = vpack.c.b16 %v141, %v137
    %v170 = vpack.c.b16 %v142, %v138
    %v171 = vpack.c.b16 %v143, %v139
    %v172 = vpack.c.b16 %v144, %v140
    %v173 = vpack.c.b16 %v149, %v145
    %v174 = vpack.c.b16 %v150, %v146
    %v175 = vpack.c.b16 %v151, %v147
    %v176 = vpack.c.b16 %v152, %v148
    %v177 = vpack.c.b16 %v157, %v153
    %v178 = vpack.c.b16 %v158, %v154
    %v179 = vpack.c.b16 %v159, %v155
    %v180 = vpack.c.b16 %v160, %v156
    %v181 = vpack.c.b16 %v165, %v161
    %v182 = vpack.c.b16 %v166, %v162
    %v183 = vpack.c.b16 %v167, %v163
    %v184 = vpack.c.b16 %v168, %v164
    %vm201 = vcmask 523264
    %v203 = vsel %vm201, %v82, 0
    %205 = vmatprep.subr.bf16.mxu0 %v170
    %206 = vmatpush1.bf16.msra.mxu0 %v169
    %207 = vmatprep.subr.bf16.mxu0 %v174
    %208 = vmatpush1.bf16.msra.mxu0 %v173
    %209 = vmatprep.subr.bf16.mxu0 %v178
    %210 = vmatpush1.bf16.msra.mxu0 %v177
    %211 = vmatprep.subr.bf16.mxu0 %v182
    %212 = vmatpush1.bf16.msra.mxu0 %v181
    %213 = vmatprep.subr.bf16.mxu0 0
    %214 = vmatpush1.bf16.msra.mxu0 0
    %215 = vmatprep.subr.bf16.mxu0 0
    %216 = vmatpush1.bf16.msra.mxu0 0
    %217 = vmatprep.subr.bf16.mxu0 0
    %218 = vmatpush1.bf16.msra.mxu0 0
    %219 = vmatprep.subr.bf16.mxu0 0
    %220 = vmatpush1.bf16.msra.mxu0 0
    %221 = vmatprep.subr.bf16.mxu0 0
    %222 = vmatpush1.bf16.msra.mxu0 0
    %223 = vmatprep.subr.bf16.mxu0 0
    %224 = vmatpush1.bf16.msra.mxu0 0
    %225 = vmatprep.subr.bf16.mxu0 0
    %226 = vmatpush1.bf16.msra.mxu0 0
    %227 = vmatprep.subr.bf16.mxu0 0
    %228 = vmatpush1.bf16.msra.mxu0 0
    %229 = vmatprep.subr.bf16.mxu0 0
    %230 = vmatpush1.bf16.msra.mxu0 0
    %231 = vmatprep.subr.bf16.mxu0 0
    %232 = vmatpush1.bf16.msra.mxu0 0
    %233 = vmatprep.subr.bf16.mxu0 0
    %234 = vmatpush1.bf16.msra.mxu0 0
    %235 = vmatprep.subr.bf16.mxu0 0
    %236 = vmatpush1.bf16.msra.mxu0 0
    %237 = vmatprep.mubr.bf16.mxu0 0
    %238 = vmatmul.mubr.bf16.gmra.mrb[0].mxu0 %v203
    %v239 = vpop.f32.mrb[0].mxu0
    %v240 = vadd.f32 %v104, %v239
    %v241 = vpop.f32.mrb[0].mxu0
    %v242 = vadd.f32 %v108, %v241
    %v243 = vpop.f32.mrb[0].mxu0
    %v244 = vadd.f32 %v104, %v243
    %v245 = vpop.f32.mrb[0].mxu0
    %v246 = vadd.f32 %v108, %v245
    %247 = vdwg.mxu0
    %248 = vmatprep.subr.bf16.mxu0 %v172
    %249 = vmatpush1.bf16.msra.mxu0 %v171
    %250 = vmatprep.subr.bf16.mxu0 %v176
    %251 = vmatpush1.bf16.msra.mxu0 %v175
    %252 = vmatprep.subr.bf16.mxu0 %v180
    %253 = vmatpush1.bf16.msra.mxu0 %v179
    %254 = vmatprep.subr.bf16.mxu0 %v184
    %255 = vmatpush1.bf16.msra.mxu0 %v183
    %256 = vmatprep.subr.bf16.mxu0 0
    %257 = vmatpush1.bf16.msra.mxu0 0
    %258 = vmatprep.subr.bf16.mxu0 0
    %259 = vmatpush1.bf16.msra.mxu0 0
    %260 = vmatprep.subr.bf16.mxu0 0
    %261 = vmatpush1.bf16.msra.mxu0 0
    %262 = vmatprep.subr.bf16.mxu0 0
    %263 = vmatpush1.bf16.msra.mxu0 0
    %264 = vmatprep.subr.bf16.mxu0 0
    %265 = vmatpush1.bf16.msra.mxu0 0
    %266 = vmatprep.subr.bf16.mxu0 0
    %267 = vmatpush1.bf16.msra.mxu0 0
    %268 = vmatprep.subr.bf16.mxu0 0
    %269 = vmatpush1.bf16.msra.mxu0 0
    %270 = vmatprep.subr.bf16.mxu0 0
    %271 = vmatpush1.bf16.msra.mxu0 0
    %272 = vmatprep.subr.bf16.mxu0 0
    %273 = vmatpush1.bf16.msra.mxu0 0
    %274 = vmatprep.subr.bf16.mxu0 0
    %275 = vmatpush1.bf16.msra.mxu0 0
    %276 = vmatprep.subr.bf16.mxu0 0
    %277 = vmatpush1.bf16.msra.mxu0 0
    %278 = vmatprep.subr.bf16.mxu0 0
    %279 = vmatpush1.bf16.msra.mxu0 0
    %280 = vmatprep.mubr.bf16.mxu0 0
    %281 = vmatmul.mubr.bf16.gmra.mrb[0].mxu0 %v203
    %v282 = vpop.f32.mrb[0].mxu0
    %v283 = vadd.f32 %v112, %v282
    %v284 = vpop.f32.mrb[0].mxu0
    %v285 = vadd.f32 %v116, %v284
    %v286 = vpop.f32.mrb[0].mxu0
    %v287 = vadd.f32 %v112, %v286
    %v288 = vpop.f32.mrb[0].mxu0
    %v289 = vadd.f32 %v116, %v288
    %290 = vdwg.mxu0
    %291 = vst [vmem:[#allocation2] sm:$0xff] %v240
    %292 = vst [vmem:[#allocation2 + $0x8] sm:$0xff] %v242
    %293 = vst [vmem:[#allocation2 + $0x10] sm:$0xff] %v283
    %294 = vst [vmem:[#allocation2 + $0x18] sm:$0xff] %v285
    %295 = vst [vmem:[#allocation2 + $0x20] sm:$0xff] %v244
    %296 = vst [vmem:[#allocation2 + $0x28] sm:$0xff] %v246
    %297 = vst [vmem:[#allocation2 + $0x30] sm:$0xff] %v287
    %298 = vst [vmem:[#allocation2 + $0x38] sm:$0xff] %v289
    %v299 = vld [vmem:[#allocation9] sm:$0xff]
    %v300 = vld [vmem:[#allocation9 + $0x8] sm:$0xff]
    %v301 = vld [vmem:[#allocation9 + $0x10] sm:$0xff]
    %v302 = vld [vmem:[#allocation9 + $0x18] sm:$0xff]
    %v303 = vld [vmem:[#allocation9 + $0x20] sm:$0xff]
    %v304 = vld [vmem:[#allocation9 + $0x28] sm:$0xff]
    %v305 = vld [vmem:[#allocation9 + $0x30] sm:$0xff]
    %v306 = vld [vmem:[#allocation9 + $0x38] sm:$0xff]
    %v307 = vld [vmem:[#allocation9 + $0x40] sm:$0xff]
    %v308 = vld [vmem:[#allocation9 + $0x48] sm:$0xff]
    %v309 = vld [vmem:[#allocation9 + $0x50] sm:$0xff]
    %v310 = vld [vmem:[#allocation9 + $0x58] sm:$0xff]
    %v311 = vld [vmem:[#allocation9 + $0x60] sm:$0xff]
    %v312 = vld [vmem:[#allocation9 + $0x68] sm:$0xff]
    %v313 = vld [vmem:[#allocation9 + $0x70] sm:$0xff]
    %v314 = vld [vmem:[#allocation9 + $0x78] sm:$0xff]
    %v315 = vld [vmem:[#allocation9 + $0x80] sm:$0xff]
    %v316 = vld [vmem:[#allocation9 + $0x88] sm:$0xff]
    %v317 = vld [vmem:[#allocation9 + $0x90] sm:$0xff]
    %v318 = vld [vmem:[#allocation9 + $0x98] sm:$0xff]
    %v319 = vld [vmem:[#allocation9 + $0xa0] sm:$0xff]
    %v320 = vld [vmem:[#allocation9 + $0xa8] sm:$0xff]
    %v321 = vld [vmem:[#allocation9 + $0xb0] sm:$0xff]
    %v322 = vld [vmem:[#allocation9 + $0xb8] sm:$0xff]
    %v323 = vld [vmem:[#allocation9 + $0xc0] sm:$0xff]
    %v324 = vld [vmem:[#allocation9 + $0xc8] sm:$0xff]
    %v325 = vld [vmem:[#allocation9 + $0xd0] sm:$0xff]
    %v326 = vld [vmem:[#allocation9 + $0xd8] sm:$0xff]
    %v327 = vld [vmem:[#allocation9 + $0xe0] sm:$0xff]
    %v328 = vld [vmem:[#allocation9 + $0xe8] sm:$0xff]
    %v329 = vld [vmem:[#allocation9 + $0xf0] sm:$0xff]
    %v330 = vld [vmem:[#allocation9 + $0xf8] sm:$0xff]
    %v331 = vld [vmem:[#allocation2] ss:$8 sm:$0xf]
    %v364 = vunpack.c.l.b16 %v299
    %v365 = vunpack.c.h.b16 %v299
    %v366 = vunpack.c.l.b16 %v300
    %v367 = vunpack.c.h.b16 %v300
    %v368 = vunpack.c.l.b16 %v301
    %v369 = vunpack.c.h.b16 %v301
    %v370 = vunpack.c.l.b16 %v302
    %v371 = vunpack.c.h.b16 %v302
    %v372 = vunpack.c.l.b16 %v303
    %v373 = vunpack.c.h.b16 %v303
    %v374 = vunpack.c.l.b16 %v304
    %v375 = vunpack.c.h.b16 %v304
    %v376 = vunpack.c.l.b16 %v305
    %v377 = vunpack.c.h.b16 %v305
    %v378 = vunpack.c.l.b16 %v306
    %v379 = vunpack.c.h.b16 %v306
    %v380 = vunpack.c.l.b16 %v307
    %v381 = vunpack.c.h.b16 %v307
    %v382 = vunpack.c.l.b16 %v308
    %v383 = vunpack.c.h.b16 %v308
    %v384 = vunpack.c.l.b16 %v309
    %v385 = vunpack.c.h.b16 %v309
    %v386 = vunpack.c.l.b16 %v310
    %v387 = vunpack.c.h.b16 %v310
    %v388 = vunpack.c.l.b16 %v311
    %v389 = vunpack.c.h.b16 %v311
    %v390 = vunpack.c.l.b16 %v312
    %v391 = vunpack.c.h.b16 %v312
    %v392 = vunpack.c.l.b16 %v313
    %v393 = vunpack.c.h.b16 %v313
    %v394 = vunpack.c.l.b16 %v314
    %v395 = vunpack.c.h.b16 %v314
    %v396 = vunpack.c.l.b16 %v315
    %v397 = vunpack.c.h.b16 %v315
    %v398 = vunpack.c.l.b16 %v316
    %v399 = vunpack.c.h.b16 %v316
    %v400 = vunpack.c.l.b16 %v317
    %v401 = vunpack.c.h.b16 %v317
    %v402 = vunpack.c.l.b16 %v318
    %v403 = vunpack.c.h.b16 %v318
    %v404 = vunpack.c.l.b16 %v319
    %v405 = vunpack.c.h.b16 %v319
    %v406 = vunpack.c.l.b16 %v320
    %v407 = vunpack.c.h.b16 %v320
    %v408 = vunpack.c.l.b16 %v321
    %v409 = vunpack.c.h.b16 %v321
    %v410 = vunpack.c.l.b16 %v322
    %v411 = vunpack.c.h.b16 %v322
    %v412 = vunpack.c.l.b16 %v323
    %v413 = vunpack.c.h.b16 %v323
    %v414 = vunpack.c.l.b16 %v324
    %v415 = vunpack.c.h.b16 %v324
    %v416 = vunpack.c.l.b16 %v325
    %v417 = vunpack.c.h.b16 %v325
    %v418 = vunpack.c.l.b16 %v326
    %v419 = vunpack.c.h.b16 %v326
    %v420 = vunpack.c.l.b16 %v327
    %v421 = vunpack.c.h.b16 %v327
    %v422 = vunpack.c.l.b16 %v328
    %v423 = vunpack.c.h.b16 %v328
    %v424 = vunpack.c.l.b16 %v329
    %v425 = vunpack.c.h.b16 %v329
    %v426 = vunpack.c.l.b16 %v330
    %v427 = vunpack.c.h.b16 %v330
    %v428 = vpack.c.b16 %v368, %v364
    %v429 = vpack.c.b16 %v369, %v365
    %v430 = vpack.c.b16 %v370, %v366
    %v431 = vpack.c.b16 %v371, %v367
    %v432 = vpack.c.b16 %v376, %v372
    %v433 = vpack.c.b16 %v377, %v373
    %v434 = vpack.c.b16 %v378, %v374
    %v435 = vpack.c.b16 %v379, %v375
    %v436 = vpack.c.b16 %v384, %v380
    %v437 = vpack.c.b16 %v385, %v381
    %v438 = vpack.c.b16 %v386, %v382
    %v439 = vpack.c.b16 %v387, %v383
    %v440 = vpack.c.b16 %v392, %v388
    %v441 = vpack.c.b16 %v393, %v389
    %v442 = vpack.c.b16 %v394, %v390
    %v443 = vpack.c.b16 %v395, %v391
    %v444 = vpack.c.b16 %v400, %v396
    %v445 = vpack.c.b16 %v401, %v397
    %v446 = vpack.c.b16 %v402, %v398
    %v447 = vpack.c.b16 %v403, %v399
    %v448 = vpack.c.b16 %v408, %v404
    %v449 = vpack.c.b16 %v409, %v405
    %v450 = vpack.c.b16 %v410, %v406
    %v451 = vpack.c.b16 %v411, %v407
    %v452 = vpack.c.b16 %v416, %v412
    %v453 = vpack.c.b16 %v417, %v413
    %v454 = vpack.c.b16 %v418, %v414
    %v455 = vpack.c.b16 %v419, %v415
    %v456 = vpack.c.b16 %v424, %v420
    %v457 = vpack.c.b16 %v425, %v421
    %v458 = vpack.c.b16 %v426, %v422
    %v459 = vpack.c.b16 %v427, %v423
    %v493 = vlaneseq
    %v494 = vshrl.u32 %v493, 7
    %v495 = vsub.s32 0, %v494
    %v496 = vrot.slane %v331, %v495
    %v497 = vlaneseq
    %v498 = vshrl.u32 %v497, 7
    %v499 = vsub.s32 1, %v498
    %v500 = vrot.slane %v331, %v499
    %v501 = vlaneseq
    %v502 = vshrl.u32 %v501, 7
    %v503 = vsub.s32 2, %v502
    %v504 = vrot.slane %v331, %v503
    %v505 = vlaneseq
    %v506 = vshrl.u32 %v505, 7
    %v507 = vsub.s32 3, %v506
    %v508 = vrot.slane %v331, %v507
    %513 = vmatprep.subr.bf16.mxu0 %v429
    %514 = vmatpush1.bf16.msra.mxu0 %v428
    %515 = vmatprep.subr.bf16.mxu0 %v433
    %516 = vmatpush1.bf16.msra.mxu0 %v432
    %517 = vmatprep.subr.bf16.mxu0 %v437
    %518 = vmatpush1.bf16.msra.mxu0 %v436
    %519 = vmatprep.subr.bf16.mxu0 %v441
    %520 = vmatpush1.bf16.msra.mxu0 %v440
    %521 = vmatprep.subr.bf16.mxu0 %v445
    %522 = vmatpush1.bf16.msra.mxu0 %v444
    %523 = vmatprep.subr.bf16.mxu0 %v449
    %524 = vmatpush1.bf16.msra.mxu0 %v448
    %525 = vmatprep.subr.bf16.mxu0 %v453
    %526 = vmatpush1.bf16.msra.mxu0 %v452
    %527 = vmatprep.subr.bf16.mxu0 %v457
    %528 = vmatpush1.bf16.msra.mxu0 %v456
    %529 = vmatprep.subr.bf16.mxu0 0
    %530 = vmatpush1.bf16.msra.mxu0 0
    %531 = vmatprep.subr.bf16.mxu0 0
    %532 = vmatpush1.bf16.msra.mxu0 0
    %533 = vmatprep.subr.bf16.mxu0 0
    %534 = vmatpush1.bf16.msra.mxu0 0
    %535 = vmatprep.subr.bf16.mxu0 0
    %536 = vmatpush1.bf16.msra.mxu0 0
    %537 = vmatprep.subr.bf16.mxu0 0
    %538 = vmatpush1.bf16.msra.mxu0 0
    %539 = vmatprep.subr.bf16.mxu0 0
    %540 = vmatpush1.bf16.msra.mxu0 0
    %541 = vmatprep.subr.bf16.mxu0 0
    %542 = vmatpush1.bf16.msra.mxu0 0
    %543 = vmatprep.subr.bf16.mxu0 0
    %544 = vmatpush1.bf16.msra.mxu0 0
    %545 = vmatprep.mubr.bf16.mxu0 0
    %546 = vmatmul.mubr.bf16.gmra.mrb[0].mxu0 0
    %v547 = vpop.f32.mrb[0].mxu0
    %v548 = vadd.f32 %v496, %v547
    %v549 = vpop.f32.mrb[0].mxu0
    %v550 = vadd.f32 %v500, %v549
    %v551 = vpop.f32.mrb[0].mxu0
    %v552 = vpop.f32.mrb[0].mxu0
    %553 = vdwg.mxu0
    %554 = vmatprep.subr.bf16.mxu0 %v431
    %555 = vmatpush1.bf16.msra.mxu0 %v430
    %556 = vmatprep.subr.bf16.mxu0 %v435
    %557 = vmatpush1.bf16.msra.mxu0 %v434
    %558 = vmatprep.subr.bf16.mxu0 %v439
    %559 = vmatpush1.bf16.msra.mxu0 %v438
    %560 = vmatprep.subr.bf16.mxu0 %v443
    %561 = vmatpush1.bf16.msra.mxu0 %v442
    %562 = vmatprep.subr.bf16.mxu0 %v447
    %563 = vmatpush1.bf16.msra.mxu0 %v446
    %564 = vmatprep.subr.bf16.mxu0 %v451
    %565 = vmatpush1.bf16.msra.mxu0 %v450
    %566 = vmatprep.subr.bf16.mxu0 %v455
    %567 = vmatpush1.bf16.msra.mxu0 %v454
    %568 = vmatprep.subr.bf16.mxu0 %v459
    %569 = vmatpush1.bf16.msra.mxu0 %v458
    %570 = vmatprep.subr.bf16.mxu0 0
    %571 = vmatpush1.bf16.msra.mxu0 0
    %572 = vmatprep.subr.bf16.mxu0 0
    %573 = vmatpush1.bf16.msra.mxu0 0
    %574 = vmatprep.subr.bf16.mxu0 0
    %575 = vmatpush1.bf16.msra.mxu0 0
    %576 = vmatprep.subr.bf16.mxu0 0
    %577 = vmatpush1.bf16.msra.mxu0 0
    %578 = vmatprep.subr.bf16.mxu0 0
    %579 = vmatpush1.bf16.msra.mxu0 0
    %580 = vmatprep.subr.bf16.mxu0 0
    %581 = vmatpush1.bf16.msra.mxu0 0
    %582 = vmatprep.subr.bf16.mxu0 0
    %583 = vmatpush1.bf16.msra.mxu0 0
    %584 = vmatprep.subr.bf16.mxu0 0
    %585 = vmatpush1.bf16.msra.mxu0 0
    %586 = vmatprep.mubr.bf16.mxu0 0
    %587 = vmatmul.mubr.bf16.gmra.mrb[0].mxu0 0
    %v588 = vpop.f32.mrb[0].mxu0
    %v589 = vadd.f32 %v504, %v588
    %v590 = vpop.f32.mrb[0].mxu0
    %v591 = vadd.f32 %v508, %v590
    %v592 = vpop.f32.mrb[0].mxu0
    %v593 = vpop.f32.mrb[0].mxu0
    %594 = vdwg.mxu0
    %v595 = vxor.u32 %v548, 2147483648
    %v596 = vxor.u32 %v550, 2147483648
    %v597 = vmul.f32 %v595, 1.442695
    %v598 = vpow.pop %v597
    %v599 = vmul.f32 %v596, 1.442695
    %v600 = vpow.pop %v599
    %v601 = vadd.f32 %v598, 1.0
    %v602 = vadd.f32 %v600, 1.0
    %v603 = vrcp.pop %v601
    %v604 = vmul.f32 1.0, %v603
    %v605 = vrcp.pop %v602
    %v606 = vmul.f32 1.0, %v605
    %v607 = vtanh.pop %v589
    %v608 = vxor.u32 %v591, 2147483648
    %v609 = vmul.f32 %v608, 1.442695
    %v610 = vpow.pop %v609
    %v611 = vadd.f32 %v610, 1.0
    %v612 = vrcp.pop %v611
    %v613 = vmul.f32 1.0, %v612
    %v614 = vmul.f32 %v606, 0.0
    %v615 = vmul.f32 %v604, %v607
    %v616 = vadd.f32 %v614, %v615
    %v617 = vtanh.pop %v616
    %v618 = vmul.f32 %v613, %v617
    %v619 = vpack.c.bf16 %v618, %v618
    %s620 = scalar_lea.vmem [#allocation2], 1
    %v621 = vld [vmem:[%s620] ss:$8 sm:$0xf]
    %v623 = vlaneseq
    %v624 = vshrl.u32 %v623, 7
    %v625 = vsub.s32 0, %v624
    %v626 = vrot.slane %v621, %v625
    %v627 = vlaneseq
    %v628 = vshrl.u32 %v627, 7
    %v629 = vsub.s32 1, %v628
    %v630 = vrot.slane %v621, %v629
    %v631 = vlaneseq
    %v632 = vshrl.u32 %v631, 7
    %v633 = vsub.s32 2, %v632
    %v634 = vrot.slane %v621, %v633
    %v635 = vlaneseq
    %v636 = vshrl.u32 %v635, 7
    %v637 = vsub.s32 3, %v636
    %v638 = vrot.slane %v621, %v637
    %643 = vmatprep.subr.bf16.mxu0 %v429
    %644 = vmatpush1.bf16.msra.mxu0 %v428
    %645 = vmatprep.subr.bf16.mxu0 %v433
    %646 = vmatpush1.bf16.msra.mxu0 %v432
    %647 = vmatprep.subr.bf16.mxu0 %v437
    %648 = vmatpush1.bf16.msra.mxu0 %v436
    %649 = vmatprep.subr.bf16.mxu0 %v441
    %650 = vmatpush1.bf16.msra.mxu0 %v440
    %651 = vmatprep.subr.bf16.mxu0 %v445
    %652 = vmatpush1.bf16.msra.mxu0 %v444
    %653 = vmatprep.subr.bf16.mxu0 %v449
    %654 = vmatpush1.bf16.msra.mxu0 %v448
    %655 = vmatprep.subr.bf16.mxu0 %v453
    %656 = vmatpush1.bf16.msra.mxu0 %v452
    %657 = vmatprep.subr.bf16.mxu0 %v457
    %658 = vmatpush1.bf16.msra.mxu0 %v456
    %659 = vmatprep.subr.bf16.mxu0 0
    %660 = vmatpush1.bf16.msra.mxu0 0
    %661 = vmatprep.subr.bf16.mxu0 0
    %662 = vmatpush1.bf16.msra.mxu0 0
    %663 = vmatprep.subr.bf16.mxu0 0
    %664 = vmatpush1.bf16.msra.mxu0 0
    %665 = vmatprep.subr.bf16.mxu0 0
    %666 = vmatpush1.bf16.msra.mxu0 0
    %667 = vmatprep.subr.bf16.mxu0 0
    %668 = vmatpush1.bf16.msra.mxu0 0
    %669 = vmatprep.subr.bf16.mxu0 0
    %670 = vmatpush1.bf16.msra.mxu0 0
    %671 = vmatprep.subr.bf16.mxu0 0
    %672 = vmatpush1.bf16.msra.mxu0 0
    %673 = vmatprep.subr.bf16.mxu0 0
    %674 = vmatpush1.bf16.msra.mxu0 0
    %675 = vmatprep.mubr.bf16.mxu0 0
    %676 = vmatmul.mubr.bf16.gmra.mrb[0].mxu0 %v619
    %v677 = vpop.f32.mrb[0].mxu0
    %v678 = vadd.f32 %v626, %v677
    %v679 = vpop.f32.mrb[0].mxu0
    %v680 = vadd.f32 %v630, %v679
    %v681 = vpop.f32.mrb[0].mxu0
    %v682 = vpop.f32.mrb[0].mxu0
    %683 = vdwg.mxu0
    %684 = vmatprep.subr.bf16.mxu0 %v431
    %685 = vmatpush1.bf16.msra.mxu0 %v430
    %686 = vmatprep.subr.bf16.mxu0 %v435
    %687 = vmatpush1.bf16.msra.mxu0 %v434
    %688 = vmatprep.subr.bf16.mxu0 %v439
    %689 = vmatpush1.bf16.msra.mxu0 %v438
    %690 = vmatprep.subr.bf16.mxu0 %v443
    %691 = vmatpush1.bf16.msra.mxu0 %v442
    %692 = vmatprep.subr.bf16.mxu0 %v447
    %693 = vmatpush1.bf16.msra.mxu0 %v446
    %694 = vmatprep.subr.bf16.mxu0 %v451
    %695 = vmatpush1.bf16.msra.mxu0 %v450
    %696 = vmatprep.subr.bf16.mxu0 %v455
    %697 = vmatpush1.bf16.msra.mxu0 %v454
    %698 = vmatprep.subr.bf16.mxu0 %v459
    %699 = vmatpush1.bf16.msra.mxu0 %v458
    %700 = vmatprep.subr.bf16.mxu0 0
    %701 = vmatpush1.bf16.msra.mxu0 0
    %702 = vmatprep.subr.bf16.mxu0 0
    %703 = vmatpush1.bf16.msra.mxu0 0
    %704 = vmatprep.subr.bf16.mxu0 0
    %705 = vmatpush1.bf16.msra.mxu0 0
    %706 = vmatprep.subr.bf16.mxu0 0
    %707 = vmatpush1.bf16.msra.mxu0 0
    %708 = vmatprep.subr.bf16.mxu0 0
    %709 = vmatpush1.bf16.msra.mxu0 0
    %710 = vmatprep.subr.bf16.mxu0 0
    %711 = vmatpush1.bf16.msra.mxu0 0
    %712 = vmatprep.subr.bf16.mxu0 0
    %713 = vmatpush1.bf16.msra.mxu0 0
    %714 = vmatprep.subr.bf16.mxu0 0
    %715 = vmatpush1.bf16.msra.mxu0 0
    %716 = vmatprep.mubr.bf16.mxu0 0
    %717 = vmatmul.mubr.bf16.gmra.mrb[0].mxu0 %v619
    %v718 = vpop.f32.mrb[0].mxu0
    %v719 = vadd.f32 %v634, %v718
    %v720 = vpop.f32.mrb[0].mxu0
    %v721 = vadd.f32 %v638, %v720
    %v722 = vpop.f32.mrb[0].mxu0
    %v723 = vpop.f32.mrb[0].mxu0
    %724 = vdwg.mxu0
    %v725 = vxor.u32 %v678, 2147483648
    %v726 = vxor.u32 %v680, 2147483648
    %v727 = vmul.f32 %v725, 1.442695
    %v728 = vpow.pop %v727
    %v729 = vmul.f32 %v726, 1.442695
    %v730 = vpow.pop %v729
    %v731 = vadd.f32 %v728, 1.0
    %v732 = vadd.f32 %v730, 1.0
    %v733 = vrcp.pop %v731
    %v734 = vmul.f32 1.0, %v733
    %v735 = vrcp.pop %v732
    %v736 = vmul.f32 1.0, %v735
    %v737 = vtanh.pop %v719
    %v738 = vxor.u32 %v721, 2147483648
    %v739 = vmul.f32 %v738, 1.442695
    %v740 = vpow.pop %v739
    %v741 = vadd.f32 %v740, 1.0
    %v742 = vrcp.pop %v741
    %v743 = vmul.f32 1.0, %v742
    %v744 = vmul.f32 %v736, %v616
    %v745 = vmul.f32 %v734, %v737
    %v746 = vadd.f32 %v744, %v745
    %v747 = vtanh.pop %v746
    %v748 = vmul.f32 %v743, %v747
    %v749 = vpack.c.bf16 %v748, %v748
    %s750 = scalar_lea.vmem [#allocation2], 2
    %v751 = vld [vmem:[%s750] ss:$8 sm:$0xf]
    %v753 = vlaneseq
    %v754 = vshrl.u32 %v753, 7
    %v755 = vsub.s32 0, %v754
    %v756 = vrot.slane %v751, %v755
    %v757 = vlaneseq
    %v758 = vshrl.u32 %v757, 7
    %v759 = vsub.s32 1, %v758
    %v760 = vrot.slane %v751, %v759
    %v761 = vlaneseq
    %v762 = vshrl.u32 %v761, 7
    %v763 = vsub.s32 2, %v762
    %v764 = vrot.slane %v751, %v763
    %v765 = vlaneseq
    %v766 = vshrl.u32 %v765, 7
    %v767 = vsub.s32 3, %v766
    %v768 = vrot.slane %v751, %v767
    %773 = vmatprep.subr.bf16.mxu0 %v429
    %774 = vmatpush1.bf16.msra.mxu0 %v428
    %775 = vmatprep.subr.bf16.mxu0 %v433
    %776 = vmatpush1.bf16.msra.mxu0 %v432
    %777 = vmatprep.subr.bf16.mxu0 %v437
    %778 = vmatpush1.bf16.msra.mxu0 %v436
    %779 = vmatprep.subr.bf16.mxu0 %v441
    %780 = vmatpush1.bf16.msra.mxu0 %v440
    %781 = vmatprep.subr.bf16.mxu0 %v445
    %782 = vmatpush1.bf16.msra.mxu0 %v444
    %783 = vmatprep.subr.bf16.mxu0 %v449
    %784 = vmatpush1.bf16.msra.mxu0 %v448
    %785 = vmatprep.subr.bf16.mxu0 %v453
    %786 = vmatpush1.bf16.msra.mxu0 %v452
    %787 = vmatprep.subr.bf16.mxu0 %v457
    %788 = vmatpush1.bf16.msra.mxu0 %v456
    %789 = vmatprep.subr.bf16.mxu0 0
    %790 = vmatpush1.bf16.msra.mxu0 0
    %791 = vmatprep.subr.bf16.mxu0 0
    %792 = vmatpush1.bf16.msra.mxu0 0
    %793 = vmatprep.subr.bf16.mxu0 0
    %794 = vmatpush1.bf16.msra.mxu0 0
    %795 = vmatprep.subr.bf16.mxu0 0
    %796 = vmatpush1.bf16.msra.mxu0 0
    %797 = vmatprep.subr.bf16.mxu0 0
    %798 = vmatpush1.bf16.msra.mxu0 0
    %799 = vmatprep.subr.bf16.mxu0 0
    %800 = vmatpush1.bf16.msra.mxu0 0
    %801 = vmatprep.subr.bf16.mxu0 0
    %802 = vmatpush1.bf16.msra.mxu0 0
    %803 = vmatprep.subr.bf16.mxu0 0
    %804 = vmatpush1.bf16.msra.mxu0 0
    %805 = vmatprep.mubr.bf16.mxu0 0
    %806 = vmatmul.mubr.bf16.gmra.mrb[0].mxu0 %v749
    %v807 = vpop.f32.mrb[0].mxu0
    %v808 = vadd.f32 %v756, %v807
    %v809 = vpop.f32.mrb[0].mxu0
    %v810 = vadd.f32 %v760, %v809
    %v811 = vpop.f32.mrb[0].mxu0
    %v812 = vpop.f32.mrb[0].mxu0
    %813 = vdwg.mxu0
    %814 = vmatprep.subr.bf16.mxu0 %v431
    %815 = vmatpush1.bf16.msra.mxu0 %v430
    %816 = vmatprep.subr.bf16.mxu0 %v435
    %817 = vmatpush1.bf16.msra.mxu0 %v434
    %818 = vmatprep.subr.bf16.mxu0 %v439
    %819 = vmatpush1.bf16.msra.mxu0 %v438
    %820 = vmatprep.subr.bf16.mxu0 %v443
    %821 = vmatpush1.bf16.msra.mxu0 %v442
    %822 = vmatprep.subr.bf16.mxu0 %v447
    %823 = vmatpush1.bf16.msra.mxu0 %v446
    %824 = vmatprep.subr.bf16.mxu0 %v451
    %825 = vmatpush1.bf16.msra.mxu0 %v450
    %826 = vmatprep.subr.bf16.mxu0 %v455
    %827 = vmatpush1.bf16.msra.mxu0 %v454
    %828 = vmatprep.subr.bf16.mxu0 %v459
    %829 = vmatpush1.bf16.msra.mxu0 %v458
    %830 = vmatprep.subr.bf16.mxu0 0
    %831 = vmatpush1.bf16.msra.mxu0 0
    %832 = vmatprep.subr.bf16.mxu0 0
    %833 = vmatpush1.bf16.msra.mxu0 0
    %834 = vmatprep.subr.bf16.mxu0 0
    %835 = vmatpush1.bf16.msra.mxu0 0
    %836 = vmatprep.subr.bf16.mxu0 0
    %837 = vmatpush1.bf16.msra.mxu0 0
    %838 = vmatprep.subr.bf16.mxu0 0
    %839 = vmatpush1.bf16.msra.mxu0 0
    %840 = vmatprep.subr.bf16.mxu0 0
    %841 = vmatpush1.bf16.msra.mxu0 0
    %842 = vmatprep.subr.bf16.mxu0 0
    %843 = vmatpush1.bf16.msra.mxu0 0
    %844 = vmatprep.subr.bf16.mxu0 0
    %845 = vmatpush1.bf16.msra.mxu0 0
    %846 = vmatprep.mubr.bf16.mxu0 0
    %847 = vmatmul.mubr.bf16.gmra.mrb[0].mxu0 %v749
    %v848 = vpop.f32.mrb[0].mxu0
    %v849 = vadd.f32 %v764, %v848
    %v850 = vpop.f32.mrb[0].mxu0
    %v851 = vadd.f32 %v768, %v850
    %v852 = vpop.f32.mrb[0].mxu0
    %v853 = vpop.f32.mrb[0].mxu0
    %854 = vdwg.mxu0
    %v855 = vxor.u32 %v808, 2147483648
    %v856 = vxor.u32 %v810, 2147483648
    %v857 = vmul.f32 %v855, 1.442695
    %v858 = vpow.pop %v857
    %v859 = vmul.f32 %v856, 1.442695
    %v860 = vpow.pop %v859
    %v861 = vadd.f32 %v858, 1.0
    %v862 = vadd.f32 %v860, 1.0
    %v863 = vrcp.pop %v861
    %v864 = vmul.f32 1.0, %v863
    %v865 = vrcp.pop %v862
    %v866 = vmul.f32 1.0, %v865
    %v867 = vtanh.pop %v849
    %v868 = vxor.u32 %v851, 2147483648
    %v869 = vmul.f32 %v868, 1.442695
    %v870 = vpow.pop %v869
    %v871 = vadd.f32 %v870, 1.0
    %v872 = vrcp.pop %v871
    %v873 = vmul.f32 1.0, %v872
    %v874 = vmul.f32 %v866, %v746
    %v875 = vmul.f32 %v864, %v867
    %v876 = vadd.f32 %v874, %v875
    %v877 = vtanh.pop %v876
    %v878 = vmul.f32 %v873, %v877
    %v879 = vpack.c.bf16 %v878, %v878
    %s880 = scalar_lea.vmem [#allocation2], 3
    %v881 = vld [vmem:[%s880] ss:$8 sm:$0xf]
    %v883 = vlaneseq
    %v884 = vshrl.u32 %v883, 7
    %v885 = vsub.s32 0, %v884
    %v886 = vrot.slane %v881, %v885
    %v887 = vlaneseq
    %v888 = vshrl.u32 %v887, 7
    %v889 = vsub.s32 1, %v888
    %v890 = vrot.slane %v881, %v889
    %v891 = vlaneseq
    %v892 = vshrl.u32 %v891, 7
    %v893 = vsub.s32 2, %v892
    %v894 = vrot.slane %v881, %v893
    %v895 = vlaneseq
    %v896 = vshrl.u32 %v895, 7
    %v897 = vsub.s32 3, %v896
    %v898 = vrot.slane %v881, %v897
    %903 = vmatprep.subr.bf16.mxu0 %v429
    %904 = vmatpush1.bf16.msra.mxu0 %v428
    %905 = vmatprep.subr.bf16.mxu0 %v433
    %906 = vmatpush1.bf16.msra.mxu0 %v432
    %907 = vmatprep.subr.bf16.mxu0 %v437
    %908 = vmatpush1.bf16.msra.mxu0 %v436
    %909 = vmatprep.subr.bf16.mxu0 %v441
    %910 = vmatpush1.bf16.msra.mxu0 %v440
    %911 = vmatprep.subr.bf16.mxu0 %v445
    %912 = vmatpush1.bf16.msra.mxu0 %v444
    %913 = vmatprep.subr.bf16.mxu0 %v449
    %914 = vmatpush1.bf16.msra.mxu0 %v448
    %915 = vmatprep.subr.bf16.mxu0 %v453
    %916 = vmatpush1.bf16.msra.mxu0 %v452
    %917 = vmatprep.subr.bf16.mxu0 %v457
    %918 = vmatpush1.bf16.msra.mxu0 %v456
    %919 = vmatprep.subr.bf16.mxu0 0
    %920 = vmatpush1.bf16.msra.mxu0 0
    %921 = vmatprep.subr.bf16.mxu0 0
    %922 = vmatpush1.bf16.msra.mxu0 0
    %923 = vmatprep.subr.bf16.mxu0 0
    %924 = vmatpush1.bf16.msra.mxu0 0
    %925 = vmatprep.subr.bf16.mxu0 0
    %926 = vmatpush1.bf16.msra.mxu0 0
    %927 = vmatprep.subr.bf16.mxu0 0
    %928 = vmatpush1.bf16.msra.mxu0 0
    %929 = vmatprep.subr.bf16.mxu0 0
    %930 = vmatpush1.bf16.msra.mxu0 0
    %931 = vmatprep.subr.bf16.mxu0 0
    %932 = vmatpush1.bf16.msra.mxu0 0
    %933 = vmatprep.subr.bf16.mxu0 0
    %934 = vmatpush1.bf16.msra.mxu0 0
    %935 = vmatprep.mubr.bf16.mxu0 0
    %936 = vmatmul.mubr.bf16.gmra.mrb[0].mxu0 %v879
    %v937 = vpop.f32.mrb[0].mxu0
    %v938 = vadd.f32 %v886, %v937
    %v939 = vpop.f32.mrb[0].mxu0
    %v940 = vadd.f32 %v890, %v939
    %v941 = vpop.f32.mrb[0].mxu0
    %v942 = vpop.f32.mrb[0].mxu0
    %943 = vdwg.mxu0
    %944 = vmatprep.subr.bf16.mxu0 %v431
    %945 = vmatpush1.bf16.msra.mxu0 %v430
    %946 = vmatprep.subr.bf16.mxu0 %v435
    %947 = vmatpush1.bf16.msra.mxu0 %v434
    %948 = vmatprep.subr.bf16.mxu0 %v439
    %949 = vmatpush1.bf16.msra.mxu0 %v438
    %950 = vmatprep.subr.bf16.mxu0 %v443
    %951 = vmatpush1.bf16.msra.mxu0 %v442
    %952 = vmatprep.subr.bf16.mxu0 %v447
    %953 = vmatpush1.bf16.msra.mxu0 %v446
    %954 = vmatprep.subr.bf16.mxu0 %v451
    %955 = vmatpush1.bf16.msra.mxu0 %v450
    %956 = vmatprep.subr.bf16.mxu0 %v455
    %957 = vmatpush1.bf16.msra.mxu0 %v454
    %958 = vmatprep.subr.bf16.mxu0 %v459
    %959 = vmatpush1.bf16.msra.mxu0 %v458
    %960 = vmatprep.subr.bf16.mxu0 0
    %961 = vmatpush1.bf16.msra.mxu0 0
    %962 = vmatprep.subr.bf16.mxu0 0
    %963 = vmatpush1.bf16.msra.mxu0 0
    %964 = vmatprep.subr.bf16.mxu0 0
    %965 = vmatpush1.bf16.msra.mxu0 0
    %966 = vmatprep.subr.bf16.mxu0 0
    %967 = vmatpush1.bf16.msra.mxu0 0
    %968 = vmatprep.subr.bf16.mxu0 0
    %969 = vmatpush1.bf16.msra.mxu0 0
    %970 = vmatprep.subr.bf16.mxu0 0
    %971 = vmatpush1.bf16.msra.mxu0 0
    %972 = vmatprep.subr.bf16.mxu0 0
    %973 = vmatpush1.bf16.msra.mxu0 0
    %974 = vmatprep.subr.bf16.mxu0 0
    %975 = vmatpush1.bf16.msra.mxu0 0
    %976 = vmatprep.mubr.bf16.mxu0 0
    %977 = vmatmul.mubr.bf16.gmra.mrb[0].mxu0 %v879
    %v978 = vpop.f32.mrb[0].mxu0
    %v979 = vadd.f32 %v894, %v978
    %v980 = vpop.f32.mrb[0].mxu0
    %v981 = vadd.f32 %v898, %v980
    %v982 = vpop.f32.mrb[0].mxu0
    %v983 = vpop.f32.mrb[0].mxu0
    %984 = vdwg.mxu0
    %v985 = vxor.u32 %v938, 2147483648
    %v986 = vxor.u32 %v940, 2147483648
    %v987 = vmul.f32 %v985, 1.442695
    %v988 = vpow.pop %v987
    %v989 = vmul.f32 %v986, 1.442695
    %v990 = vpow.pop %v989
    %v991 = vadd.f32 %v988, 1.0
    %v992 = vadd.f32 %v990, 1.0
    %v993 = vrcp.pop %v991
    %v994 = vmul.f32 1.0, %v993
    %v995 = vrcp.pop %v992
    %v996 = vmul.f32 1.0, %v995
    %v997 = vtanh.pop %v979
    %v998 = vxor.u32 %v981, 2147483648
    %v999 = vmul.f32 %v998, 1.442695
    %v1000 = vpow.pop %v999
    %v1001 = vadd.f32 %v1000, 1.0
    %v1002 = vrcp.pop %v1001
    %v1003 = vmul.f32 1.0, %v1002
    %v1004 = vmul.f32 %v996, %v876
    %v1005 = vmul.f32 %v994, %v997
    %v1006 = vadd.f32 %v1004, %v1005
    %v1007 = vtanh.pop %v1006
    %v1008 = vmul.f32 %v1003, %v1007
    %v1009 = vpack.c.bf16 %v1008, %v1008
    %s1010 = scalar_lea.vmem [#allocation2], 4
    %v1011 = vld [vmem:[%s1010] ss:$8 sm:$0xf]
    %v1013 = vlaneseq
    %v1014 = vshrl.u32 %v1013, 7
    %v1015 = vsub.s32 0, %v1014
    %v1016 = vrot.slane %v1011, %v1015
    %v1017 = vlaneseq
    %v1018 = vshrl.u32 %v1017, 7
    %v1019 = vsub.s32 1, %v1018
    %v1020 = vrot.slane %v1011, %v1019
    %v1021 = vlaneseq
    %v1022 = vshrl.u32 %v1021, 7
    %v1023 = vsub.s32 2, %v1022
    %v1024 = vrot.slane %v1011, %v1023
    %v1025 = vlaneseq
    %v1026 = vshrl.u32 %v1025, 7
    %v1027 = vsub.s32 3, %v1026
    %v1028 = vrot.slane %v1011, %v1027
    %1033 = vmatprep.subr.bf16.mxu0 %v429
    %1034 = vmatpush1.bf16.msra.mxu0 %v428
    %1035 = vmatprep.subr.bf16.mxu0 %v433
    %1036 = vmatpush1.bf16.msra.mxu0 %v432
    %1037 = vmatprep.subr.bf16.mxu0 %v437
    %1038 = vmatpush1.bf16.msra.mxu0 %v436
    %1039 = vmatprep.subr.bf16.mxu0 %v441
    %1040 = vmatpush1.bf16.msra.mxu0 %v440
    %1041 = vmatprep.subr.bf16.mxu0 %v445
    %1042 = vmatpush1.bf16.msra.mxu0 %v444
    %1043 = vmatprep.subr.bf16.mxu0 %v449
    %1044 = vmatpush1.bf16.msra.mxu0 %v448
    %1045 = vmatprep.subr.bf16.mxu0 %v453
    %1046 = vmatpush1.bf16.msra.mxu0 %v452
    %1047 = vmatprep.subr.bf16.mxu0 %v457
    %1048 = vmatpush1.bf16.msra.mxu0 %v456
    %1049 = vmatprep.subr.bf16.mxu0 0
    %1050 = vmatpush1.bf16.msra.mxu0 0
    %1051 = vmatprep.subr.bf16.mxu0 0
    %1052 = vmatpush1.bf16.msra.mxu0 0
    %1053 = vmatprep.subr.bf16.mxu0 0
    %1054 = vmatpush1.bf16.msra.mxu0 0
    %1055 = vmatprep.subr.bf16.mxu0 0
    %1056 = vmatpush1.bf16.msra.mxu0 0
    %1057 = vmatprep.subr.bf16.mxu0 0
    %1058 = vmatpush1.bf16.msra.mxu0 0
    %1059 = vmatprep.subr.bf16.mxu0 0
    %1060 = vmatpush1.bf16.msra.mxu0 0
    %1061 = vmatprep.subr.bf16.mxu0 0
    %1062 = vmatpush1.bf16.msra.mxu0 0
    %1063 = vmatprep.subr.bf16.mxu0 0
    %1064 = vmatpush1.bf16.msra.mxu0 0
    %1065 = vmatprep.mubr.bf16.mxu0 0
    %1066 = vmatmul.mubr.bf16.gmra.mrb[0].mxu0 %v1009
    %v1067 = vpop.f32.mrb[0].mxu0
    %v1068 = vadd.f32 %v1016, %v1067
    %v1069 = vpop.f32.mrb[0].mxu0
    %v1070 = vadd.f32 %v1020, %v1069
    %v1071 = vpop.f32.mrb[0].mxu0
    %v1072 = vpop.f32.mrb[0].mxu0
    %1073 = vdwg.mxu0
    %1074 = vmatprep.subr.bf16.mxu0 %v431
    %1075 = vmatpush1.bf16.msra.mxu0 %v430
    %1076 = vmatprep.subr.bf16.mxu0 %v435
    %1077 = vmatpush1.bf16.msra.mxu0 %v434
    %1078 = vmatprep.subr.bf16.mxu0 %v439
    %1079 = vmatpush1.bf16.msra.mxu0 %v438
    %1080 = vmatprep.subr.bf16.mxu0 %v443
    %1081 = vmatpush1.bf16.msra.mxu0 %v442
    %1082 = vmatprep.subr.bf16.mxu0 %v447
    %1083 = vmatpush1.bf16.msra.mxu0 %v446
    %1084 = vmatprep.subr.bf16.mxu0 %v451
    %1085 = vmatpush1.bf16.msra.mxu0 %v450
    %1086 = vmatprep.subr.bf16.mxu0 %v455
    %1087 = vmatpush1.bf16.msra.mxu0 %v454
    %1088 = vmatprep.subr.bf16.mxu0 %v459
    %1089 = vmatpush1.bf16.msra.mxu0 %v458
    %1090 = vmatprep.subr.bf16.mxu0 0
    %1091 = vmatpush1.bf16.msra.mxu0 0
    %1092 = vmatprep.subr.bf16.mxu0 0
    %1093 = vmatpush1.bf16.msra.mxu0 0
    %1094 = vmatprep.subr.bf16.mxu0 0
    %1095 = vmatpush1.bf16.msra.mxu0 0
    %1096 = vmatprep.subr.bf16.mxu0 0
    %1097 = vmatpush1.bf16.msra.mxu0 0
    %1098 = vmatprep.subr.bf16.mxu0 0
    %1099 = vmatpush1.bf16.msra.mxu0 0
    %1100 = vmatprep.subr.bf16.mxu0 0
    %1101 = vmatpush1.bf16.msra.mxu0 0
    %1102 = vmatprep.subr.bf16.mxu0 0
    %1103 = vmatpush1.bf16.msra.mxu0 0
    %1104 = vmatprep.subr.bf16.mxu0 0
    %1105 = vmatpush1.bf16.msra.mxu0 0
    %1106 = vmatprep.mubr.bf16.mxu0 0
    %1107 = vmatmul.mubr.bf16.gmra.mrb[0].mxu0 %v1009
    %v1108 = vpop.f32.mrb[0].mxu0
    %v1109 = vadd.f32 %v1024, %v1108
    %v1110 = vpop.f32.mrb[0].mxu0
    %v1111 = vadd.f32 %v1028, %v1110
    %v1112 = vpop.f32.mrb[0].mxu0
    %v1113 = vpop.f32.mrb[0].mxu0
    %1114 = vdwg.mxu0
    %v1115 = vxor.u32 %v1068, 2147483648
    %v1116 = vxor.u32 %v1070, 2147483648
    %v1117 = vmul.f32 %v1115, 1.442695
    %v1118 = vpow.pop %v1117
    %v1119 = vmul.f32 %v1116, 1.442695
    %v1120 = vpow.pop %v1119
    %v1121 = vadd.f32 %v1118, 1.0
    %v1122 = vadd.f32 %v1120, 1.0
    %v1123 = vrcp.pop %v1121
    %v1124 = vmul.f32 1.0, %v1123
    %v1125 = vrcp.pop %v1122
    %v1126 = vmul.f32 1.0, %v1125
    %v1127 = vtanh.pop %v1109
    %v1128 = vxor.u32 %v1111, 2147483648
    %v1129 = vmul.f32 %v1128, 1.442695
    %v1130 = vpow.pop %v1129
    %v1131 = vadd.f32 %v1130, 1.0
    %v1132 = vrcp.pop %v1131
    %v1133 = vmul.f32 1.0, %v1132
    %v1134 = vmul.f32 %v1126, %v1006
    %v1135 = vmul.f32 %v1124, %v1127
    %v1136 = vadd.f32 %v1134, %v1135
    %v1137 = vtanh.pop %v1136
    %v1138 = vmul.f32 %v1133, %v1137
    %v1139 = vpack.c.bf16 %v1138, %v1138
    %s1140 = scalar_lea.vmem [#allocation2], 5
    %v1141 = vld [vmem:[%s1140] ss:$8 sm:$0xf]
    %v1143 = vlaneseq
    %v1144 = vshrl.u32 %v1143, 7
    %v1145 = vsub.s32 0, %v1144
    %v1146 = vrot.slane %v1141, %v1145
    %v1147 = vlaneseq
    %v1148 = vshrl.u32 %v1147, 7
    %v1149 = vsub.s32 1, %v1148
    %v1150 = vrot.slane %v1141, %v1149
    %v1151 = vlaneseq
    %v1152 = vshrl.u32 %v1151, 7
    %v1153 = vsub.s32 2, %v1152
    %v1154 = vrot.slane %v1141, %v1153
    %v1155 = vlaneseq
    %v1156 = vshrl.u32 %v1155, 7
    %v1157 = vsub.s32 3, %v1156
    %v1158 = vrot.slane %v1141, %v1157
    %1163 = vmatprep.subr.bf16.mxu0 %v429
    %1164 = vmatpush1.bf16.msra.mxu0 %v428
    %1165 = vmatprep.subr.bf16.mxu0 %v433
    %1166 = vmatpush1.bf16.msra.mxu0 %v432
    %1167 = vmatprep.subr.bf16.mxu0 %v437
    %1168 = vmatpush1.bf16.msra.mxu0 %v436
    %1169 = vmatprep.subr.bf16.mxu0 %v441
    %1170 = vmatpush1.bf16.msra.mxu0 %v440
    %1171 = vmatprep.subr.bf16.mxu0 %v445
    %1172 = vmatpush1.bf16.msra.mxu0 %v444
    %1173 = vmatprep.subr.bf16.mxu0 %v449
    %1174 = vmatpush1.bf16.msra.mxu0 %v448
    %1175 = vmatprep.subr.bf16.mxu0 %v453
    %1176 = vmatpush1.bf16.msra.mxu0 %v452
    %1177 = vmatprep.subr.bf16.mxu0 %v457
    %1178 = vmatpush1.bf16.msra.mxu0 %v456
    %1179 = vmatprep.subr.bf16.mxu0 0
    %1180 = vmatpush1.bf16.msra.mxu0 0
    %1181 = vmatprep.subr.bf16.mxu0 0
    %1182 = vmatpush1.bf16.msra.mxu0 0
    %1183 = vmatprep.subr.bf16.mxu0 0
    %1184 = vmatpush1.bf16.msra.mxu0 0
    %1185 = vmatprep.subr.bf16.mxu0 0
    %1186 = vmatpush1.bf16.msra.mxu0 0
    %1187 = vmatprep.subr.bf16.mxu0 0
    %1188 = vmatpush1.bf16.msra.mxu0 0
    %1189 = vmatprep.subr.bf16.mxu0 0
    %1190 = vmatpush1.bf16.msra.mxu0 0
    %1191 = vmatprep.subr.bf16.mxu0 0
    %1192 = vmatpush1.bf16.msra.mxu0 0
    %1193 = vmatprep.subr.bf16.mxu0 0
    %1194 = vmatpush1.bf16.msra.mxu0 0
    %1195 = vmatprep.mubr.bf16.mxu0 0
    %1196 = vmatmul.mubr.bf16.gmra.mrb[0].mxu0 %v1139
    %v1197 = vpop.f32.mrb[0].mxu0
    %v1198 = vadd.f32 %v1146, %v1197
    %v1199 = vpop.f32.mrb[0].mxu0
    %v1200 = vadd.f32 %v1150, %v1199
    %v1201 = vpop.f32.mrb[0].mxu0
    %v1202 = vpop.f32.mrb[0].mxu0
    %1203 = vdwg.mxu0
    %1204 = vmatprep.subr.bf16.mxu0 %v431
    %1205 = vmatpush1.bf16.msra.mxu0 %v430
    %1206 = vmatprep.subr.bf16.mxu0 %v435
    %1207 = vmatpush1.bf16.msra.mxu0 %v434
    %1208 = vmatprep.subr.bf16.mxu0 %v439
    %1209 = vmatpush1.bf16.msra.mxu0 %v438
    %1210 = vmatprep.subr.bf16.mxu0 %v443
    %1211 = vmatpush1.bf16.msra.mxu0 %v442
    %1212 = vmatprep.subr.bf16.mxu0 %v447
    %1213 = vmatpush1.bf16.msra.mxu0 %v446
    %1214 = vmatprep.subr.bf16.mxu0 %v451
    %1215 = vmatpush1.bf16.msra.mxu0 %v450
    %1216 = vmatprep.subr.bf16.mxu0 %v455
    %1217 = vmatpush1.bf16.msra.mxu0 %v454
    %1218 = vmatprep.subr.bf16.mxu0 %v459
    %1219 = vmatpush1.bf16.msra.mxu0 %v458
    %1220 = vmatprep.subr.bf16.mxu0 0
    %1221 = vmatpush1.bf16.msra.mxu0 0
    %1222 = vmatprep.subr.bf16.mxu0 0
    %1223 = vmatpush1.bf16.msra.mxu0 0
    %1224 = vmatprep.subr.bf16.mxu0 0
    %1225 = vmatpush1.bf16.msra.mxu0 0
    %1226 = vmatprep.subr.bf16.mxu0 0
    %1227 = vmatpush1.bf16.msra.mxu0 0
    %1228 = vmatprep.subr.bf16.mxu0 0
    %1229 = vmatpush1.bf16.msra.mxu0 0
    %1230 = vmatprep.subr.bf16.mxu0 0
    %1231 = vmatpush1.bf16.msra.mxu0 0
    %1232 = vmatprep.subr.bf16.mxu0 0
    %1233 = vmatpush1.bf16.msra.mxu0 0
    %1234 = vmatprep.subr.bf16.mxu0 0
    %1235 = vmatpush1.bf16.msra.mxu0 0
    %1236 = vmatprep.mubr.bf16.mxu0 0
    %1237 = vmatmul.mubr.bf16.gmra.mrb[0].mxu0 %v1139
    %v1238 = vpop.f32.mrb[0].mxu0
    %v1239 = vadd.f32 %v1154, %v1238
    %v1240 = vpop.f32.mrb[0].mxu0
    %v1241 = vadd.f32 %v1158, %v1240
    %v1242 = vpop.f32.mrb[0].mxu0
    %v1243 = vpop.f32.mrb[0].mxu0
    %1244 = vdwg.mxu0
    %v1245 = vxor.u32 %v1198, 2147483648
    %v1246 = vxor.u32 %v1200, 2147483648
    %v1247 = vmul.f32 %v1245, 1.442695
    %v1248 = vpow.pop %v1247
    %v1249 = vmul.f32 %v1246, 1.442695
    %v1250 = vpow.pop %v1249
    %v1251 = vadd.f32 %v1248, 1.0
    %v1252 = vadd.f32 %v1250, 1.0
    %v1253 = vrcp.pop %v1251
    %v1254 = vmul.f32 1.0, %v1253
    %v1255 = vrcp.pop %v1252
    %v1256 = vmul.f32 1.0, %v1255
    %v1257 = vtanh.pop %v1239
    %v1258 = vxor.u32 %v1241, 2147483648
    %v1259 = vmul.f32 %v1258, 1.442695
    %v1260 = vpow.pop %v1259
    %v1261 = vadd.f32 %v1260, 1.0
    %v1262 = vrcp.pop %v1261
    %v1263 = vmul.f32 1.0, %v1262
    %v1264 = vmul.f32 %v1256, %v1136
    %v1265 = vmul.f32 %v1254, %v1257
    %v1266 = vadd.f32 %v1264, %v1265
    %v1267 = vtanh.pop %v1266
    %v1268 = vmul.f32 %v1263, %v1267
    %v1269 = vpack.c.bf16 %v1268, %v1268
    %s1270 = scalar_lea.vmem [#allocation2], 6
    %v1271 = vld [vmem:[%s1270] ss:$8 sm:$0xf]
    %v1273 = vlaneseq
    %v1274 = vshrl.u32 %v1273, 7
    %v1275 = vsub.s32 0, %v1274
    %v1276 = vrot.slane %v1271, %v1275
    %v1277 = vlaneseq
    %v1278 = vshrl.u32 %v1277, 7
    %v1279 = vsub.s32 1, %v1278
    %v1280 = vrot.slane %v1271, %v1279
    %v1281 = vlaneseq
    %v1282 = vshrl.u32 %v1281, 7
    %v1283 = vsub.s32 2, %v1282
    %v1284 = vrot.slane %v1271, %v1283
    %v1285 = vlaneseq
    %v1286 = vshrl.u32 %v1285, 7
    %v1287 = vsub.s32 3, %v1286
    %v1288 = vrot.slane %v1271, %v1287
    %1293 = vmatprep.subr.bf16.mxu0 %v429
    %1294 = vmatpush1.bf16.msra.mxu0 %v428
    %1295 = vmatprep.subr.bf16.mxu0 %v433
    %1296 = vmatpush1.bf16.msra.mxu0 %v432
    %1297 = vmatprep.subr.bf16.mxu0 %v437
    %1298 = vmatpush1.bf16.msra.mxu0 %v436
    %1299 = vmatprep.subr.bf16.mxu0 %v441
    %1300 = vmatpush1.bf16.msra.mxu0 %v440
    %1301 = vmatprep.subr.bf16.mxu0 %v445
    %1302 = vmatpush1.bf16.msra.mxu0 %v444
    %1303 = vmatprep.subr.bf16.mxu0 %v449
    %1304 = vmatpush1.bf16.msra.mxu0 %v448
    %1305 = vmatprep.subr.bf16.mxu0 %v453
    %1306 = vmatpush1.bf16.msra.mxu0 %v452
    %1307 = vmatprep.subr.bf16.mxu0 %v457
    %1308 = vmatpush1.bf16.msra.mxu0 %v456
    %1309 = vmatprep.subr.bf16.mxu0 0
    %1310 = vmatpush1.bf16.msra.mxu0 0
    %1311 = vmatprep.subr.bf16.mxu0 0
    %1312 = vmatpush1.bf16.msra.mxu0 0
    %1313 = vmatprep.subr.bf16.mxu0 0
    %1314 = vmatpush1.bf16.msra.mxu0 0
    %1315 = vmatprep.subr.bf16.mxu0 0
    %1316 = vmatpush1.bf16.msra.mxu0 0
    %1317 = vmatprep.subr.bf16.mxu0 0
    %1318 = vmatpush1.bf16.msra.mxu0 0
    %1319 = vmatprep.subr.bf16.mxu0 0
    %1320 = vmatpush1.bf16.msra.mxu0 0
    %1321 = vmatprep.subr.bf16.mxu0 0
    %1322 = vmatpush1.bf16.msra.mxu0 0
    %1323 = vmatprep.subr.bf16.mxu0 0
    %1324 = vmatpush1.bf16.msra.mxu0 0
    %1325 = vmatprep.mubr.bf16.mxu0 0
    %1326 = vmatmul.mubr.bf16.gmra.mrb[0].mxu0 %v1269
    %v1327 = vpop.f32.mrb[0].mxu0
    %v1328 = vadd.f32 %v1276, %v1327
    %v1329 = vpop.f32.mrb[0].mxu0
    %v1330 = vadd.f32 %v1280, %v1329
    %v1331 = vpop.f32.mrb[0].mxu0
    %v1332 = vpop.f32.mrb[0].mxu0
    %1333 = vdwg.mxu0
    %1334 = vmatprep.subr.bf16.mxu0 %v431
    %1335 = vmatpush1.bf16.msra.mxu0 %v430
    %1336 = vmatprep.subr.bf16.mxu0 %v435
    %1337 = vmatpush1.bf16.msra.mxu0 %v434
    %1338 = vmatprep.subr.bf16.mxu0 %v439
    %1339 = vmatpush1.bf16.msra.mxu0 %v438
    %1340 = vmatprep.subr.bf16.mxu0 %v443
    %1341 = vmatpush1.bf16.msra.mxu0 %v442
    %1342 = vmatprep.subr.bf16.mxu0 %v447
    %1343 = vmatpush1.bf16.msra.mxu0 %v446
    %1344 = vmatprep.subr.bf16.mxu0 %v451
    %1345 = vmatpush1.bf16.msra.mxu0 %v450
    %1346 = vmatprep.subr.bf16.mxu0 %v455
    %1347 = vmatpush1.bf16.msra.mxu0 %v454
    %1348 = vmatprep.subr.bf16.mxu0 %v459
    %1349 = vmatpush1.bf16.msra.mxu0 %v458
    %1350 = vmatprep.subr.bf16.mxu0 0
    %1351 = vmatpush1.bf16.msra.mxu0 0
    %1352 = vmatprep.subr.bf16.mxu0 0
    %1353 = vmatpush1.bf16.msra.mxu0 0
    %1354 = vmatprep.subr.bf16.mxu0 0
    %1355 = vmatpush1.bf16.msra.mxu0 0
    %1356 = vmatprep.subr.bf16.mxu0 0
    %1357 = vmatpush1.bf16.msra.mxu0 0
    %1358 = vmatprep.subr.bf16.mxu0 0
    %1359 = vmatpush1.bf16.msra.mxu0 0
    %1360 = vmatprep.subr.bf16.mxu0 0
    %1361 = vmatpush1.bf16.msra.mxu0 0
    %1362 = vmatprep.subr.bf16.mxu0 0
    %1363 = vmatpush1.bf16.msra.mxu0 0
    %1364 = vmatprep.subr.bf16.mxu0 0
    %1365 = vmatpush1.bf16.msra.mxu0 0
    %1366 = vmatprep.mubr.bf16.mxu0 0
    %1367 = vmatmul.mubr.bf16.gmra.mrb[0].mxu0 %v1269
    %v1368 = vpop.f32.mrb[0].mxu0
    %v1369 = vadd.f32 %v1284, %v1368
    %v1370 = vpop.f32.mrb[0].mxu0
    %v1371 = vadd.f32 %v1288, %v1370
    %v1372 = vpop.f32.mrb[0].mxu0
    %v1373 = vpop.f32.mrb[0].mxu0
    %1374 = vdwg.mxu0
    %v1375 = vxor.u32 %v1328, 2147483648
    %v1376 = vxor.u32 %v1330, 2147483648
    %v1377 = vmul.f32 %v1375, 1.442695
    %v1378 = vpow.pop %v1377
    %v1379 = vmul.f32 %v1376, 1.442695
    %v1380 = vpow.pop %v1379
    %v1381 = vadd.f32 %v1378, 1.0
    %v1382 = vadd.f32 %v1380, 1.0
    %v1383 = vrcp.pop %v1381
    %v1384 = vmul.f32 1.0, %v1383
    %v1385 = vrcp.pop %v1382
    %v1386 = vmul.f32 1.0, %v1385
    %v1387 = vtanh.pop %v1369
    %v1388 = vxor.u32 %v1371, 2147483648
    %v1389 = vmul.f32 %v1388, 1.442695
    %v1390 = vpow.pop %v1389
    %v1391 = vadd.f32 %v1390, 1.0
    %v1392 = vrcp.pop %v1391
    %v1393 = vmul.f32 1.0, %v1392
    %v1394 = vmul.f32 %v1386, %v1266
    %v1395 = vmul.f32 %v1384, %v1387
    %v1396 = vadd.f32 %v1394, %v1395
    %v1397 = vtanh.pop %v1396
    %v1398 = vmul.f32 %v1393, %v1397
    %v1399 = vpack.c.bf16 %v1398, %v1398
    %s1400 = scalar_lea.vmem [#allocation2], 7
    %v1401 = vld [vmem:[%s1400] ss:$8 sm:$0xf]
    %v1403 = vlaneseq
    %v1404 = vshrl.u32 %v1403, 7
    %v1405 = vsub.s32 0, %v1404
    %v1406 = vrot.slane %v1401, %v1405
    %v1407 = vlaneseq
    %v1408 = vshrl.u32 %v1407, 7
    %v1409 = vsub.s32 1, %v1408
    %v1410 = vrot.slane %v1401, %v1409
    %v1411 = vlaneseq
    %v1412 = vshrl.u32 %v1411, 7
    %v1413 = vsub.s32 2, %v1412
    %v1414 = vrot.slane %v1401, %v1413
    %v1415 = vlaneseq
    %v1416 = vshrl.u32 %v1415, 7
    %v1417 = vsub.s32 3, %v1416
    %v1418 = vrot.slane %v1401, %v1417
    %1423 = vmatprep.subr.bf16.mxu0 %v429
    %1424 = vmatpush1.bf16.msra.mxu0 %v428
    %1425 = vmatprep.subr.bf16.mxu0 %v433
    %1426 = vmatpush1.bf16.msra.mxu0 %v432
    %1427 = vmatprep.subr.bf16.mxu0 %v437
    %1428 = vmatpush1.bf16.msra.mxu0 %v436
    %1429 = vmatprep.subr.bf16.mxu0 %v441
    %1430 = vmatpush1.bf16.msra.mxu0 %v440
    %1431 = vmatprep.subr.bf16.mxu0 %v445
    %1432 = vmatpush1.bf16.msra.mxu0 %v444
    %1433 = vmatprep.subr.bf16.mxu0 %v449
    %1434 = vmatpush1.bf16.msra.mxu0 %v448
    %1435 = vmatprep.subr.bf16.mxu0 %v453
    %1436 = vmatpush1.bf16.msra.mxu0 %v452
    %1437 = vmatprep.subr.bf16.mxu0 %v457
    %1438 = vmatpush1.bf16.msra.mxu0 %v456
    %1439 = vmatprep.subr.bf16.mxu0 0
    %1440 = vmatpush1.bf16.msra.mxu0 0
    %1441 = vmatprep.subr.bf16.mxu0 0
    %1442 = vmatpush1.bf16.msra.mxu0 0
    %1443 = vmatprep.subr.bf16.mxu0 0
    %1444 = vmatpush1.bf16.msra.mxu0 0
    %1445 = vmatprep.subr.bf16.mxu0 0
    %1446 = vmatpush1.bf16.msra.mxu0 0
    %1447 = vmatprep.subr.bf16.mxu0 0
    %1448 = vmatpush1.bf16.msra.mxu0 0
    %1449 = vmatprep.subr.bf16.mxu0 0
    %1450 = vmatpush1.bf16.msra.mxu0 0
    %1451 = vmatprep.subr.bf16.mxu0 0
    %1452 = vmatpush1.bf16.msra.mxu0 0
    %1453 = vmatprep.subr.bf16.mxu0 0
    %1454 = vmatpush1.bf16.msra.mxu0 0
    %1455 = vmatprep.mubr.bf16.mxu0 0
    %1456 = vmatmul.mubr.bf16.gmra.mrb[0].mxu0 %v1399
    %v1457 = vpop.f32.mrb[0].mxu0
    %v1458 = vadd.f32 %v1406, %v1457
    %v1459 = vpop.f32.mrb[0].mxu0
    %v1460 = vadd.f32 %v1410, %v1459
    %v1461 = vpop.f32.mrb[0].mxu0
    %v1462 = vpop.f32.mrb[0].mxu0
    %1463 = vdwg.mxu0
    %1464 = vmatprep.subr.bf16.mxu0 %v431
    %1465 = vmatpush1.bf16.msra.mxu0 %v430
    %1466 = vmatprep.subr.bf16.mxu0 %v435
    %1467 = vmatpush1.bf16.msra.mxu0 %v434
    %1468 = vmatprep.subr.bf16.mxu0 %v439
    %1469 = vmatpush1.bf16.msra.mxu0 %v438
    %1470 = vmatprep.subr.bf16.mxu0 %v443
    %1471 = vmatpush1.bf16.msra.mxu0 %v442
    %1472 = vmatprep.subr.bf16.mxu0 %v447
    %1473 = vmatpush1.bf16.msra.mxu0 %v446
    %1474 = vmatprep.subr.bf16.mxu0 %v451
    %1475 = vmatpush1.bf16.msra.mxu0 %v450
    %1476 = vmatprep.subr.bf16.mxu0 %v455
    %1477 = vmatpush1.bf16.msra.mxu0 %v454
    %1478 = vmatprep.subr.bf16.mxu0 %v459
    %1479 = vmatpush1.bf16.msra.mxu0 %v458
    %1480 = vmatprep.subr.bf16.mxu0 0
    %1481 = vmatpush1.bf16.msra.mxu0 0
    %1482 = vmatprep.subr.bf16.mxu0 0
    %1483 = vmatpush1.bf16.msra.mxu0 0
    %1484 = vmatprep.subr.bf16.mxu0 0
    %1485 = vmatpush1.bf16.msra.mxu0 0
    %1486 = vmatprep.subr.bf16.mxu0 0
    %1487 = vmatpush1.bf16.msra.mxu0 0
    %1488 = vmatprep.subr.bf16.mxu0 0
    %1489 = vmatpush1.bf16.msra.mxu0 0
    %1490 = vmatprep.subr.bf16.mxu0 0
    %1491 = vmatpush1.bf16.msra.mxu0 0
    %1492 = vmatprep.subr.bf16.mxu0 0
    %1493 = vmatpush1.bf16.msra.mxu0 0
    %1494 = vmatprep.subr.bf16.mxu0 0
    %1495 = vmatpush1.bf16.msra.mxu0 0
    %1496 = vmatprep.mubr.bf16.mxu0 0
    %1497 = vmatmul.mubr.bf16.gmra.mrb[0].mxu0 %v1399
    %v1498 = vpop.f32.mrb[0].mxu0
    %v1499 = vadd.f32 %v1414, %v1498
    %v1500 = vpop.f32.mrb[0].mxu0
    %v1501 = vadd.f32 %v1418, %v1500
    %v1502 = vpop.f32.mrb[0].mxu0
    %v1503 = vpop.f32.mrb[0].mxu0
    %1504 = vdwg.mxu0
    %v1505 = vxor.u32 %v1458, 2147483648
    %v1506 = vxor.u32 %v1460, 2147483648
    %v1507 = vmul.f32 %v1505, 1.442695
    %v1508 = vpow.pop %v1507
    %v1509 = vmul.f32 %v1506, 1.442695
    %v1510 = vpow.pop %v1509
    %v1511 = vadd.f32 %v1508, 1.0
    %v1512 = vadd.f32 %v1510, 1.0
    %v1513 = vrcp.pop %v1511
    %v1514 = vmul.f32 1.0, %v1513
    %v1515 = vrcp.pop %v1512
    %v1516 = vmul.f32 1.0, %v1515
    %v1517 = vtanh.pop %v1499
    %v1518 = vxor.u32 %v1501, 2147483648
    %v1519 = vmul.f32 %v1518, 1.442695
    %v1520 = vpow.pop %v1519
    %v1521 = vadd.f32 %v1520, 1.0
    %v1522 = vrcp.pop %v1521
    %v1523 = vmul.f32 1.0, %v1522
    %v1524 = vmul.f32 %v1516, %v1396
    %v1525 = vmul.f32 %v1514, %v1517
    %v1526 = vadd.f32 %v1524, %v1525
    %v1527 = vtanh.pop %v1526
    %v1528 = vmul.f32 %v1523, %v1527
    %1529 = vst [vmem:[#allocation3] sm:$0x1] %v1528
    %v1530 = vpack.c.bf16 %v1528, %v1528
    %v1531 = vld [vmem:[#allocation9] sm:$0xff]
    %v1532 = vld [vmem:[#allocation9 + $0x8] sm:$0xff]
    %v1533 = vld [vmem:[#allocation9 + $0x10] sm:$0xff]
    %v1534 = vld [vmem:[#allocation9 + $0x18] sm:$0xff]
    %v1535 = vld [vmem:[#allocation9 + $0x20] sm:$0xff]
    %v1536 = vld [vmem:[#allocation9 + $0x28] sm:$0xff]
    %v1537 = vld [vmem:[#allocation9 + $0x30] sm:$0xff]
    %v1538 = vld [vmem:[#allocation9 + $0x38] sm:$0xff]
    %v1539 = vld [vmem:[#allocation9 + $0x40] sm:$0xff]
    %v1540 = vld [vmem:[#allocation9 + $0x48] sm:$0xff]
    %v1541 = vld [vmem:[#allocation9 + $0x50] sm:$0xff]
    %v1542 = vld [vmem:[#allocation9 + $0x58] sm:$0xff]
    %v1543 = vld [vmem:[#allocation9 + $0x60] sm:$0xff]
    %v1544 = vld [vmem:[#allocation9 + $0x68] sm:$0xff]
    %v1545 = vld [vmem:[#allocation9 + $0x70] sm:$0xff]
    %v1546 = vld [vmem:[#allocation9 + $0x78] sm:$0xff]
    %v1547 = vld [vmem:[#allocation9 + $0x80] sm:$0xff]
    %v1548 = vld [vmem:[#allocation9 + $0x88] sm:$0xff]
    %v1549 = vld [vmem:[#allocation9 + $0x90] sm:$0xff]
    %v1550 = vld [vmem:[#allocation9 + $0x98] sm:$0xff]
    %v1551 = vld [vmem:[#allocation9 + $0xa0] sm:$0xff]
    %v1552 = vld [vmem:[#allocation9 + $0xa8] sm:$0xff]
    %v1553 = vld [vmem:[#allocation9 + $0xb0] sm:$0xff]
    %v1554 = vld [vmem:[#allocation9 + $0xb8] sm:$0xff]
    %v1555 = vld [vmem:[#allocation9 + $0xc0] sm:$0xff]
    %v1556 = vld [vmem:[#allocation9 + $0xc8] sm:$0xff]
    %v1557 = vld [vmem:[#allocation9 + $0xd0] sm:$0xff]
    %v1558 = vld [vmem:[#allocation9 + $0xd8] sm:$0xff]
    %v1559 = vld [vmem:[#allocation9 + $0xe0] sm:$0xff]
    %v1560 = vld [vmem:[#allocation9 + $0xe8] sm:$0xff]
    %v1561 = vld [vmem:[#allocation9 + $0xf0] sm:$0xff]
    %v1562 = vld [vmem:[#allocation9 + $0xf8] sm:$0xff]
    %s1563 = scalar_lea.vmem [#allocation2], 32
    %v1564 = vld [vmem:[%s1563] ss:$8 sm:$0xf]
    %v1597 = vunpack.c.l.b16 %v1531
    %v1598 = vunpack.c.h.b16 %v1531
    %v1599 = vunpack.c.l.b16 %v1532
    %v1600 = vunpack.c.h.b16 %v1532
    %v1601 = vunpack.c.l.b16 %v1533
    %v1602 = vunpack.c.h.b16 %v1533
    %v1603 = vunpack.c.l.b16 %v1534
    %v1604 = vunpack.c.h.b16 %v1534
    %v1605 = vunpack.c.l.b16 %v1535
    %v1606 = vunpack.c.h.b16 %v1535
    %v1607 = vunpack.c.l.b16 %v1536
    %v1608 = vunpack.c.h.b16 %v1536
    %v1609 = vunpack.c.l.b16 %v1537
    %v1610 = vunpack.c.h.b16 %v1537
    %v1611 = vunpack.c.l.b16 %v1538
    %v1612 = vunpack.c.h.b16 %v1538
    %v1613 = vunpack.c.l.b16 %v1539
    %v1614 = vunpack.c.h.b16 %v1539
    %v1615 = vunpack.c.l.b16 %v1540
    %v1616 = vunpack.c.h.b16 %v1540
    %v1617 = vunpack.c.l.b16 %v1541
    %v1618 = vunpack.c.h.b16 %v1541
    %v1619 = vunpack.c.l.b16 %v1542
    %v1620 = vunpack.c.h.b16 %v1542
    %v1621 = vunpack.c.l.b16 %v1543
    %v1622 = vunpack.c.h.b16 %v1543
    %v1623 = vunpack.c.l.b16 %v1544
    %v1624 = vunpack.c.h.b16 %v1544
    %v1625 = vunpack.c.l.b16 %v1545
    %v1626 = vunpack.c.h.b16 %v1545
    %v1627 = vunpack.c.l.b16 %v1546
    %v1628 = vunpack.c.h.b16 %v1546
    %v1629 = vunpack.c.l.b16 %v1547
    %v1630 = vunpack.c.h.b16 %v1547
    %v1631 = vunpack.c.l.b16 %v1548
    %v1632 = vunpack.c.h.b16 %v1548
    %v1633 = vunpack.c.l.b16 %v1549
    %v1634 = vunpack.c.h.b16 %v1549
    %v1635 = vunpack.c.l.b16 %v1550
    %v1636 = vunpack.c.h.b16 %v1550
    %v1637 = vunpack.c.l.b16 %v1551
    %v1638 = vunpack.c.h.b16 %v1551
    %v1639 = vunpack.c.l.b16 %v1552
    %v1640 = vunpack.c.h.b16 %v1552
    %v1641 = vunpack.c.l.b16 %v1553
    %v1642 = vunpack.c.h.b16 %v1553
    %v1643 = vunpack.c.l.b16 %v1554
    %v1644 = vunpack.c.h.b16 %v1554
    %v1645 = vunpack.c.l.b16 %v1555
    %v1646 = vunpack.c.h.b16 %v1555
    %v1647 = vunpack.c.l.b16 %v1556
    %v1648 = vunpack.c.h.b16 %v1556
    %v1649 = vunpack.c.l.b16 %v1557
    %v1650 = vunpack.c.h.b16 %v1557
    %v1651 = vunpack.c.l.b16 %v1558
    %v1652 = vunpack.c.h.b16 %v1558
    %v1653 = vunpack.c.l.b16 %v1559
    %v1654 = vunpack.c.h.b16 %v1559
    %v1655 = vunpack.c.l.b16 %v1560
    %v1656 = vunpack.c.h.b16 %v1560
    %v1657 = vunpack.c.l.b16 %v1561
    %v1658 = vunpack.c.h.b16 %v1561
    %v1659 = vunpack.c.l.b16 %v1562
    %v1660 = vunpack.c.h.b16 %v1562
    %v1661 = vpack.c.b16 %v1601, %v1597
    %v1662 = vpack.c.b16 %v1602, %v1598
    %v1663 = vpack.c.b16 %v1603, %v1599
    %v1664 = vpack.c.b16 %v1604, %v1600
    %v1665 = vpack.c.b16 %v1609, %v1605
    %v1666 = vpack.c.b16 %v1610, %v1606
    %v1667 = vpack.c.b16 %v1611, %v1607
    %v1668 = vpack.c.b16 %v1612, %v1608
    %v1669 = vpack.c.b16 %v1617, %v1613
    %v1670 = vpack.c.b16 %v1618, %v1614
    %v1671 = vpack.c.b16 %v1619, %v1615
    %v1672 = vpack.c.b16 %v1620, %v1616
    %v1673 = vpack.c.b16 %v1625, %v1621
    %v1674 = vpack.c.b16 %v1626, %v1622
    %v1675 = vpack.c.b16 %v1627, %v1623
    %v1676 = vpack.c.b16 %v1628, %v1624
    %v1677 = vpack.c.b16 %v1633, %v1629
    %v1678 = vpack.c.b16 %v1634, %v1630
    %v1679 = vpack.c.b16 %v1635, %v1631
    %v1680 = vpack.c.b16 %v1636, %v1632
    %v1681 = vpack.c.b16 %v1641, %v1637
    %v1682 = vpack.c.b16 %v1642, %v1638
    %v1683 = vpack.c.b16 %v1643, %v1639
    %v1684 = vpack.c.b16 %v1644, %v1640
    %v1685 = vpack.c.b16 %v1649, %v1645
    %v1686 = vpack.c.b16 %v1650, %v1646
    %v1687 = vpack.c.b16 %v1651, %v1647
    %v1688 = vpack.c.b16 %v1652, %v1648
    %v1689 = vpack.c.b16 %v1657, %v1653
    %v1690 = vpack.c.b16 %v1658, %v1654
    %v1691 = vpack.c.b16 %v1659, %v1655
    %v1692 = vpack.c.b16 %v1660, %v1656
    %v1726 = vlaneseq
    %v1727 = vshrl.u32 %v1726, 7
    %v1728 = vsub.s32 0, %v1727
    %v1729 = vrot.slane %v1564, %v1728
    %v1730 = vlaneseq
    %v1731 = vshrl.u32 %v1730, 7
    %v1732 = vsub.s32 1, %v1731
    %v1733 = vrot.slane %v1564, %v1732
    %v1734 = vlaneseq
    %v1735 = vshrl.u32 %v1734, 7
    %v1736 = vsub.s32 2, %v1735
    %v1737 = vrot.slane %v1564, %v1736
    %v1738 = vlaneseq
    %v1739 = vshrl.u32 %v1738, 7
    %v1740 = vsub.s32 3, %v1739
    %v1741 = vrot.slane %v1564, %v1740
    %1746 = vmatprep.subr.bf16.mxu0 %v1662
    %1747 = vmatpush1.bf16.msra.mxu0 %v1661
    %1748 = vmatprep.subr.bf16.mxu0 %v1666
    %1749 = vmatpush1.bf16.msra.mxu0 %v1665
    %1750 = vmatprep.subr.bf16.mxu0 %v1670
    %1751 = vmatpush1.bf16.msra.mxu0 %v1669
    %1752 = vmatprep.subr.bf16.mxu0 %v1674
    %1753 = vmatpush1.bf16.msra.mxu0 %v1673
    %1754 = vmatprep.subr.bf16.mxu0 %v1678
    %1755 = vmatpush1.bf16.msra.mxu0 %v1677
    %1756 = vmatprep.subr.bf16.mxu0 %v1682
    %1757 = vmatpush1.bf16.msra.mxu0 %v1681
    %1758 = vmatprep.subr.bf16.mxu0 %v1686
    %1759 = vmatpush1.bf16.msra.mxu0 %v1685
    %1760 = vmatprep.subr.bf16.mxu0 %v1690
    %1761 = vmatpush1.bf16.msra.mxu0 %v1689
    %1762 = vmatprep.subr.bf16.mxu0 0
    %1763 = vmatpush1.bf16.msra.mxu0 0
    %1764 = vmatprep.subr.bf16.mxu0 0
    %1765 = vmatpush1.bf16.msra.mxu0 0
    %1766 = vmatprep.subr.bf16.mxu0 0
    %1767 = vmatpush1.bf16.msra.mxu0 0
    %1768 = vmatprep.subr.bf16.mxu0 0
    %1769 = vmatpush1.bf16.msra.mxu0 0
    %1770 = vmatprep.subr.bf16.mxu0 0
    %1771 = vmatpush1.bf16.msra.mxu0 0
    %1772 = vmatprep.subr.bf16.mxu0 0
    %1773 = vmatpush1.bf16.msra.mxu0 0
    %1774 = vmatprep.subr.bf16.mxu0 0
    %1775 = vmatpush1.bf16.msra.mxu0 0
    %1776 = vmatprep.subr.bf16.mxu0 0
    %1777 = vmatpush1.bf16.msra.mxu0 0
    %1778 = vmatprep.mubr.bf16.mxu0 0
    %1779 = vmatmul.mubr.bf16.gmra.mrb[0].mxu0 %v1530
    %v1780 = vpop.f32.mrb[0].mxu0
    %v1781 = vadd.f32 %v1729, %v1780
    %v1782 = vpop.f32.mrb[0].mxu0
    %v1783 = vadd.f32 %v1733, %v1782
    %v1784 = vpop.f32.mrb[0].mxu0
    %v1785 = vpop.f32.mrb[0].mxu0
    %1786 = vdwg.mxu0
    %1787 = vmatprep.subr.bf16.mxu0 %v1664
    %1788 = vmatpush1.bf16.msra.mxu0 %v1663
    %1789 = vmatprep.subr.bf16.mxu0 %v1668
    %1790 = vmatpush1.bf16.msra.mxu0 %v1667
    %1791 = vmatprep.subr.bf16.mxu0 %v1672
    %1792 = vmatpush1.bf16.msra.mxu0 %v1671
    %1793 = vmatprep.subr.bf16.mxu0 %v1676
    %1794 = vmatpush1.bf16.msra.mxu0 %v1675
    %1795 = vmatprep.subr.bf16.mxu0 %v1680
    %1796 = vmatpush1.bf16.msra.mxu0 %v1679
    %1797 = vmatprep.subr.bf16.mxu0 %v1684
    %1798 = vmatpush1.bf16.msra.mxu0 %v1683
    %1799 = vmatprep.subr.bf16.mxu0 %v1688
    %1800 = vmatpush1.bf16.msra.mxu0 %v1687
    %1801 = vmatprep.subr.bf16.mxu0 %v1692
    %1802 = vmatpush1.bf16.msra.mxu0 %v1691
    %1803 = vmatprep.subr.bf16.mxu0 0
    %1804 = vmatpush1.bf16.msra.mxu0 0
    %1805 = vmatprep.subr.bf16.mxu0 0
    %1806 = vmatpush1.bf16.msra.mxu0 0
    %1807 = vmatprep.subr.bf16.mxu0 0
    %1808 = vmatpush1.bf16.msra.mxu0 0
    %1809 = vmatprep.subr.bf16.mxu0 0
    %1810 = vmatpush1.bf16.msra.mxu0 0
    %1811 = vmatprep.subr.bf16.mxu0 0
    %1812 = vmatpush1.bf16.msra.mxu0 0
    %1813 = vmatprep.subr.bf16.mxu0 0
    %1814 = vmatpush1.bf16.msra.mxu0 0
    %1815 = vmatprep.subr.bf16.mxu0 0
    %1816 = vmatpush1.bf16.msra.mxu0 0
    %1817 = vmatprep.subr.bf16.mxu0 0
    %1818 = vmatpush1.bf16.msra.mxu0 0
    %1819 = vmatprep.mubr.bf16.mxu0 0
    %1820 = vmatmul.mubr.bf16.gmra.mrb[0].mxu0 %v1530
    %v1821 = vpop.f32.mrb[0].mxu0
    %v1822 = vadd.f32 %v1737, %v1821
    %v1823 = vpop.f32.mrb[0].mxu0
    %v1824 = vadd.f32 %v1741, %v1823
    %v1825 = vpop.f32.mrb[0].mxu0
    %v1826 = vpop.f32.mrb[0].mxu0
    %1827 = vdwg.mxu0
    %v1828 = vxor.u32 %v1781, 2147483648
    %v1829 = vxor.u32 %v1783, 2147483648
    %v1830 = vmul.f32 %v1828, 1.442695
    %v1831 = vpow.pop %v1830
    %v1832 = vmul.f32 %v1829, 1.442695
    %v1833 = vpow.pop %v1832
    %v1834 = vadd.f32 %v1831, 1.0
    %v1835 = vadd.f32 %v1833, 1.0
    %v1836 = vrcp.pop %v1834
    %v1837 = vmul.f32 1.0, %v1836
    %v1838 = vrcp.pop %v1835
    %v1839 = vmul.f32 1.0, %v1838
    %v1840 = vtanh.pop %v1822
    %v1841 = vxor.u32 %v1824, 2147483648
    %v1842 = vmul.f32 %v1841, 1.442695
    %v1843 = vpow.pop %v1842
    %v1844 = vadd.f32 %v1843, 1.0
    %v1845 = vrcp.pop %v1844
    %v1846 = vmul.f32 1.0, %v1845
    %v1847 = vmul.f32 %v1839, %v1526
    %v1848 = vmul.f32 %v1837, %v1840
    %v1849 = vadd.f32 %v1847, %v1848
    %v1850 = vtanh.pop %v1849
    %v1851 = vmul.f32 %v1846, %v1850
    %v1852 = vpack.c.bf16 %v1851, %v1851
    %s1853 = scalar_lea.vmem [#allocation2], 33
    %v1854 = vld [vmem:[%s1853] ss:$8 sm:$0xf]
    %v1856 = vlaneseq
    %v1857 = vshrl.u32 %v1856, 7
    %v1858 = vsub.s32 0, %v1857
    %v1859 = vrot.slane %v1854, %v1858
    %v1860 = vlaneseq
    %v1861 = vshrl.u32 %v1860, 7
    %v1862 = vsub.s32 1, %v1861
    %v1863 = vrot.slane %v1854, %v1862
    %v1864 = vlaneseq
    %v1865 = vshrl.u32 %v1864, 7
    %v1866 = vsub.s32 2, %v1865
    %v1867 = vrot.slane %v1854, %v1866
    %v1868 = vlaneseq
    %v1869 = vshrl.u32 %v1868, 7
    %v1870 = vsub.s32 3, %v1869
    %v1871 = vrot.slane %v1854, %v1870
    %1876 = vmatprep.subr.bf16.mxu0 %v1662
    %1877 = vmatpush1.bf16.msra.mxu0 %v1661
    %1878 = vmatprep.subr.bf16.mxu0 %v1666
    %1879 = vmatpush1.bf16.msra.mxu0 %v1665
    %1880 = vmatprep.subr.bf16.mxu0 %v1670
    %1881 = vmatpush1.bf16.msra.mxu0 %v1669
    %1882 = vmatprep.subr.bf16.mxu0 %v1674
    %1883 = vmatpush1.bf16.msra.mxu0 %v1673
    %1884 = vmatprep.subr.bf16.mxu0 %v1678
    %1885 = vmatpush1.bf16.msra.mxu0 %v1677
    %1886 = vmatprep.subr.bf16.mxu0 %v1682
    %1887 = vmatpush1.bf16.msra.mxu0 %v1681
    %1888 = vmatprep.subr.bf16.mxu0 %v1686
    %1889 = vmatpush1.bf16.msra.mxu0 %v1685
    %1890 = vmatprep.subr.bf16.mxu0 %v1690
    %1891 = vmatpush1.bf16.msra.mxu0 %v1689
    %1892 = vmatprep.subr.bf16.mxu0 0
    %1893 = vmatpush1.bf16.msra.mxu0 0
    %1894 = vmatprep.subr.bf16.mxu0 0
    %1895 = vmatpush1.bf16.msra.mxu0 0
    %1896 = vmatprep.subr.bf16.mxu0 0
    %1897 = vmatpush1.bf16.msra.mxu0 0
    %1898 = vmatprep.subr.bf16.mxu0 0
    %1899 = vmatpush1.bf16.msra.mxu0 0
    %1900 = vmatprep.subr.bf16.mxu0 0
    %1901 = vmatpush1.bf16.msra.mxu0 0
    %1902 = vmatprep.subr.bf16.mxu0 0
    %1903 = vmatpush1.bf16.msra.mxu0 0
    %1904 = vmatprep.subr.bf16.mxu0 0
    %1905 = vmatpush1.bf16.msra.mxu0 0
    %1906 = vmatprep.subr.bf16.mxu0 0
    %1907 = vmatpush1.bf16.msra.mxu0 0
    %1908 = vmatprep.mubr.bf16.mxu0 0
    %1909 = vmatmul.mubr.bf16.gmra.mrb[0].mxu0 %v1852
    %v1910 = vpop.f32.mrb[0].mxu0
    %v1911 = vadd.f32 %v1859, %v1910
    %v1912 = vpop.f32.mrb[0].mxu0
    %v1913 = vadd.f32 %v1863, %v1912
    %v1914 = vpop.f32.mrb[0].mxu0
    %v1915 = vpop.f32.mrb[0].mxu0
    %1916 = vdwg.mxu0
    %1917 = vmatprep.subr.bf16.mxu0 %v1664
    %1918 = vmatpush1.bf16.msra.mxu0 %v1663
    %1919 = vmatprep.subr.bf16.mxu0 %v1668
    %1920 = vmatpush1.bf16.msra.mxu0 %v1667
    %1921 = vmatprep.subr.bf16.mxu0 %v1672
    %1922 = vmatpush1.bf16.msra.mxu0 %v1671
    %1923 = vmatprep.subr.bf16.mxu0 %v1676
    %1924 = vmatpush1.bf16.msra.mxu0 %v1675
    %1925 = vmatprep.subr.bf16.mxu0 %v1680
    %1926 = vmatpush1.bf16.msra.mxu0 %v1679
    %1927 = vmatprep.subr.bf16.mxu0 %v1684
    %1928 = vmatpush1.bf16.msra.mxu0 %v1683
    %1929 = vmatprep.subr.bf16.mxu0 %v1688
    %1930 = vmatpush1.bf16.msra.mxu0 %v1687
    %1931 = vmatprep.subr.bf16.mxu0 %v1692
    %1932 = vmatpush1.bf16.msra.mxu0 %v1691
    %1933 = vmatprep.subr.bf16.mxu0 0
    %1934 = vmatpush1.bf16.msra.mxu0 0
    %1935 = vmatprep.subr.bf16.mxu0 0
    %1936 = vmatpush1.bf16.msra.mxu0 0
    %1937 = vmatprep.subr.bf16.mxu0 0
    %1938 = vmatpush1.bf16.msra.mxu0 0
    %1939 = vmatprep.subr.bf16.mxu0 0
    %1940 = vmatpush1.bf16.msra.mxu0 0
    %1941 = vmatprep.subr.bf16.mxu0 0
    %1942 = vmatpush1.bf16.msra.mxu0 0
    %1943 = vmatprep.subr.bf16.mxu0 0
    %1944 = vmatpush1.bf16.msra.mxu0 0
    %1945 = vmatprep.subr.bf16.mxu0 0
    %1946 = vmatpush1.bf16.msra.mxu0 0
    %1947 = vmatprep.subr.bf16.mxu0 0
    %1948 = vmatpush1.bf16.msra.mxu0 0
    %1949 = vmatprep.mubr.bf16.mxu0 0
    %1950 = vmatmul.mubr.bf16.gmra.mrb[0].mxu0 %v1852
    %v1951 = vpop.f32.mrb[0].mxu0
    %v1952 = vadd.f32 %v1867, %v1951
    %v1953 = vpop.f32.mrb[0].mxu0
    %v1954 = vadd.f32 %v1871, %v1953
    %v1955 = vpop.f32.mrb[0].mxu0
    %v1956 = vpop.f32.mrb[0].mxu0
    %1957 = vdwg.mxu0
    %v1958 = vxor.u32 %v1911, 2147483648
    %v1959 = vxor.u32 %v1913, 2147483648
    %v1960 = vmul.f32 %v1958, 1.442695
    %v1961 = vpow.pop %v1960
    %v1962 = vmul.f32 %v1959, 1.442695
    %v1963 = vpow.pop %v1962
    %v1964 = vadd.f32 %v1961, 1.0
    %v1965 = vadd.f32 %v1963, 1.0
    %v1966 = vrcp.pop %v1964
    %v1967 = vmul.f32 1.0, %v1966
    %v1968 = vrcp.pop %v1965
    %v1969 = vmul.f32 1.0, %v1968
    %v1970 = vtanh.pop %v1952
    %v1971 = vxor.u32 %v1954, 2147483648
    %v1972 = vmul.f32 %v1971, 1.442695
    %v1973 = vpow.pop %v1972
    %v1974 = vadd.f32 %v1973, 1.0
    %v1975 = vrcp.pop %v1974
    %v1976 = vmul.f32 1.0, %v1975
    %v1977 = vmul.f32 %v1969, %v1849
    %v1978 = vmul.f32 %v1967, %v1970
    %v1979 = vadd.f32 %v1977, %v1978
    %v1980 = vtanh.pop %v1979
    %v1981 = vmul.f32 %v1976, %v1980
    %v1982 = vpack.c.bf16 %v1981, %v1981
    %s1983 = scalar_lea.vmem [#allocation2], 34
    %v1984 = vld [vmem:[%s1983] ss:$8 sm:$0xf]
    %v1986 = vlaneseq
    %v1987 = vshrl.u32 %v1986, 7
    %v1988 = vsub.s32 0, %v1987
    %v1989 = vrot.slane %v1984, %v1988
    %v1990 = vlaneseq
    %v1991 = vshrl.u32 %v1990, 7
    %v1992 = vsub.s32 1, %v1991
    %v1993 = vrot.slane %v1984, %v1992
    %v1994 = vlaneseq
    %v1995 = vshrl.u32 %v1994, 7
    %v1996 = vsub.s32 2, %v1995
    %v1997 = vrot.slane %v1984, %v1996
    %v1998 = vlaneseq
    %v1999 = vshrl.u32 %v1998, 7
    %v2000 = vsub.s32 3, %v1999
    %v2001 = vrot.slane %v1984, %v2000
    %2006 = vmatprep.subr.bf16.mxu0 %v1662
    %2007 = vmatpush1.bf16.msra.mxu0 %v1661
    %2008 = vmatprep.subr.bf16.mxu0 %v1666
    %2009 = vmatpush1.bf16.msra.mxu0 %v1665
    %2010 = vmatprep.subr.bf16.mxu0 %v1670
    %2011 = vmatpush1.bf16.msra.mxu0 %v1669
    %2012 = vmatprep.subr.bf16.mxu0 %v1674
    %2013 = vmatpush1.bf16.msra.mxu0 %v1673
    %2014 = vmatprep.subr.bf16.mxu0 %v1678
    %2015 = vmatpush1.bf16.msra.mxu0 %v1677
    %2016 = vmatprep.subr.bf16.mxu0 %v1682
    %2017 = vmatpush1.bf16.msra.mxu0 %v1681
    %2018 = vmatprep.subr.bf16.mxu0 %v1686
    %2019 = vmatpush1.bf16.msra.mxu0 %v1685
    %2020 = vmatprep.subr.bf16.mxu0 %v1690
    %2021 = vmatpush1.bf16.msra.mxu0 %v1689
    %2022 = vmatprep.subr.bf16.mxu0 0
    %2023 = vmatpush1.bf16.msra.mxu0 0
    %2024 = vmatprep.subr.bf16.mxu0 0
    %2025 = vmatpush1.bf16.msra.mxu0 0
    %2026 = vmatprep.subr.bf16.mxu0 0
    %2027 = vmatpush1.bf16.msra.mxu0 0
    %2028 = vmatprep.subr.bf16.mxu0 0
    %2029 = vmatpush1.bf16.msra.mxu0 0
    %2030 = vmatprep.subr.bf16.mxu0 0
    %2031 = vmatpush1.bf16.msra.mxu0 0
    %2032 = vmatprep.subr.bf16.mxu0 0
    %2033 = vmatpush1.bf16.msra.mxu0 0
    %2034 = vmatprep.subr.bf16.mxu0 0
    %2035 = vmatpush1.bf16.msra.mxu0 0
    %2036 = vmatprep.subr.bf16.mxu0 0
    %2037 = vmatpush1.bf16.msra.mxu0 0
    %2038 = vmatprep.mubr.bf16.mxu0 0
    %2039 = vmatmul.mubr.bf16.gmra.mrb[0].mxu0 %v1982
    %v2040 = vpop.f32.mrb[0].mxu0
    %v2041 = vadd.f32 %v1989, %v2040
    %v2042 = vpop.f32.mrb[0].mxu0
    %v2043 = vadd.f32 %v1993, %v2042
    %v2044 = vpop.f32.mrb[0].mxu0
    %v2045 = vpop.f32.mrb[0].mxu0
    %2046 = vdwg.mxu0
    %2047 = vmatprep.subr.bf16.mxu0 %v1664
    %2048 = vmatpush1.bf16.msra.mxu0 %v1663
    %2049 = vmatprep.subr.bf16.mxu0 %v1668
    %2050 = vmatpush1.bf16.msra.mxu0 %v1667
    %2051 = vmatprep.subr.bf16.mxu0 %v1672
    %2052 = vmatpush1.bf16.msra.mxu0 %v1671
    %2053 = vmatprep.subr.bf16.mxu0 %v1676
    %2054 = vmatpush1.bf16.msra.mxu0 %v1675
    %2055 = vmatprep.subr.bf16.mxu0 %v1680
    %2056 = vmatpush1.bf16.msra.mxu0 %v1679
    %2057 = vmatprep.subr.bf16.mxu0 %v1684
    %2058 = vmatpush1.bf16.msra.mxu0 %v1683
    %2059 = vmatprep.subr.bf16.mxu0 %v1688
    %2060 = vmatpush1.bf16.msra.mxu0 %v1687
    %2061 = vmatprep.subr.bf16.mxu0 %v1692
    %2062 = vmatpush1.bf16.msra.mxu0 %v1691
    %2063 = vmatprep.subr.bf16.mxu0 0
    %2064 = vmatpush1.bf16.msra.mxu0 0
    %2065 = vmatprep.subr.bf16.mxu0 0
    %2066 = vmatpush1.bf16.msra.mxu0 0
    %2067 = vmatprep.subr.bf16.mxu0 0
    %2068 = vmatpush1.bf16.msra.mxu0 0
    %2069 = vmatprep.subr.bf16.mxu0 0
    %2070 = vmatpush1.bf16.msra.mxu0 0
    %2071 = vmatprep.subr.bf16.mxu0 0
    %2072 = vmatpush1.bf16.msra.mxu0 0
    %2073 = vmatprep.subr.bf16.mxu0 0
    %2074 = vmatpush1.bf16.msra.mxu0 0
    %2075 = vmatprep.subr.bf16.mxu0 0
    %2076 = vmatpush1.bf16.msra.mxu0 0
    %2077 = vmatprep.subr.bf16.mxu0 0
    %2078 = vmatpush1.bf16.msra.mxu0 0
    %2079 = vmatprep.mubr.bf16.mxu0 0
    %2080 = vmatmul.mubr.bf16.gmra.mrb[0].mxu0 %v1982
    %v2081 = vpop.f32.mrb[0].mxu0
    %v2082 = vadd.f32 %v1997, %v2081
    %v2083 = vpop.f32.mrb[0].mxu0
    %v2084 = vadd.f32 %v2001, %v2083
    %v2085 = vpop.f32.mrb[0].mxu0
    %v2086 = vpop.f32.mrb[0].mxu0
    %2087 = vdwg.mxu0
    %v2088 = vxor.u32 %v2041, 2147483648
    %v2089 = vxor.u32 %v2043, 2147483648
    %v2090 = vmul.f32 %v2088, 1.442695
    %v2091 = vpow.pop %v2090
    %v2092 = vmul.f32 %v2089, 1.442695
    %v2093 = vpow.pop %v2092
    %v2094 = vadd.f32 %v2091, 1.0
    %v2095 = vadd.f32 %v2093, 1.0
    %v2096 = vrcp.pop %v2094
    %v2097 = vmul.f32 1.0, %v2096
    %v2098 = vrcp.pop %v2095
    %v2099 = vmul.f32 1.0, %v2098
    %v2100 = vtanh.pop %v2082
    %v2101 = vxor.u32 %v2084, 2147483648
    %v2102 = vmul.f32 %v2101, 1.442695
    %v2103 = vpow.pop %v2102
    %v2104 = vadd.f32 %v2103, 1.0
    %v2105 = vrcp.pop %v2104
    %v2106 = vmul.f32 1.0, %v2105
    %v2107 = vmul.f32 %v2099, %v1979
    %v2108 = vmul.f32 %v2097, %v2100
    %v2109 = vadd.f32 %v2107, %v2108
    %v2110 = vtanh.pop %v2109
    %v2111 = vmul.f32 %v2106, %v2110
    %v2112 = vpack.c.bf16 %v2111, %v2111
    %s2113 = scalar_lea.vmem [#allocation2], 35
    %v2114 = vld [vmem:[%s2113] ss:$8 sm:$0xf]
    %v2116 = vlaneseq
    %v2117 = vshrl.u32 %v2116, 7
    %v2118 = vsub.s32 0, %v2117
    %v2119 = vrot.slane %v2114, %v2118
    %v2120 = vlaneseq
    %v2121 = vshrl.u32 %v2120, 7
    %v2122 = vsub.s32 1, %v2121
    %v2123 = vrot.slane %v2114, %v2122
    %v2124 = vlaneseq
    %v2125 = vshrl.u32 %v2124, 7
    %v2126 = vsub.s32 2, %v2125
    %v2127 = vrot.slane %v2114, %v2126
    %v2128 = vlaneseq
    %v2129 = vshrl.u32 %v2128, 7
    %v2130 = vsub.s32 3, %v2129
    %v2131 = vrot.slane %v2114, %v2130
    %2136 = vmatprep.subr.bf16.mxu0 %v1662
    %2137 = vmatpush1.bf16.msra.mxu0 %v1661
    %2138 = vmatprep.subr.bf16.mxu0 %v1666
    %2139 = vmatpush1.bf16.msra.mxu0 %v1665
    %2140 = vmatprep.subr.bf16.mxu0 %v1670
    %2141 = vmatpush1.bf16.msra.mxu0 %v1669
    %2142 = vmatprep.subr.bf16.mxu0 %v1674
    %2143 = vmatpush1.bf16.msra.mxu0 %v1673
    %2144 = vmatprep.subr.bf16.mxu0 %v1678
    %2145 = vmatpush1.bf16.msra.mxu0 %v1677
    %2146 = vmatprep.subr.bf16.mxu0 %v1682
    %2147 = vmatpush1.bf16.msra.mxu0 %v1681
    %2148 = vmatprep.subr.bf16.mxu0 %v1686
    %2149 = vmatpush1.bf16.msra.mxu0 %v1685
    %2150 = vmatprep.subr.bf16.mxu0 %v1690
    %2151 = vmatpush1.bf16.msra.mxu0 %v1689
    %2152 = vmatprep.subr.bf16.mxu0 0
    %2153 = vmatpush1.bf16.msra.mxu0 0
    %2154 = vmatprep.subr.bf16.mxu0 0
    %2155 = vmatpush1.bf16.msra.mxu0 0
    %2156 = vmatprep.subr.bf16.mxu0 0
    %2157 = vmatpush1.bf16.msra.mxu0 0
    %2158 = vmatprep.subr.bf16.mxu0 0
    %2159 = vmatpush1.bf16.msra.mxu0 0
    %2160 = vmatprep.subr.bf16.mxu0 0
    %2161 = vmatpush1.bf16.msra.mxu0 0
    %2162 = vmatprep.subr.bf16.mxu0 0
    %2163 = vmatpush1.bf16.msra.mxu0 0
    %2164 = vmatprep.subr.bf16.mxu0 0
    %2165 = vmatpush1.bf16.msra.mxu0 0
    %2166 = vmatprep.subr.bf16.mxu0 0
    %2167 = vmatpush1.bf16.msra.mxu0 0
    %2168 = vmatprep.mubr.bf16.mxu0 0
    %2169 = vmatmul.mubr.bf16.gmra.mrb[0].mxu0 %v2112
    %v2170 = vpop.f32.mrb[0].mxu0
    %v2171 = vadd.f32 %v2119, %v2170
    %v2172 = vpop.f32.mrb[0].mxu0
    %v2173 = vadd.f32 %v2123, %v2172
    %v2174 = vpop.f32.mrb[0].mxu0
    %v2175 = vpop.f32.mrb[0].mxu0
    %2176 = vdwg.mxu0
    %2177 = vmatprep.subr.bf16.mxu0 %v1664
    %2178 = vmatpush1.bf16.msra.mxu0 %v1663
    %2179 = vmatprep.subr.bf16.mxu0 %v1668
    %2180 = vmatpush1.bf16.msra.mxu0 %v1667
    %2181 = vmatprep.subr.bf16.mxu0 %v1672
    %2182 = vmatpush1.bf16.msra.mxu0 %v1671
    %2183 = vmatprep.subr.bf16.mxu0 %v1676
    %2184 = vmatpush1.bf16.msra.mxu0 %v1675
    %2185 = vmatprep.subr.bf16.mxu0 %v1680
    %2186 = vmatpush1.bf16.msra.mxu0 %v1679
    %2187 = vmatprep.subr.bf16.mxu0 %v1684
    %2188 = vmatpush1.bf16.msra.mxu0 %v1683
    %2189 = vmatprep.subr.bf16.mxu0 %v1688
    %2190 = vmatpush1.bf16.msra.mxu0 %v1687
    %2191 = vmatprep.subr.bf16.mxu0 %v1692
    %2192 = vmatpush1.bf16.msra.mxu0 %v1691
    %2193 = vmatprep.subr.bf16.mxu0 0
    %2194 = vmatpush1.bf16.msra.mxu0 0
    %2195 = vmatprep.subr.bf16.mxu0 0
    %2196 = vmatpush1.bf16.msra.mxu0 0
    %2197 = vmatprep.subr.bf16.mxu0 0
    %2198 = vmatpush1.bf16.msra.mxu0 0
    %2199 = vmatprep.subr.bf16.mxu0 0
    %2200 = vmatpush1.bf16.msra.mxu0 0
    %2201 = vmatprep.subr.bf16.mxu0 0
    %2202 = vmatpush1.bf16.msra.mxu0 0
    %2203 = vmatprep.subr.bf16.mxu0 0
    %2204 = vmatpush1.bf16.msra.mxu0 0
    %2205 = vmatprep.subr.bf16.mxu0 0
    %2206 = vmatpush1.bf16.msra.mxu0 0
    %2207 = vmatprep.subr.bf16.mxu0 0
    %2208 = vmatpush1.bf16.msra.mxu0 0
    %2209 = vmatprep.mubr.bf16.mxu0 0
    %2210 = vmatmul.mubr.bf16.gmra.mrb[0].mxu0 %v2112
    %v2211 = vpop.f32.mrb[0].mxu0
    %v2212 = vadd.f32 %v2127, %v2211
    %v2213 = vpop.f32.mrb[0].mxu0
    %v2214 = vadd.f32 %v2131, %v2213
    %v2215 = vpop.f32.mrb[0].mxu0
    %v2216 = vpop.f32.mrb[0].mxu0
    %2217 = vdwg.mxu0
    %v2218 = vxor.u32 %v2171, 2147483648
    %v2219 = vxor.u32 %v2173, 2147483648
    %v2220 = vmul.f32 %v2218, 1.442695
    %v2221 = vpow.pop %v2220
    %v2222 = vmul.f32 %v2219, 1.442695
    %v2223 = vpow.pop %v2222
    %v2224 = vadd.f32 %v2221, 1.0
    %v2225 = vadd.f32 %v2223, 1.0
    %v2226 = vrcp.pop %v2224
    %v2227 = vmul.f32 1.0, %v2226
    %v2228 = vrcp.pop %v2225
    %v2229 = vmul.f32 1.0, %v2228
    %v2230 = vtanh.pop %v2212
    %v2231 = vxor.u32 %v2214, 2147483648
    %v2232 = vmul.f32 %v2231, 1.442695
    %v2233 = vpow.pop %v2232
    %v2234 = vadd.f32 %v2233, 1.0
    %v2235 = vrcp.pop %v2234
    %v2236 = vmul.f32 1.0, %v2235
    %v2237 = vmul.f32 %v2229, %v2109
    %v2238 = vmul.f32 %v2227, %v2230
    %v2239 = vadd.f32 %v2237, %v2238
    %v2240 = vtanh.pop %v2239
    %v2241 = vmul.f32 %v2236, %v2240
    %v2242 = vpack.c.bf16 %v2241, %v2241
    %s2243 = scalar_lea.vmem [#allocation2], 36
    %v2244 = vld [vmem:[%s2243] ss:$8 sm:$0xf]
    %v2246 = vlaneseq
    %v2247 = vshrl.u32 %v2246, 7
    %v2248 = vsub.s32 0, %v2247
    %v2249 = vrot.slane %v2244, %v2248
    %v2250 = vlaneseq
    %v2251 = vshrl.u32 %v2250, 7
    %v2252 = vsub.s32 1, %v2251
    %v2253 = vrot.slane %v2244, %v2252
    %v2254 = vlaneseq
    %v2255 = vshrl.u32 %v2254, 7
    %v2256 = vsub.s32 2, %v2255
    %v2257 = vrot.slane %v2244, %v2256
    %v2258 = vlaneseq
    %v2259 = vshrl.u32 %v2258, 7
    %v2260 = vsub.s32 3, %v2259
    %v2261 = vrot.slane %v2244, %v2260
    %2266 = vmatprep.subr.bf16.mxu0 %v1662
    %2267 = vmatpush1.bf16.msra.mxu0 %v1661
    %2268 = vmatprep.subr.bf16.mxu0 %v1666
    %2269 = vmatpush1.bf16.msra.mxu0 %v1665
    %2270 = vmatprep.subr.bf16.mxu0 %v1670
    %2271 = vmatpush1.bf16.msra.mxu0 %v1669
    %2272 = vmatprep.subr.bf16.mxu0 %v1674
    %2273 = vmatpush1.bf16.msra.mxu0 %v1673
    %2274 = vmatprep.subr.bf16.mxu0 %v1678
    %2275 = vmatpush1.bf16.msra.mxu0 %v1677
    %2276 = vmatprep.subr.bf16.mxu0 %v1682
    %2277 = vmatpush1.bf16.msra.mxu0 %v1681
    %2278 = vmatprep.subr.bf16.mxu0 %v1686
    %2279 = vmatpush1.bf16.msra.mxu0 %v1685
    %2280 = vmatprep.subr.bf16.mxu0 %v1690
    %2281 = vmatpush1.bf16.msra.mxu0 %v1689
    %2282 = vmatprep.subr.bf16.mxu0 0
    %2283 = vmatpush1.bf16.msra.mxu0 0
    %2284 = vmatprep.subr.bf16.mxu0 0
    %2285 = vmatpush1.bf16.msra.mxu0 0
    %2286 = vmatprep.subr.bf16.mxu0 0
    %2287 = vmatpush1.bf16.msra.mxu0 0
    %2288 = vmatprep.subr.bf16.mxu0 0
    %2289 = vmatpush1.bf16.msra.mxu0 0
    %2290 = vmatprep.subr.bf16.mxu0 0
    %2291 = vmatpush1.bf16.msra.mxu0 0
    %2292 = vmatprep.subr.bf16.mxu0 0
    %2293 = vmatpush1.bf16.msra.mxu0 0
    %2294 = vmatprep.subr.bf16.mxu0 0
    %2295 = vmatpush1.bf16.msra.mxu0 0
    %2296 = vmatprep.subr.bf16.mxu0 0
    %2297 = vmatpush1.bf16.msra.mxu0 0
    %2298 = vmatprep.mubr.bf16.mxu0 0
    %2299 = vmatmul.mubr.bf16.gmra.mrb[0].mxu0 %v2242
    %v2300 = vpop.f32.mrb[0].mxu0
    %v2301 = vadd.f32 %v2249, %v2300
    %v2302 = vpop.f32.mrb[0].mxu0
    %v2303 = vadd.f32 %v2253, %v2302
    %v2304 = vpop.f32.mrb[0].mxu0
    %v2305 = vpop.f32.mrb[0].mxu0
    %2306 = vdwg.mxu0
    %2307 = vmatprep.subr.bf16.mxu0 %v1664
    %2308 = vmatpush1.bf16.msra.mxu0 %v1663
    %2309 = vmatprep.subr.bf16.mxu0 %v1668
    %2310 = vmatpush1.bf16.msra.mxu0 %v1667
    %2311 = vmatprep.subr.bf16.mxu0 %v1672
    %2312 = vmatpush1.bf16.msra.mxu0 %v1671
    %2313 = vmatprep.subr.bf16.mxu0 %v1676
    %2314 = vmatpush1.bf16.msra.mxu0 %v1675
    %2315 = vmatprep.subr.bf16.mxu0 %v1680
    %2316 = vmatpush1.bf16.msra.mxu0 %v1679
    %2317 = vmatprep.subr.bf16.mxu0 %v1684
    %2318 = vmatpush1.bf16.msra.mxu0 %v1683
    %2319 = vmatprep.subr.bf16.mxu0 %v1688
    %2320 = vmatpush1.bf16.msra.mxu0 %v1687
    %2321 = vmatprep.subr.bf16.mxu0 %v1692
    %2322 = vmatpush1.bf16.msra.mxu0 %v1691
    %2323 = vmatprep.subr.bf16.mxu0 0
    %2324 = vmatpush1.bf16.msra.mxu0 0
    %2325 = vmatprep.subr.bf16.mxu0 0
    %2326 = vmatpush1.bf16.msra.mxu0 0
    %2327 = vmatprep.subr.bf16.mxu0 0
    %2328 = vmatpush1.bf16.msra.mxu0 0
    %2329 = vmatprep.subr.bf16.mxu0 0
    %2330 = vmatpush1.bf16.msra.mxu0 0
    %2331 = vmatprep.subr.bf16.mxu0 0
    %2332 = vmatpush1.bf16.msra.mxu0 0
    %2333 = vmatprep.subr.bf16.mxu0 0
    %2334 = vmatpush1.bf16.msra.mxu0 0
    %2335 = vmatprep.subr.bf16.mxu0 0
    %2336 = vmatpush1.bf16.msra.mxu0 0
    %2337 = vmatprep.subr.bf16.mxu0 0
    %2338 = vmatpush1.bf16.msra.mxu0 0
    %2339 = vmatprep.mubr.bf16.mxu0 0
    %2340 = vmatmul.mubr.bf16.gmra.mrb[0].mxu0 %v2242
    %v2341 = vpop.f32.mrb[0].mxu0
    %v2342 = vadd.f32 %v2257, %v2341
    %v2343 = vpop.f32.mrb[0].mxu0
    %v2344 = vadd.f32 %v2261, %v2343
    %v2345 = vpop.f32.mrb[0].mxu0
    %v2346 = vpop.f32.mrb[0].mxu0
    %2347 = vdwg.mxu0
    %v2348 = vxor.u32 %v2301, 2147483648
    %v2349 = vxor.u32 %v2303, 2147483648
    %v2350 = vmul.f32 %v2348, 1.442695
    %v2351 = vpow.pop %v2350
    %v2352 = vmul.f32 %v2349, 1.442695
    %v2353 = vpow.pop %v2352
    %v2354 = vadd.f32 %v2351, 1.0
    %v2355 = vadd.f32 %v2353, 1.0
    %v2356 = vrcp.pop %v2354
    %v2357 = vmul.f32 1.0, %v2356
    %v2358 = vrcp.pop %v2355
    %v2359 = vmul.f32 1.0, %v2358
    %v2360 = vtanh.pop %v2342
    %v2361 = vxor.u32 %v2344, 2147483648
    %v2362 = vmul.f32 %v2361, 1.442695
    %v2363 = vpow.pop %v2362
    %v2364 = vadd.f32 %v2363, 1.0
    %v2365 = vrcp.pop %v2364
    %v2366 = vmul.f32 1.0, %v2365
    %v2367 = vmul.f32 %v2359, %v2239
    %v2368 = vmul.f32 %v2357, %v2360
    %v2369 = vadd.f32 %v2367, %v2368
    %v2370 = vtanh.pop %v2369
    %v2371 = vmul.f32 %v2366, %v2370
    %v2372 = vpack.c.bf16 %v2371, %v2371
    %s2373 = scalar_lea.vmem [#allocation2], 37
    %v2374 = vld [vmem:[%s2373] ss:$8 sm:$0xf]
    %v2376 = vlaneseq
    %v2377 = vshrl.u32 %v2376, 7
    %v2378 = vsub.s32 0, %v2377
    %v2379 = vrot.slane %v2374, %v2378
    %v2380 = vlaneseq
    %v2381 = vshrl.u32 %v2380, 7
    %v2382 = vsub.s32 1, %v2381
    %v2383 = vrot.slane %v2374, %v2382
    %v2384 = vlaneseq
    %v2385 = vshrl.u32 %v2384, 7
    %v2386 = vsub.s32 2, %v2385
    %v2387 = vrot.slane %v2374, %v2386
    %v2388 = vlaneseq
    %v2389 = vshrl.u32 %v2388, 7
    %v2390 = vsub.s32 3, %v2389
    %v2391 = vrot.slane %v2374, %v2390
    %2396 = vmatprep.subr.bf16.mxu0 %v1662
    %2397 = vmatpush1.bf16.msra.mxu0 %v1661
    %2398 = vmatprep.subr.bf16.mxu0 %v1666
    %2399 = vmatpush1.bf16.msra.mxu0 %v1665
    %2400 = vmatprep.subr.bf16.mxu0 %v1670
    %2401 = vmatpush1.bf16.msra.mxu0 %v1669
    %2402 = vmatprep.subr.bf16.mxu0 %v1674
    %2403 = vmatpush1.bf16.msra.mxu0 %v1673
    %2404 = vmatprep.subr.bf16.mxu0 %v1678
    %2405 = vmatpush1.bf16.msra.mxu0 %v1677
    %2406 = vmatprep.subr.bf16.mxu0 %v1682
    %2407 = vmatpush1.bf16.msra.mxu0 %v1681
    %2408 = vmatprep.subr.bf16.mxu0 %v1686
    %2409 = vmatpush1.bf16.msra.mxu0 %v1685
    %2410 = vmatprep.subr.bf16.mxu0 %v1690
    %2411 = vmatpush1.bf16.msra.mxu0 %v1689
    %2412 = vmatprep.subr.bf16.mxu0 0
    %2413 = vmatpush1.bf16.msra.mxu0 0
    %2414 = vmatprep.subr.bf16.mxu0 0
    %2415 = vmatpush1.bf16.msra.mxu0 0
    %2416 = vmatprep.subr.bf16.mxu0 0
    %2417 = vmatpush1.bf16.msra.mxu0 0
    %2418 = vmatprep.subr.bf16.mxu0 0
    %2419 = vmatpush1.bf16.msra.mxu0 0
    %2420 = vmatprep.subr.bf16.mxu0 0
    %2421 = vmatpush1.bf16.msra.mxu0 0
    %2422 = vmatprep.subr.bf16.mxu0 0
    %2423 = vmatpush1.bf16.msra.mxu0 0
    %2424 = vmatprep.subr.bf16.mxu0 0
    %2425 = vmatpush1.bf16.msra.mxu0 0
    %2426 = vmatprep.subr.bf16.mxu0 0
    %2427 = vmatpush1.bf16.msra.mxu0 0
    %2428 = vmatprep.mubr.bf16.mxu0 0
    %2429 = vmatmul.mubr.bf16.gmra.mrb[0].mxu0 %v2372
    %v2430 = vpop.f32.mrb[0].mxu0
    %v2431 = vadd.f32 %v2379, %v2430
    %v2432 = vpop.f32.mrb[0].mxu0
    %v2433 = vadd.f32 %v2383, %v2432
    %v2434 = vpop.f32.mrb[0].mxu0
    %v2435 = vpop.f32.mrb[0].mxu0
    %2436 = vdwg.mxu0
    %2437 = vmatprep.subr.bf16.mxu0 %v1664
    %2438 = vmatpush1.bf16.msra.mxu0 %v1663
    %2439 = vmatprep.subr.bf16.mxu0 %v1668
    %2440 = vmatpush1.bf16.msra.mxu0 %v1667
    %2441 = vmatprep.subr.bf16.mxu0 %v1672
    %2442 = vmatpush1.bf16.msra.mxu0 %v1671
    %2443 = vmatprep.subr.bf16.mxu0 %v1676
    %2444 = vmatpush1.bf16.msra.mxu0 %v1675
    %2445 = vmatprep.subr.bf16.mxu0 %v1680
    %2446 = vmatpush1.bf16.msra.mxu0 %v1679
    %2447 = vmatprep.subr.bf16.mxu0 %v1684
    %2448 = vmatpush1.bf16.msra.mxu0 %v1683
    %2449 = vmatprep.subr.bf16.mxu0 %v1688
    %2450 = vmatpush1.bf16.msra.mxu0 %v1687
    %2451 = vmatprep.subr.bf16.mxu0 %v1692
    %2452 = vmatpush1.bf16.msra.mxu0 %v1691
    %2453 = vmatprep.subr.bf16.mxu0 0
    %2454 = vmatpush1.bf16.msra.mxu0 0
    %2455 = vmatprep.subr.bf16.mxu0 0
    %2456 = vmatpush1.bf16.msra.mxu0 0
    %2457 = vmatprep.subr.bf16.mxu0 0
    %2458 = vmatpush1.bf16.msra.mxu0 0
    %2459 = vmatprep.subr.bf16.mxu0 0
    %2460 = vmatpush1.bf16.msra.mxu0 0
    %2461 = vmatprep.subr.bf16.mxu0 0
    %2462 = vmatpush1.bf16.msra.mxu0 0
    %2463 = vmatprep.subr.bf16.mxu0 0
    %2464 = vmatpush1.bf16.msra.mxu0 0
    %2465 = vmatprep.subr.bf16.mxu0 0
    %2466 = vmatpush1.bf16.msra.mxu0 0
    %2467 = vmatprep.subr.bf16.mxu0 0
    %2468 = vmatpush1.bf16.msra.mxu0 0
    %2469 = vmatprep.mubr.bf16.mxu0 0
    %2470 = vmatmul.mubr.bf16.gmra.mrb[0].mxu0 %v2372
    %v2471 = vpop.f32.mrb[0].mxu0
    %v2472 = vadd.f32 %v2387, %v2471
    %v2473 = vpop.f32.mrb[0].mxu0
    %v2474 = vadd.f32 %v2391, %v2473
    %v2475 = vpop.f32.mrb[0].mxu0
    %v2476 = vpop.f32.mrb[0].mxu0
    %2477 = vdwg.mxu0
    %v2478 = vxor.u32 %v2431, 2147483648
    %v2479 = vxor.u32 %v2433, 2147483648
    %v2480 = vmul.f32 %v2478, 1.442695
    %v2481 = vpow.pop %v2480
    %v2482 = vmul.f32 %v2479, 1.442695
    %v2483 = vpow.pop %v2482
    %v2484 = vadd.f32 %v2481, 1.0
    %v2485 = vadd.f32 %v2483, 1.0
    %v2486 = vrcp.pop %v2484
    %v2487 = vmul.f32 1.0, %v2486
    %v2488 = vrcp.pop %v2485
    %v2489 = vmul.f32 1.0, %v2488
    %v2490 = vtanh.pop %v2472
    %v2491 = vxor.u32 %v2474, 2147483648
    %v2492 = vmul.f32 %v2491, 1.442695
    %v2493 = vpow.pop %v2492
    %v2494 = vadd.f32 %v2493, 1.0
    %v2495 = vrcp.pop %v2494
    %v2496 = vmul.f32 1.0, %v2495
    %v2497 = vmul.f32 %v2489, %v2369
    %v2498 = vmul.f32 %v2487, %v2490
    %v2499 = vadd.f32 %v2497, %v2498
    %v2500 = vtanh.pop %v2499
    %v2501 = vmul.f32 %v2496, %v2500
    %v2502 = vpack.c.bf16 %v2501, %v2501
    %s2503 = scalar_lea.vmem [#allocation2], 38
    %v2504 = vld [vmem:[%s2503] ss:$8 sm:$0xf]
    %v2506 = vlaneseq
    %v2507 = vshrl.u32 %v2506, 7
    %v2508 = vsub.s32 0, %v2507
    %v2509 = vrot.slane %v2504, %v2508
    %v2510 = vlaneseq
    %v2511 = vshrl.u32 %v2510, 7
    %v2512 = vsub.s32 1, %v2511
    %v2513 = vrot.slane %v2504, %v2512
    %v2514 = vlaneseq
    %v2515 = vshrl.u32 %v2514, 7
    %v2516 = vsub.s32 2, %v2515
    %v2517 = vrot.slane %v2504, %v2516
    %v2518 = vlaneseq
    %v2519 = vshrl.u32 %v2518, 7
    %v2520 = vsub.s32 3, %v2519
    %v2521 = vrot.slane %v2504, %v2520
    %2526 = vmatprep.subr.bf16.mxu0 %v1662
    %2527 = vmatpush1.bf16.msra.mxu0 %v1661
    %2528 = vmatprep.subr.bf16.mxu0 %v1666
    %2529 = vmatpush1.bf16.msra.mxu0 %v1665
    %2530 = vmatprep.subr.bf16.mxu0 %v1670
    %2531 = vmatpush1.bf16.msra.mxu0 %v1669
    %2532 = vmatprep.subr.bf16.mxu0 %v1674
    %2533 = vmatpush1.bf16.msra.mxu0 %v1673
    %2534 = vmatprep.subr.bf16.mxu0 %v1678
    %2535 = vmatpush1.bf16.msra.mxu0 %v1677
    %2536 = vmatprep.subr.bf16.mxu0 %v1682
    %2537 = vmatpush1.bf16.msra.mxu0 %v1681
    %2538 = vmatprep.subr.bf16.mxu0 %v1686
    %2539 = vmatpush1.bf16.msra.mxu0 %v1685
    %2540 = vmatprep.subr.bf16.mxu0 %v1690
    %2541 = vmatpush1.bf16.msra.mxu0 %v1689
    %2542 = vmatprep.subr.bf16.mxu0 0
    %2543 = vmatpush1.bf16.msra.mxu0 0
    %2544 = vmatprep.subr.bf16.mxu0 0
    %2545 = vmatpush1.bf16.msra.mxu0 0
    %2546 = vmatprep.subr.bf16.mxu0 0
    %2547 = vmatpush1.bf16.msra.mxu0 0
    %2548 = vmatprep.subr.bf16.mxu0 0
    %2549 = vmatpush1.bf16.msra.mxu0 0
    %2550 = vmatprep.subr.bf16.mxu0 0
    %2551 = vmatpush1.bf16.msra.mxu0 0
    %2552 = vmatprep.subr.bf16.mxu0 0
    %2553 = vmatpush1.bf16.msra.mxu0 0
    %2554 = vmatprep.subr.bf16.mxu0 0
    %2555 = vmatpush1.bf16.msra.mxu0 0
    %2556 = vmatprep.subr.bf16.mxu0 0
    %2557 = vmatpush1.bf16.msra.mxu0 0
    %2558 = vmatprep.mubr.bf16.mxu0 0
    %2559 = vmatmul.mubr.bf16.gmra.mrb[0].mxu0 %v2502
    %v2560 = vpop.f32.mrb[0].mxu0
    %v2561 = vadd.f32 %v2509, %v2560
    %v2562 = vpop.f32.mrb[0].mxu0
    %v2563 = vadd.f32 %v2513, %v2562
    %v2564 = vpop.f32.mrb[0].mxu0
    %v2565 = vpop.f32.mrb[0].mxu0
    %2566 = vdwg.mxu0
    %2567 = vmatprep.subr.bf16.mxu0 %v1664
    %2568 = vmatpush1.bf16.msra.mxu0 %v1663
    %2569 = vmatprep.subr.bf16.mxu0 %v1668
    %2570 = vmatpush1.bf16.msra.mxu0 %v1667
    %2571 = vmatprep.subr.bf16.mxu0 %v1672
    %2572 = vmatpush1.bf16.msra.mxu0 %v1671
    %2573 = vmatprep.subr.bf16.mxu0 %v1676
    %2574 = vmatpush1.bf16.msra.mxu0 %v1675
    %2575 = vmatprep.subr.bf16.mxu0 %v1680
    %2576 = vmatpush1.bf16.msra.mxu0 %v1679
    %2577 = vmatprep.subr.bf16.mxu0 %v1684
    %2578 = vmatpush1.bf16.msra.mxu0 %v1683
    %2579 = vmatprep.subr.bf16.mxu0 %v1688
    %2580 = vmatpush1.bf16.msra.mxu0 %v1687
    %2581 = vmatprep.subr.bf16.mxu0 %v1692
    %2582 = vmatpush1.bf16.msra.mxu0 %v1691
    %2583 = vmatprep.subr.bf16.mxu0 0
    %2584 = vmatpush1.bf16.msra.mxu0 0
    %2585 = vmatprep.subr.bf16.mxu0 0
    %2586 = vmatpush1.bf16.msra.mxu0 0
    %2587 = vmatprep.subr.bf16.mxu0 0
    %2588 = vmatpush1.bf16.msra.mxu0 0
    %2589 = vmatprep.subr.bf16.mxu0 0
    %2590 = vmatpush1.bf16.msra.mxu0 0
    %2591 = vmatprep.subr.bf16.mxu0 0
    %2592 = vmatpush1.bf16.msra.mxu0 0
    %2593 = vmatprep.subr.bf16.mxu0 0
    %2594 = vmatpush1.bf16.msra.mxu0 0
    %2595 = vmatprep.subr.bf16.mxu0 0
    %2596 = vmatpush1.bf16.msra.mxu0 0
    %2597 = vmatprep.subr.bf16.mxu0 0
    %2598 = vmatpush1.bf16.msra.mxu0 0
    %2599 = vmatprep.mubr.bf16.mxu0 0
    %2600 = vmatmul.mubr.bf16.gmra.mrb[0].mxu0 %v2502
    %v2601 = vpop.f32.mrb[0].mxu0
    %v2602 = vadd.f32 %v2517, %v2601
    %v2603 = vpop.f32.mrb[0].mxu0
    %v2604 = vadd.f32 %v2521, %v2603
    %v2605 = vpop.f32.mrb[0].mxu0
    %v2606 = vpop.f32.mrb[0].mxu0
    %2607 = vdwg.mxu0
    %v2608 = vxor.u32 %v2561, 2147483648
    %v2609 = vxor.u32 %v2563, 2147483648
    %v2610 = vmul.f32 %v2608, 1.442695
    %v2611 = vpow.pop %v2610
    %v2612 = vmul.f32 %v2609, 1.442695
    %v2613 = vpow.pop %v2612
    %v2614 = vadd.f32 %v2611, 1.0
    %v2615 = vadd.f32 %v2613, 1.0
    %v2616 = vrcp.pop %v2614
    %v2617 = vmul.f32 1.0, %v2616
    %v2618 = vrcp.pop %v2615
    %v2619 = vmul.f32 1.0, %v2618
    %v2620 = vtanh.pop %v2602
    %v2621 = vxor.u32 %v2604, 2147483648
    %v2622 = vmul.f32 %v2621, 1.442695
    %v2623 = vpow.pop %v2622
    %v2624 = vadd.f32 %v2623, 1.0
    %v2625 = vrcp.pop %v2624
    %v2626 = vmul.f32 1.0, %v2625
    %v2627 = vmul.f32 %v2619, %v2499
    %v2628 = vmul.f32 %v2617, %v2620
    %v2629 = vadd.f32 %v2627, %v2628
    %v2630 = vtanh.pop %v2629
    %v2631 = vmul.f32 %v2626, %v2630
    %v2632 = vpack.c.bf16 %v2631, %v2631
    %s2633 = scalar_lea.vmem [#allocation2], 39
    %v2634 = vld [vmem:[%s2633] ss:$8 sm:$0xf]
    %v2636 = vlaneseq
    %v2637 = vshrl.u32 %v2636, 7
    %v2638 = vsub.s32 0, %v2637
    %v2639 = vrot.slane %v2634, %v2638
    %v2640 = vlaneseq
    %v2641 = vshrl.u32 %v2640, 7
    %v2642 = vsub.s32 1, %v2641
    %v2643 = vrot.slane %v2634, %v2642
    %v2644 = vlaneseq
    %v2645 = vshrl.u32 %v2644, 7
    %v2646 = vsub.s32 2, %v2645
    %v2647 = vrot.slane %v2634, %v2646
    %v2648 = vlaneseq
    %v2649 = vshrl.u32 %v2648, 7
    %v2650 = vsub.s32 3, %v2649
    %v2651 = vrot.slane %v2634, %v2650
    %2656 = vmatprep.subr.bf16.mxu0 %v1662
    %2657 = vmatpush1.bf16.msra.mxu0 %v1661
    %2658 = vmatprep.subr.bf16.mxu0 %v1666
    %2659 = vmatpush1.bf16.msra.mxu0 %v1665
    %2660 = vmatprep.subr.bf16.mxu0 %v1670
    %2661 = vmatpush1.bf16.msra.mxu0 %v1669
    %2662 = vmatprep.subr.bf16.mxu0 %v1674
    %2663 = vmatpush1.bf16.msra.mxu0 %v1673
    %2664 = vmatprep.subr.bf16.mxu0 %v1678
    %2665 = vmatpush1.bf16.msra.mxu0 %v1677
    %2666 = vmatprep.subr.bf16.mxu0 %v1682
    %2667 = vmatpush1.bf16.msra.mxu0 %v1681
    %2668 = vmatprep.subr.bf16.mxu0 %v1686
    %2669 = vmatpush1.bf16.msra.mxu0 %v1685
    %2670 = vmatprep.subr.bf16.mxu0 %v1690
    %2671 = vmatpush1.bf16.msra.mxu0 %v1689
    %2672 = vmatprep.subr.bf16.mxu0 0
    %2673 = vmatpush1.bf16.msra.mxu0 0
    %2674 = vmatprep.subr.bf16.mxu0 0
    %2675 = vmatpush1.bf16.msra.mxu0 0
    %2676 = vmatprep.subr.bf16.mxu0 0
    %2677 = vmatpush1.bf16.msra.mxu0 0
    %2678 = vmatprep.subr.bf16.mxu0 0
    %2679 = vmatpush1.bf16.msra.mxu0 0
    %2680 = vmatprep.subr.bf16.mxu0 0
    %2681 = vmatpush1.bf16.msra.mxu0 0
    %2682 = vmatprep.subr.bf16.mxu0 0
    %2683 = vmatpush1.bf16.msra.mxu0 0
    %2684 = vmatprep.subr.bf16.mxu0 0
    %2685 = vmatpush1.bf16.msra.mxu0 0
    %2686 = vmatprep.subr.bf16.mxu0 0
    %2687 = vmatpush1.bf16.msra.mxu0 0
    %2688 = vmatprep.mubr.bf16.mxu0 0
    %2689 = vmatmul.mubr.bf16.gmra.mrb[0].mxu0 %v2632
    %v2690 = vpop.f32.mrb[0].mxu0
    %v2691 = vadd.f32 %v2639, %v2690
    %v2692 = vpop.f32.mrb[0].mxu0
    %v2693 = vadd.f32 %v2643, %v2692
    %v2694 = vpop.f32.mrb[0].mxu0
    %v2695 = vpop.f32.mrb[0].mxu0
    %2696 = vdwg.mxu0
    %2697 = vmatprep.subr.bf16.mxu0 %v1664
    %2698 = vmatpush1.bf16.msra.mxu0 %v1663
    %2699 = vmatprep.subr.bf16.mxu0 %v1668
    %2700 = vmatpush1.bf16.msra.mxu0 %v1667
    %2701 = vmatprep.subr.bf16.mxu0 %v1672
    %2702 = vmatpush1.bf16.msra.mxu0 %v1671
    %2703 = vmatprep.subr.bf16.mxu0 %v1676
    %2704 = vmatpush1.bf16.msra.mxu0 %v1675
    %2705 = vmatprep.subr.bf16.mxu0 %v1680
    %2706 = vmatpush1.bf16.msra.mxu0 %v1679
    %2707 = vmatprep.subr.bf16.mxu0 %v1684
    %2708 = vmatpush1.bf16.msra.mxu0 %v1683
    %2709 = vmatprep.subr.bf16.mxu0 %v1688
    %2710 = vmatpush1.bf16.msra.mxu0 %v1687
    %2711 = vmatprep.subr.bf16.mxu0 %v1692
    %2712 = vmatpush1.bf16.msra.mxu0 %v1691
    %2713 = vmatprep.subr.bf16.mxu0 0
    %2714 = vmatpush1.bf16.msra.mxu0 0
    %2715 = vmatprep.subr.bf16.mxu0 0
    %2716 = vmatpush1.bf16.msra.mxu0 0
    %2717 = vmatprep.subr.bf16.mxu0 0
    %2718 = vmatpush1.bf16.msra.mxu0 0
    %2719 = vmatprep.subr.bf16.mxu0 0
    %2720 = vmatpush1.bf16.msra.mxu0 0
    %2721 = vmatprep.subr.bf16.mxu0 0
    %2722 = vmatpush1.bf16.msra.mxu0 0
    %2723 = vmatprep.subr.bf16.mxu0 0
    %2724 = vmatpush1.bf16.msra.mxu0 0
    %2725 = vmatprep.subr.bf16.mxu0 0
    %2726 = vmatpush1.bf16.msra.mxu0 0
    %2727 = vmatprep.subr.bf16.mxu0 0
    %2728 = vmatpush1.bf16.msra.mxu0 0
    %2729 = vmatprep.mubr.bf16.mxu0 0
    %2730 = vmatmul.mubr.bf16.gmra.mrb[0].mxu0 %v2632
    %v2731 = vpop.f32.mrb[0].mxu0
    %v2732 = vadd.f32 %v2647, %v2731
    %v2733 = vpop.f32.mrb[0].mxu0
    %v2734 = vadd.f32 %v2651, %v2733
    %v2735 = vpop.f32.mrb[0].mxu0
    %v2736 = vpop.f32.mrb[0].mxu0
    %2737 = vdwg.mxu0
    %v2738 = vxor.u32 %v2691, 2147483648
    %v2739 = vxor.u32 %v2693, 2147483648
    %v2740 = vmul.f32 %v2738, 1.442695
    %v2741 = vpow.pop %v2740
    %v2742 = vmul.f32 %v2739, 1.442695
    %v2743 = vpow.pop %v2742
    %v2744 = vadd.f32 %v2741, 1.0
    %v2745 = vadd.f32 %v2743, 1.0
    %v2746 = vrcp.pop %v2744
    %v2747 = vmul.f32 1.0, %v2746
    %v2748 = vrcp.pop %v2745
    %v2749 = vmul.f32 1.0, %v2748
    %v2750 = vtanh.pop %v2732
    %v2751 = vxor.u32 %v2734, 2147483648
    %v2752 = vmul.f32 %v2751, 1.442695
    %v2753 = vpow.pop %v2752
    %v2754 = vadd.f32 %v2753, 1.0
    %v2755 = vrcp.pop %v2754
    %v2756 = vmul.f32 1.0, %v2755
    %v2757 = vmul.f32 %v2749, %v2629
    %v2758 = vmul.f32 %v2747, %v2750
    %v2759 = vadd.f32 %v2757, %v2758
    %v2760 = vtanh.pop %v2759
    %v2761 = vmul.f32 %v2756, %v2760
    %2762 = vst [vmem:[#allocation3 + $0x1] sm:$0x1] %v2761
    %v2763 = vld [vmem:[#allocation3] sm:$0x3]
    %v2764 = vmax.f32 %v2763, 0.0
    %vm2765 = vcmp.ne.f32.partialorder %v2763, %v2763
    %v2766 = vadd.f32 %v2763, 0.0
    %v2767 = vand.u32 2147483647, %v2763
    %v2768 = vsub.f32 0.0, %v2767
    %v2769 = vmul.f32 %v2768, 1.442695
    %v2770 = vpow.pop %v2769
    %v2771 = vadd.f32 %v2770, 1.0
    %v2772 = vlog2.pop %v2771
    %v2773 = vmul.f32 %v2772, 0.6931472
    %v2774 = vmul.f32 -0.5, %v2770
    %v2775 = vadd.f32 %v2774, 1.0
    %v2776 = vmul.f32 %v2775, %v2770
    %v2777 = vand.u32 2147483647, %v2770
    %vm2778 = vcmp.lt.f32.partialorder %v2777, 0.0004427343
    %v2779 = vsel %vm2778, %v2776, %v2773
    %v2780 = vadd.f32 %v2764, %v2779
    %v2781 = vsel %vm2765, %v2766, %v2780
    %v2782 = vtanh.pop %v2781
    %v2783 = vmul.f32 %v2763, %v2782
    %v2784 = vld [vmem:[#allocation10] sm:$0xff]
    %v2785 = vld [vmem:[#allocation10 + $0x8] sm:$0xff]
    %v2786 = vld [vmem:[#allocation10 + $0x10] sm:$0xff]
    %v2787 = vld [vmem:[#allocation10 + $0x18] sm:$0xff]
    %v2788 = vld [vmem:[#allocation10 + $0x20] sm:$0xff]
    %v2789 = vld [vmem:[#allocation10 + $0x28] sm:$0xff]
    %v2790 = vld [vmem:[#allocation10 + $0x30] sm:$0xff]
    %v2791 = vld [vmem:[#allocation10 + $0x38] sm:$0xff]
    %v2792 = vld [vmem:[#allocation10 + $0x40] sm:$0xff]
    %v2793 = vld [vmem:[#allocation10 + $0x48] sm:$0xff]
    %v2794 = vld [vmem:[#allocation10 + $0x50] sm:$0xff]
    %v2795 = vld [vmem:[#allocation10 + $0x58] sm:$0xff]
    %v2796 = vld [vmem:[#allocation10 + $0x60] sm:$0xff]
    %v2797 = vld [vmem:[#allocation10 + $0x68] sm:$0xff]
    %v2798 = vld [vmem:[#allocation10 + $0x70] sm:$0xff]
    %v2799 = vld [vmem:[#allocation10 + $0x78] sm:$0xff]
    %v2800 = vld [vmem:[%s5] sm:$0x1]
    %v2802 = vlaneseq
    %v2803 = vshrl.u32 %v2802, 7
    %v2804 = vsub.s32 0, %v2803
    %v2805 = vrot.slane %v2800, %v2804
    %2807 = vmatprep.subr.mxu0 0.0
    %2808 = vmatpush1.msra.mxu0 %v2784
    %2809 = vmatprep.subr.mxu0 0.0
    %2810 = vmatpush1.msra.mxu0 %v2785
    %2811 = vmatprep.subr.mxu0 0.0
    %2812 = vmatpush1.msra.mxu0 %v2786
    %2813 = vmatprep.subr.mxu0 0.0
    %2814 = vmatpush1.msra.mxu0 %v2787
    %2815 = vmatprep.subr.mxu0 0.0
    %2816 = vmatpush1.msra.mxu0 %v2788
    %2817 = vmatprep.subr.mxu0 0.0
    %2818 = vmatpush1.msra.mxu0 %v2789
    %2819 = vmatprep.subr.mxu0 0.0
    %2820 = vmatpush1.msra.mxu0 %v2790
    %2821 = vmatprep.subr.mxu0 0.0
    %2822 = vmatpush1.msra.mxu0 %v2791
    %2823 = vmatprep.subr.mxu0 0.0
    %2824 = vmatpush1.msra.mxu0 %v2792
    %2825 = vmatprep.subr.mxu0 0.0
    %2826 = vmatpush1.msra.mxu0 %v2793
    %2827 = vmatprep.subr.mxu0 0.0
    %2828 = vmatpush1.msra.mxu0 %v2794
    %2829 = vmatprep.subr.mxu0 0.0
    %2830 = vmatpush1.msra.mxu0 %v2795
    %2831 = vmatprep.subr.mxu0 0.0
    %2832 = vmatpush1.msra.mxu0 %v2796
    %2833 = vmatprep.subr.mxu0 0.0
    %2834 = vmatpush1.msra.mxu0 %v2797
    %2835 = vmatprep.subr.mxu0 0.0
    %2836 = vmatpush1.msra.mxu0 %v2798
    %2837 = vmatprep.subr.mxu0 0.0
    %2838 = vmatpush1.msra.mxu0 %v2799
    %2839 = vmatprep.subr.mxu0 0.0
    %2840 = vmatpush1.msra.mxu0 0.0
    %2841 = vmatprep.subr.mxu0 0.0
    %2842 = vmatpush1.msra.mxu0 0.0
    %2843 = vmatprep.subr.mxu0 0.0
    %2844 = vmatpush1.msra.mxu0 0.0
    %2845 = vmatprep.subr.mxu0 0.0
    %2846 = vmatpush1.msra.mxu0 0.0
    %2847 = vmatprep.subr.mxu0 0.0
    %2848 = vmatpush1.msra.mxu0 0.0
    %2849 = vmatprep.subr.mxu0 0.0
    %2850 = vmatpush1.msra.mxu0 0.0
    %2851 = vmatprep.subr.mxu0 0.0
    %2852 = vmatpush1.msra.mxu0 0.0
    %2853 = vmatprep.subr.mxu0 0.0
    %2854 = vmatpush1.msra.mxu0 0.0
    %2855 = vmatprep.subr.mxu0 0.0
    %2856 = vmatpush1.msra.mxu0 0.0
    %2857 = vmatprep.subr.mxu0 0.0
    %2858 = vmatpush1.msra.mxu0 0.0
    %2859 = vmatprep.subr.mxu0 0.0
    %2860 = vmatpush1.msra.mxu0 0.0
    %2861 = vmatprep.subr.mxu0 0.0
    %2862 = vmatpush1.msra.mxu0 0.0
    %2863 = vmatprep.subr.mxu0 0.0
    %2864 = vmatpush1.msra.mxu0 0.0
    %2865 = vmatprep.subr.mxu0 0.0
    %2866 = vmatpush1.msra.mxu0 0.0
    %2867 = vmatprep.subr.mxu0 0.0
    %2868 = vmatpush1.msra.mxu0 0.0
    %2869 = vmatprep.subr.mxu0 0.0
    %2870 = vmatpush1.msra.mxu0 0.0
    %2871 = vmatprep.mubr.f32.mxu0 0.0
    %2872 = vmatmul.mubr.f32.gmra.mrb[0].mxu0 %v2783
    %v2873 = vpop.f32.mrb[0].mxu0
    %v2874 = vadd.f32 %v2805, %v2873
    %v2875 = vpop.f32.mrb[0].mxu0
    %2876 = vdwg.mxu0
    %v2877 = vlaneseq
    %v2878 = vand.u32 %v2877, 127
    %vm2879 = vcmp.lt.s32.totalorder %v2878, 2
    %v2880 = vsel %vm2879, %v2874, -inf
    %vm2881 = vcmask 1041408
    %v2882 = vsel %vm2881, %v2880, -inf
    %2883 = vmax.xlane.f32.xlu0 %v2882
    %v2884 = vpop.xlane.xlu0 %2883
    %v2885 = vsub.f32 %v2880, %v2884
    %v2886 = vmul.f32 %v2885, 1.442695
    %v2887 = vpow.pop %v2886
    %v2888 = vsel %vm2881, %v2887, 0.0
    %2889 = vadd.xlane.f32.xlu0 %v2888
    %v2890 = vpop.xlane.xlu0 %2889
    %v2891 = vlog2.pop %v2890
    %v2892 = vmul.f32 %v2891, 0.6931472
    %v2893 = vadd.f32 %v2884, %v2892
    %v2894 = vsub.f32 %v2874, %v2893
    %2895 = vst [vmem:[#allocation12] sm:$0x3] %v2894
    // Predicated region
    $region42: #{tpu_custom_call.1} parent=1 // pred_check
      _
    $region43: #{tpu_custom_call.1} parent=1 // pred_check_branch
      %2897 = sbr.rel (0) target = $region45
    $region44: #{tpu_custom_call.1} parent=1 // pred_region
      %s2899 = ssub.s32 32, 32
      %2900 = vsyncadd [#allocation6], %s2899
      %s2902 = sshll.u32 [#allocation12], 4
      %s2903 = int_to_ptr.vmem [resolvable:$true] %s2902
      %2905 = dma.vmem_to_hbm [thread:$0]  %s2903, 32, %s6, [#allocation6]
    $region45: #{tpu_custom_call.1} parent=1 // pred_fallthru
      _
    // Predicated region
    $region46: #{tpu_custom_call.1} parent=1 // pred_check
      _
    $region47: #{tpu_custom_call.1} parent=1 // pred_check_branch
      %2907 = sbr.rel (0) target = $region49
    $region48: #{tpu_custom_call.1} parent=1 // pred_region
      %2908 = dma.done [#allocation6], 32
    $region49: #{tpu_custom_call.1} parent=1 // pred_fallthru
      _
    %2909 = vsyncpa [#allocation5], 1
    %2910 = vsyncpa [#allocation8], 1
    %2911 = vsyncpa [#allocation11], 1
    %2912 = vsyncpa [#allocation6], 1

</llo_original>
